<compile_context>
chip_gen: v7x
topology: tpu7x:2x2x1
jax: 0.10.0
libtpu: 0.0.40
codegen_flags: <defaults>
</compile_context>

<pallas_src>
import jax
import jax.numpy as jnp
from jax import lax
from jax.experimental import pallas as pl
from jax.experimental.pallas import tpu as pltpu

HIDDEN = 16                      # GRU hidden size (module default)
CONTEXT_DIM = 16                 # == HIDDEN (required by the module's forward)
HEADS = 4
HC = HEADS * CONTEXT_DIM         # 64
F_PAD = 8                        # GRU input lanes: [vel, angle, 1.0 (bias lane), 0 x 5]
GAT_ROWS = 160                   # rows of the packed GAT constant slab

# Row offsets inside the packed GAT slab (all 8-aligned).
_GB_ROW = 0                      # gat bias            (1, C)       cols [0:C)
_RB_ROW = 8                      # head->lane bcast    (HEADS, HC)
_GW_ROW = 16                     # gat linear weight   (C, HC)
_AS_ROW = 32                     # [att_src | att_dst] (HC, 2*HEADS) cols [0:2*HEADS)
_SF_ROW = 96                     # head-mean fold      (HC, C)      cols [0:C)


# ------------------------------ glue (plain JAX) ------------------------------
def _velocity_angle_features(x):
    # TODO(synk): velocity/angle prep (incl. jnp.arccos) stays in XLA glue because acos
    # has no reliable Mosaic/Pallas-TPU lowering; everything downstream runs in one kernel.
    post = jnp.concatenate([x[:, :, 1:, :], jnp.zeros_like(x[:, :, :1, :])], axis=2)
    vel = jnp.sqrt(jnp.sum((post - x) ** 2, axis=-1, keepdims=True))       # (B,N,L,1)
    vel = vel[:, :, :-1, :]                                                # (B,N,T,1)
    pre = jnp.concatenate([vel[:, :, :1, :], vel[:, :, :-1, :]], axis=2)
    eps = 1e-6
    cos = jnp.sum(pre * vel, axis=-1) / (
        (jnp.sqrt(jnp.sum(pre ** 2, axis=-1)) + eps)
        * (jnp.sqrt(jnp.sum(vel ** 2, axis=-1)) + eps))
    ang = jnp.arccos(jnp.clip(cos, -1.0, 1.0))[..., None]
    return jnp.concatenate([vel, ang], axis=-1)                            # (B,N,T,2)


def _att_block_mat(att):
    # (HEADS, C) -> block-diagonal (HEADS*C, HEADS): all heads reduced in one matmul.
    heads, c = att.shape
    eye = jnp.eye(heads, dtype=att.dtype)
    return (att[:, :, None] * eye[:, None, :]).reshape(heads * c, heads)


def _build_gru_slab(params):
    # Per-gate layout (gate order r, z, n), one (32, H) page per gate:
    #   rows [0:2)          W_ih gate rows
    #   row   2             folded bias: b_ih_g (+ b_hh_g for r/z gates)
    #   rows [F_PAD:F_PAD+H) W_hh gate block
    #   row   F_PAD+H       b_hh_n (only meaningful for the n gate)
    H = HIDDEN
    w_ih, w_hh = params['w_ih'], params['w_hh']             # (2, 3H), (H, 3H)
    b_ih, b_hh = params['b_ih'][0], params['b_hh'][0]       # (3H,), (3H,)
    nin = w_ih.shape[0]
    slab = jnp.zeros((3, 32, H), jnp.float32)
    for g in range(3):
        sl = slice(g * H, (g + 1) * H)
        bias = b_ih[sl] + (b_hh[sl] if g < 2 else 0.0)      # b_hh_n must stay under r gate
        slab = slab.at[g, 0:nin, :].set(w_ih[:, sl])
        slab = slab.at[g, nin, :].set(bias)
        slab = slab.at[g, F_PAD:F_PAD + H, :].set(w_hh[:, sl])
        if g == 2:
            slab = slab.at[g, F_PAD + H, :].set(b_hh[sl])
    return slab


def _build_gat_slab(params):
    C = CONTEXT_DIM
    asrc_dst = jnp.concatenate(
        [_att_block_mat(params['att_src']), _att_block_mat(params['att_dst'])],
        axis=1)                                                            # (HC, 2*HEADS)
    # attn @ r_bcast replicates each head's weight across that head's C lanes.
    r_bcast = (jnp.arange(HC)[None, :] // C ==
               jnp.arange(HEADS)[:, None]).astype(jnp.float32)             # (HEADS, HC)
    # (.) @ s_fold sums the HEADS blocks of C lanes and divides by HEADS (head mean).
    s_fold = ((jnp.arange(HC)[:, None] % C) ==
              jnp.arange(C)[None, :]).astype(jnp.float32) / HEADS          # (HC, C)
    slab = jnp.zeros((GAT_ROWS, HC), jnp.float32)
    slab = slab.at[_GB_ROW, :C].set(params['gat_b'][0])
    slab = slab.at[_RB_ROW:_RB_ROW + HEADS, :].set(r_bcast)
    slab = slab.at[_GW_ROW:_GW_ROW + C, :].set(params['gat_w'])
    slab = slab.at[_AS_ROW:_AS_ROW + HC, :2 * HEADS].set(asrc_dst)
    slab = slab.at[_SF_ROW:_SF_ROW + HC, :C].set(s_fold)
    return slab


# ----------------------- fused GRU + DenseGATConv kernel -----------------------
def _make_kernel(N, T):
    H, C = HIDDEN, CONTEXT_DIM

    def kernel(x_ref, wslab_ref, gslab_ref, o_ref, gi_ref):
        x = x_ref[0]                                         # (T*N, F_PAD) for this batch

        # ------------------ GRU: hoisted per-gate projection + unrolled loop -----------
        # One matmul per gate for all T timesteps; biases ride on the constant-1 lane.
        for g in range(3):
            gi_ref[g] = jnp.dot(x, wslab_ref[g, 0:F_PAD, :],
                                preferred_element_type=jnp.float32)
        whh_r = wslab_ref[0, F_PAD:F_PAD + H, :]
        whh_z = wslab_ref[1, F_PAD:F_PAD + H, :]
        whh_n = wslab_ref[2, F_PAD:F_PAD + H, :]
        bhh_n = wslab_ref[2, F_PAD + H:F_PAD + H + 1, :]

        def step(t, h):
            off = pl.multiple_of(t * N, N)
            gi_r = gi_ref[0, pl.ds(off, N), :]
            gi_z = gi_ref[1, pl.ds(off, N), :]
            gi_n = gi_ref[2, pl.ds(off, N), :]
            r = jax.nn.sigmoid(gi_r + jnp.dot(h, whh_r,
                                              preferred_element_type=jnp.float32))
            z = jax.nn.sigmoid(gi_z + jnp.dot(h, whh_z,
                                              preferred_element_type=jnp.float32))
            n = jnp.tanh(gi_n + r * (jnp.dot(h, whh_n,
                                             preferred_element_type=jnp.float32) + bhh_n))
            return (1.0 - z) * n + z * h

        h = lax.fori_loop(0, T, step, jnp.zeros((N, H), jnp.float32),
                          unroll=True)                       # (N, H) final hidden

        # ------------- DenseGATConv: attention row i = 0 only (the only row used) -------
        # adj is all-ones (+ self loops) in the module -> no edge masking needed.
        xh = jnp.dot(h, gslab_ref[_GW_ROW:_GW_ROW + C, :],
                     preferred_element_type=jnp.float32)                   # (N, HC)
        ad = jnp.dot(xh, gslab_ref[_AS_ROW:_AS_ROW + HC, :],
                     preferred_element_type=jnp.float32)                   # (N, HC); cols [0:8) live
        a_src = ad[:, 0:HEADS]                                             # (N, HEADS)
        a_dst0 = ad[0:1, HEADS:2 * HEADS]                                  # (1, HEADS): node-0 dst term
        e = a_src + a_dst0                                                 # e[j, h] for i = 0
        e = jnp.where(e >= 0.0, e, 0.2 * e)                                # leaky_relu(0.2)
        m = jnp.max(e, axis=0, keepdims=True)                              # per-(batch, head) max
        p = jnp.exp(e - m)
        attn = p / jnp.sum(p, axis=0, keepdims=True)                       # softmax over nodes j
        a_full = jnp.dot(attn, gslab_ref[_RB_ROW:_RB_ROW + HEADS, :],
                         preferred_element_type=jnp.float32)               # (N, HC) attn per lane
        colsum = jnp.sum(a_full * xh, axis=0, keepdims=True)               # (1, HC) node aggregation
        out = jnp.dot(colsum, gslab_ref[_SF_ROW:_SF_ROW + HC, :],
                      preferred_element_type=jnp.float32)                  # (1, HC); cols [0:C) = head mean
        out = out + gslab_ref[_GB_ROW:_GB_ROW + 1, :]                      # + bias (padded row)
        o_ref[0] = out[:, 0:C]

    return kernel


def context_encoder_forward(x, params):
    B, N, L, _ = x.shape
    T = L - 1
    H, C = HIDDEN, CONTEXT_DIM
    # Assert the module-level assumptions baked into the kernel (review concern #2).
    assert C == H, "module forward requires context_dim == GRU hidden size (16)"
    assert T >= 1, "sequence length must be >= 2"
    assert params['w_ih'].shape == (2, 3 * H)
    assert params['w_hh'].shape == (H, 3 * H)
    assert params['gat_w'].shape == (C, HEADS * C)

    # Feature prep (tiny XLA fusion), emitted directly in the kernel's final layout:
    # time-major per batch, with a constant-1 bias lane and zero padding to F_PAD lanes.
    feat = _velocity_angle_features(x)                        # (B, N, T, 2)
    x_tm = jnp.transpose(feat, (0, 2, 1, 3))                  # (B, T, N, 2)
    aug = jnp.concatenate(
        [x_tm,
         jnp.ones(x_tm.shape[:-1] + (1,), jnp.float32),
         jnp.zeros(x_tm.shape[:-1] + (F_PAD - 3,), jnp.float32)], axis=-1)
    x_seq = aug.reshape(B, T * N, F_PAD)                      # row = t*N + n within a batch

    gru_slab = _build_gru_slab(params)                        # (3, 32, H)
    gat_slab = _build_gat_slab(params)                        # (GAT_ROWS, HC)

    out = pl.pallas_call(
        _make_kernel(N, T),
        out_shape=jax.ShapeDtypeStruct((B, 1, C), jnp.float32),
        grid=(B,),
        in_specs=[
            pl.BlockSpec((1, T * N, F_PAD), lambda b: (b, 0, 0)),
            pl.BlockSpec((3, 32, H), lambda b: (0, 0, 0)),
            pl.BlockSpec((GAT_ROWS, HC), lambda b: (0, 0)),
        ],
        out_specs=pl.BlockSpec((1, 1, C), lambda b: (b, 0, 0)),
        scratch_shapes=[pltpu.VMEM((3, T * N, H), jnp.float32)],
        # Batches are independent -> "parallel": v7x's two TensorCores split the grid.
        # TODO(synk): at realistic B, pack several batches per block (tile sized to the
        #             per-generation VMEM budget, raise vmem_limit_bytes on v6e) and make
        #             the (B, C) output lane-dense; pointless at B=2.
        compiler_params=pltpu.CompilerParams(dimension_semantics=("parallel",)),
    )(x_seq, gru_slab, gat_slab)
    return out[:, 0, :]


# ------------------------------- reference -----------------------------------
def reference_forward(x, params):
    B, N, L, F = x.shape
    feat = _velocity_angle_features(x).reshape(B * N, L - 1, 2)
    H = HIDDEN
    w_ih, w_hh = params['w_ih'], params['w_hh']
    b_ih, b_hh = params['b_ih'][0], params['b_hh'][0]

    def step(h, x_t):
        gi = x_t @ w_ih + b_ih
        gh = h @ w_hh + b_hh
        r = jax.nn.sigmoid(gi[:, :H] + gh[:, :H])
        z = jax.nn.sigmoid(gi[:, H:2 * H] + gh[:, H:2 * H])
        n = jnp.tanh(gi[:, 2 * H:] + r * gh[:, 2 * H:])
        return (1.0 - z) * n + z * h, None

    h0 = jnp.zeros((B * N, H), jnp.float32)
    h, _ = lax.scan(step, h0, feat.transpose(1, 0, 2))
    h = h.reshape(B, N, H)

    C = CONTEXT_DIM
    xh = jnp.einsum('bnd,dk->bnk', h, params['gat_w']).reshape(B, N, HEADS, C)
    a_s = jnp.einsum('bnhc,hc->bnh', xh, params['att_src'])
    a_d = jnp.einsum('bnhc,hc->bnh', xh, params['att_dst'])
    e = a_s[:, None, :, :] + a_d[:, :, None, :]                            # [B,i,j,h]
    e = jnp.where(e >= 0, e, 0.2 * e)
    attn = jax.nn.softmax(e, axis=2)
    out = jnp.einsum('bijh,bjhc->bihc', attn, xh).mean(axis=2) + params['gat_b'][0]
    return out[:, 0, :]


# ------------------------------- parameters -----------------------------------
def init_params(key):
    ks = jax.random.split(key, 8)
    H, F, C = HIDDEN, 2, CONTEXT_DIM
    s = 1.0 / jnp.sqrt(jnp.float32(H))
    return dict(
        # GRU weights stored transposed for x @ W; gate order [r | z | n] as in PyTorch.
        w_ih=jax.random.uniform(ks[0], (F, 3 * H), jnp.float32, -s, s),
        w_hh=jax.random.uniform(ks[1], (H, 3 * H), jnp.float32, -s, s),
        b_ih=jax.random.uniform(ks[2], (1, 3 * H), jnp.float32, -s, s),
        b_hh=jax.random.uniform(ks[3], (1, 3 * H), jnp.float32, -s, s),
        # DenseGATConv(heads=4, concat=False): lin (C -> HEADS*C, no bias),
        # att_src/att_dst (HEADS, C), bias (C,).
        gat_w=jax.random.normal(ks[4], (C, HEADS * C), jnp.float32) / jnp.sqrt(jnp.float32(C)),
        att_src=jax.random.normal(ks[5], (HEADS, C), jnp.float32) * 0.1,
        att_dst=jax.random.normal(ks[6], (HEADS, C), jnp.float32) * 0.1,
        gat_b=jnp.zeros((1, C), jnp.float32),
    )


if __name__ == "__main__":
    key = jax.random.PRNGKey(0)
    k_x, k_p = jax.random.split(key)

    B, N, L, F = 2, 4, 8, 2           # batch, nodes, sequence length, feat_dim
    x = jax.random.normal(k_x, (B, N, L, F), jnp.float32)
    params = init_params(k_p)

    fwd = jax.jit(context_encoder_forward)
    out = jax.block_until_ready(fwd(x, params))
    assert out.shape == (B, CONTEXT_DIM)

    ref = jax.block_until_ready(reference_forward(x, params))
    if not jnp.allclose(out, ref, rtol=1e-2, atol=1e-3):
        raise AssertionError(f"kernel/reference mismatch: max abs err = "
                             f"{float(jnp.max(jnp.abs(out - ref)))}")
    print("KERNEL_OK")
</pallas_src>

<mosaic_0001>
module attributes {stable_mosaic.version = 11 : i64} {
  func.func @kernel(%arg0: i32, %arg1: memref<1x28x8xf32, #tpu.memory_space<vmem>>, %arg2: memref<3x32x16xf32, #tpu.memory_space<vmem>>, %arg3: memref<160x64xf32, #tpu.memory_space<vmem>>, %arg4: memref<1x1x16xf32, #tpu.memory_space<vmem>>, %arg5: memref<3x28x16xf32, #tpu.memory_space<vmem>>) attributes {dimension_semantics = [#tpu.dimension_semantics<parallel>], iteration_bounds = array<i64: 2>, scalar_prefetch = 0 : i64, scratch_operands = 1 : i64, tpu.core_type = #tpu.core_type<tc>, window_params = [{transform_indices = @transform_0, window_bounds = array<i64: 1, 28, 8>}, {pipeline_mode = #tpu.pipeline_mode<synchronous>, transform_indices = @transform_1, window_bounds = array<i64: 3, 32, 16>}, {pipeline_mode = #tpu.pipeline_mode<synchronous>, transform_indices = @transform_2, window_bounds = array<i64: 160, 64>}, {transform_indices = @transform_3, window_bounds = array<i64: 1, 1, 16>}]} {
    %c0 = arith.constant 0 : index
    %c0_0 = arith.constant 0 : index
    %c0_1 = arith.constant 0 : index
    %0 = vector.load %arg1[%c0, %c0_0, %c0_1] : memref<1x28x8xf32, #tpu.memory_space<vmem>>, vector<1x28x8xf32>
    %1 = vector.shape_cast %0 : vector<1x28x8xf32> to vector<28x8xf32>
    %c0_2 = arith.constant 0 : index
    %c0_3 = arith.constant 0 : index
    %c0_4 = arith.constant 0 : index
    %2 = vector.load %arg2[%c0_2, %c0_3, %c0_4] : memref<3x32x16xf32, #tpu.memory_space<vmem>>, vector<1x8x16xf32>
    %3 = vector.shape_cast %2 : vector<1x8x16xf32> to vector<8x16xf32>
    %cst = arith.constant dense<0.000000e+00> : vector<28x16xf32>
    %4 = tpu.matmul %1, %3, %cst {dimension_numbers = #tpu.dot_dimension_numbers<[1], [0], [0], [1], [0, 0, 1, 1], [], []>} : vector<28x8xf32>, vector<8x16xf32>, vector<28x16xf32> -> vector<28x16xf32>
    %c0_5 = arith.constant 0 : index
    %c0_6 = arith.constant 0 : index
    %c0_7 = arith.constant 0 : index
    %5 = vector.load %arg5[%c0_5, %c0_6, %c0_7] : memref<3x28x16xf32, #tpu.memory_space<vmem>>, vector<1x28x16xf32>
    %6 = vector.shape_cast %5 : vector<1x28x16xf32> to vector<28x16xf32>
    %7 = vector.shape_cast %4 : vector<28x16xf32> to vector<1x28x16xf32>
    tpu.vector_store %arg5[%c0_5, %c0_6, %c0_7], %7 {strides = array<i32>} : memref<3x28x16xf32, #tpu.memory_space<vmem>>, vector<1x28x16xf32>,
    %c1 = arith.constant 1 : index
    %c0_8 = arith.constant 0 : index
    %c0_9 = arith.constant 0 : index
    %8 = vector.load %arg2[%c1, %c0_8, %c0_9] : memref<3x32x16xf32, #tpu.memory_space<vmem>>, vector<1x8x16xf32>
    %9 = vector.shape_cast %8 : vector<1x8x16xf32> to vector<8x16xf32>
    %cst_10 = arith.constant dense<0.000000e+00> : vector<28x16xf32>
    %10 = tpu.matmul %1, %9, %cst_10 {dimension_numbers = #tpu.dot_dimension_numbers<[1], [0], [0], [1], [0, 0, 1, 1], [], []>} : vector<28x8xf32>, vector<8x16xf32>, vector<28x16xf32> -> vector<28x16xf32>
    %c1_11 = arith.constant 1 : index
    %c0_12 = arith.constant 0 : index
    %c0_13 = arith.constant 0 : index
    %11 = vector.load %arg5[%c1_11, %c0_12, %c0_13] : memref<3x28x16xf32, #tpu.memory_space<vmem>>, vector<1x28x16xf32>
    %12 = vector.shape_cast %11 : vector<1x28x16xf32> to vector<28x16xf32>
    %13 = vector.shape_cast %10 : vector<28x16xf32> to vector<1x28x16xf32>
    tpu.vector_store %arg5[%c1_11, %c0_12, %c0_13], %13 {strides = array<i32>} : memref<3x28x16xf32, #tpu.memory_space<vmem>>, vector<1x28x16xf32>,
    %c2 = arith.constant 2 : index
    %c0_14 = arith.constant 0 : index
    %c0_15 = arith.constant 0 : index
    %14 = vector.load %arg2[%c2, %c0_14, %c0_15] : memref<3x32x16xf32, #tpu.memory_space<vmem>>, vector<1x8x16xf32>
    %15 = vector.shape_cast %14 : vector<1x8x16xf32> to vector<8x16xf32>
    %cst_16 = arith.constant dense<0.000000e+00> : vector<28x16xf32>
    %16 = tpu.matmul %1, %15, %cst_16 {dimension_numbers = #tpu.dot_dimension_numbers<[1], [0], [0], [1], [0, 0, 1, 1], [], []>} : vector<28x8xf32>, vector<8x16xf32>, vector<28x16xf32> -> vector<28x16xf32>
    %c2_17 = arith.constant 2 : index
    %c0_18 = arith.constant 0 : index
    %c0_19 = arith.constant 0 : index
    %17 = vector.load %arg5[%c2_17, %c0_18, %c0_19] : memref<3x28x16xf32, #tpu.memory_space<vmem>>, vector<1x28x16xf32>
    %18 = vector.shape_cast %17 : vector<1x28x16xf32> to vector<28x16xf32>
    %19 = vector.shape_cast %16 : vector<28x16xf32> to vector<1x28x16xf32>
    tpu.vector_store %arg5[%c2_17, %c0_18, %c0_19], %19 {strides = array<i32>} : memref<3x28x16xf32, #tpu.memory_space<vmem>>, vector<1x28x16xf32>,
    %c0_20 = arith.constant 0 : index
    %c8 = arith.constant 8 : index
    %c0_21 = arith.constant 0 : index
    %20 = vector.load %arg2[%c0_20, %c8, %c0_21] : memref<3x32x16xf32, #tpu.memory_space<vmem>>, vector<1x16x16xf32>
    %21 = vector.shape_cast %20 : vector<1x16x16xf32> to vector<16x16xf32>
    %c1_22 = arith.constant 1 : index
    %c8_23 = arith.constant 8 : index
    %c0_24 = arith.constant 0 : index
    %22 = vector.load %arg2[%c1_22, %c8_23, %c0_24] : memref<3x32x16xf32, #tpu.memory_space<vmem>>, vector<1x16x16xf32>
    %23 = vector.shape_cast %22 : vector<1x16x16xf32> to vector<16x16xf32>
    %c2_25 = arith.constant 2 : index
    %c8_26 = arith.constant 8 : index
    %c0_27 = arith.constant 0 : index
    %24 = vector.load %arg2[%c2_25, %c8_26, %c0_27] : memref<3x32x16xf32, #tpu.memory_space<vmem>>, vector<1x16x16xf32>
    %25 = vector.shape_cast %24 : vector<1x16x16xf32> to vector<16x16xf32>
    %c2_28 = arith.constant 2 : index
    %c24 = arith.constant 24 : index
    %c0_29 = arith.constant 0 : index
    %26 = vector.load %arg2[%c2_28, %c24, %c0_29] : memref<3x32x16xf32, #tpu.memory_space<vmem>>, vector<1x1x16xf32>
    %27 = vector.shape_cast %26 : vector<1x1x16xf32> to vector<1x16xf32>
    %cst_30 = arith.constant 0.000000e+00 : f32
    %28 = vector.broadcast %cst_30 : f32 to vector<4x16xf32>
    %c0_i32 = arith.constant 0 : i32
    %c4_i32 = arith.constant 4 : i32
    %29 = arith.muli %c0_i32, %c4_i32 : i32
    %30 = tpu.assume_multiple %29, 4 : i32
    %c0_31 = arith.constant 0 : index
    %31 = arith.index_cast %30 : i32 to index
    %c0_32 = arith.constant 0 : index
    %32 = vector.load %arg5[%c0_31, %31, %c0_32] : memref<3x28x16xf32, #tpu.memory_space<vmem>>, vector<1x4x16xf32>
    %33 = vector.shape_cast %32 : vector<1x4x16xf32> to vector<4x16xf32>
    %c1_33 = arith.constant 1 : index
    %34 = arith.index_cast %30 : i32 to index
    %c0_34 = arith.constant 0 : index
    %35 = vector.load %arg5[%c1_33, %34, %c0_34] : memref<3x28x16xf32, #tpu.memory_space<vmem>>, vector<1x4x16xf32>
    %36 = vector.shape_cast %35 : vector<1x4x16xf32> to vector<4x16xf32>
    %c2_35 = arith.constant 2 : index
    %37 = arith.index_cast %30 : i32 to index
    %c0_36 = arith.constant 0 : index
    %38 = vector.load %arg5[%c2_35, %37, %c0_36] : memref<3x28x16xf32, #tpu.memory_space<vmem>>, vector<1x4x16xf32>
    %39 = vector.shape_cast %38 : vector<1x4x16xf32> to vector<4x16xf32>
    %cst_37 = arith.constant dense<0.000000e+00> : vector<4x16xf32>
    %40 = tpu.matmul %28, %21, %cst_37 {dimension_numbers = #tpu.dot_dimension_numbers<[1], [0], [0], [1], [0, 0, 1, 1], [], []>} : vector<4x16xf32>, vector<16x16xf32>, vector<4x16xf32> -> vector<4x16xf32>
    %41 = arith.addf %33, %40 : vector<4x16xf32>
    %42 = arith.negf %41 : vector<4x16xf32>
    %43 = math.exp %42 : vector<4x16xf32>
    %cst_38 = arith.constant 1.000000e+00 : f32
    %44 = vector.broadcast %cst_38 : f32 to vector<4x16xf32>
    %45 = arith.addf %44, %43 : vector<4x16xf32>
    %46 = arith.divf %44, %45 : vector<4x16xf32>
    %cst_39 = arith.constant dense<0.000000e+00> : vector<4x16xf32>
    %47 = tpu.matmul %28, %23, %cst_39 {dimension_numbers = #tpu.dot_dimension_numbers<[1], [0], [0], [1], [0, 0, 1, 1], [], []>} : vector<4x16xf32>, vector<16x16xf32>, vector<4x16xf32> -> vector<4x16xf32>
    %48 = arith.addf %36, %47 : vector<4x16xf32>
    %49 = arith.negf %48 : vector<4x16xf32>
    %50 = math.exp %49 : vector<4x16xf32>
    %cst_40 = arith.constant 1.000000e+00 : f32
    %51 = vector.broadcast %cst_40 : f32 to vector<4x16xf32>
    %52 = arith.addf %51, %50 : vector<4x16xf32>
    %53 = arith.divf %51, %52 : vector<4x16xf32>
    %cst_41 = arith.constant dense<0.000000e+00> : vector<4x16xf32>
    %54 = tpu.matmul %28, %25, %cst_41 {dimension_numbers = #tpu.dot_dimension_numbers<[1], [0], [0], [1], [0, 0, 1, 1], [], []>} : vector<4x16xf32>, vector<16x16xf32>, vector<4x16xf32> -> vector<4x16xf32>
    %55 = vector.broadcast %27 : vector<1x16xf32> to vector<4x16xf32>
    %56 = arith.addf %54, %55 : vector<4x16xf32>
    %57 = arith.mulf %46, %56 : vector<4x16xf32>
    %58 = arith.addf %39, %57 : vector<4x16xf32>
    %59 = math.tanh %58 : vector<4x16xf32>
    %cst_42 = arith.constant 1.000000e+00 : f32
    %60 = vector.broadcast %cst_42 : f32 to vector<4x16xf32>
    %61 = arith.subf %60, %53 : vector<4x16xf32>
    %62 = arith.mulf %61, %59 : vector<4x16xf32>
    %63 = arith.mulf %53, %28 : vector<4x16xf32>
    %64 = arith.addf %62, %63 : vector<4x16xf32>
    %c1_i32 = arith.constant 1 : i32
    %c4_i32_43 = arith.constant 4 : i32
    %65 = arith.muli %c1_i32, %c4_i32_43 : i32
    %66 = tpu.assume_multiple %65, 4 : i32
    %c0_44 = arith.constant 0 : index
    %67 = arith.index_cast %66 : i32 to index
    %c0_45 = arith.constant 0 : index
    %68 = vector.load %arg5[%c0_44, %67, %c0_45] : memref<3x28x16xf32, #tpu.memory_space<vmem>>, vector<1x4x16xf32>
    %69 = vector.shape_cast %68 : vector<1x4x16xf32> to vector<4x16xf32>
    %c1_46 = arith.constant 1 : index
    %70 = arith.index_cast %66 : i32 to index
    %c0_47 = arith.constant 0 : index
    %71 = vector.load %arg5[%c1_46, %70, %c0_47] : memref<3x28x16xf32, #tpu.memory_space<vmem>>, vector<1x4x16xf32>
    %72 = vector.shape_cast %71 : vector<1x4x16xf32> to vector<4x16xf32>
    %c2_48 = arith.constant 2 : index
    %73 = arith.index_cast %66 : i32 to index
    %c0_49 = arith.constant 0 : index
    %74 = vector.load %arg5[%c2_48, %73, %c0_49] : memref<3x28x16xf32, #tpu.memory_space<vmem>>, vector<1x4x16xf32>
    %75 = vector.shape_cast %74 : vector<1x4x16xf32> to vector<4x16xf32>
    %cst_50 = arith.constant dense<0.000000e+00> : vector<4x16xf32>
    %76 = tpu.matmul %64, %21, %cst_50 {dimension_numbers = #tpu.dot_dimension_numbers<[1], [0], [0], [1], [0, 0, 1, 1], [], []>} : vector<4x16xf32>, vector<16x16xf32>, vector<4x16xf32> -> vector<4x16xf32>
    %77 = arith.addf %69, %76 : vector<4x16xf32>
    %78 = arith.negf %77 : vector<4x16xf32>
    %79 = math.exp %78 : vector<4x16xf32>
    %cst_51 = arith.constant 1.000000e+00 : f32
    %80 = vector.broadcast %cst_51 : f32 to vector<4x16xf32>
    %81 = arith.addf %80, %79 : vector<4x16xf32>
    %82 = arith.divf %80, %81 : vector<4x16xf32>
    %cst_52 = arith.constant dense<0.000000e+00> : vector<4x16xf32>
    %83 = tpu.matmul %64, %23, %cst_52 {dimension_numbers = #tpu.dot_dimension_numbers<[1], [0], [0], [1], [0, 0, 1, 1], [], []>} : vector<4x16xf32>, vector<16x16xf32>, vector<4x16xf32> -> vector<4x16xf32>
    %84 = arith.addf %72, %83 : vector<4x16xf32>
    %85 = arith.negf %84 : vector<4x16xf32>
    %86 = math.exp %85 : vector<4x16xf32>
    %cst_53 = arith.constant 1.000000e+00 : f32
    %87 = vector.broadcast %cst_53 : f32 to vector<4x16xf32>
    %88 = arith.addf %87, %86 : vector<4x16xf32>
    %89 = arith.divf %87, %88 : vector<4x16xf32>
    %cst_54 = arith.constant dense<0.000000e+00> : vector<4x16xf32>
    %90 = tpu.matmul %64, %25, %cst_54 {dimension_numbers = #tpu.dot_dimension_numbers<[1], [0], [0], [1], [0, 0, 1, 1], [], []>} : vector<4x16xf32>, vector<16x16xf32>, vector<4x16xf32> -> vector<4x16xf32>
    %91 = vector.broadcast %27 : vector<1x16xf32> to vector<4x16xf32>
    %92 = arith.addf %90, %91 : vector<4x16xf32>
    %93 = arith.mulf %82, %92 : vector<4x16xf32>
    %94 = arith.addf %75, %93 : vector<4x16xf32>
    %95 = math.tanh %94 : vector<4x16xf32>
    %cst_55 = arith.constant 1.000000e+00 : f32
    %96 = vector.broadcast %cst_55 : f32 to vector<4x16xf32>
    %97 = arith.subf %96, %89 : vector<4x16xf32>
    %98 = arith.mulf %97, %95 : vector<4x16xf32>
    %99 = arith.mulf %89, %64 : vector<4x16xf32>
    %100 = arith.addf %98, %99 : vector<4x16xf32>
    %c2_i32 = arith.constant 2 : i32
    %c4_i32_56 = arith.constant 4 : i32
    %101 = arith.muli %c2_i32, %c4_i32_56 : i32
    %102 = tpu.assume_multiple %101, 4 : i32
    %c0_57 = arith.constant 0 : index
    %103 = arith.index_cast %102 : i32 to index
    %c0_58 = arith.constant 0 : index
    %104 = vector.load %arg5[%c0_57, %103, %c0_58] : memref<3x28x16xf32, #tpu.memory_space<vmem>>, vector<1x4x16xf32>
    %105 = vector.shape_cast %104 : vector<1x4x16xf32> to vector<4x16xf32>
    %c1_59 = arith.constant 1 : index
    %106 = arith.index_cast %102 : i32 to index
    %c0_60 = arith.constant 0 : index
    %107 = vector.load %arg5[%c1_59, %106, %c0_60] : memref<3x28x16xf32, #tpu.memory_space<vmem>>, vector<1x4x16xf32>
    %108 = vector.shape_cast %107 : vector<1x4x16xf32> to vector<4x16xf32>
    %c2_61 = arith.constant 2 : index
    %109 = arith.index_cast %102 : i32 to index
    %c0_62 = arith.constant 0 : index
    %110 = vector.load %arg5[%c2_61, %109, %c0_62] : memref<3x28x16xf32, #tpu.memory_space<vmem>>, vector<1x4x16xf32>
    %111 = vector.shape_cast %110 : vector<1x4x16xf32> to vector<4x16xf32>
    %cst_63 = arith.constant dense<0.000000e+00> : vector<4x16xf32>
    %112 = tpu.matmul %100, %21, %cst_63 {dimension_numbers = #tpu.dot_dimension_numbers<[1], [0], [0], [1], [0, 0, 1, 1], [], []>} : vector<4x16xf32>, vector<16x16xf32>, vector<4x16xf32> -> vector<4x16xf32>
    %113 = arith.addf %105, %112 : vector<4x16xf32>
    %114 = arith.negf %113 : vector<4x16xf32>
    %115 = math.exp %114 : vector<4x16xf32>
    %cst_64 = arith.constant 1.000000e+00 : f32
    %116 = vector.broadcast %cst_64 : f32 to vector<4x16xf32>
    %117 = arith.addf %116, %115 : vector<4x16xf32>
    %118 = arith.divf %116, %117 : vector<4x16xf32>
    %cst_65 = arith.constant dense<0.000000e+00> : vector<4x16xf32>
    %119 = tpu.matmul %100, %23, %cst_65 {dimension_numbers = #tpu.dot_dimension_numbers<[1], [0], [0], [1], [0, 0, 1, 1], [], []>} : vector<4x16xf32>, vector<16x16xf32>, vector<4x16xf32> -> vector<4x16xf32>
    %120 = arith.addf %108, %119 : vector<4x16xf32>
    %121 = arith.negf %120 : vector<4x16xf32>
    %122 = math.exp %121 : vector<4x16xf32>
    %cst_66 = arith.constant 1.000000e+00 : f32
    %123 = vector.broadcast %cst_66 : f32 to vector<4x16xf32>
    %124 = arith.addf %123, %122 : vector<4x16xf32>
    %125 = arith.divf %123, %124 : vector<4x16xf32>
    %cst_67 = arith.constant dense<0.000000e+00> : vector<4x16xf32>
    %126 = tpu.matmul %100, %25, %cst_67 {dimension_numbers = #tpu.dot_dimension_numbers<[1], [0], [0], [1], [0, 0, 1, 1], [], []>} : vector<4x16xf32>, vector<16x16xf32>, vector<4x16xf32> -> vector<4x16xf32>
    %127 = vector.broadcast %27 : vector<1x16xf32> to vector<4x16xf32>
    %128 = arith.addf %126, %127 : vector<4x16xf32>
    %129 = arith.mulf %118, %128 : vector<4x16xf32>
    %130 = arith.addf %111, %129 : vector<4x16xf32>
    %131 = math.tanh %130 : vector<4x16xf32>
    %cst_68 = arith.constant 1.000000e+00 : f32
    %132 = vector.broadcast %cst_68 : f32 to vector<4x16xf32>
    %133 = arith.subf %132, %125 : vector<4x16xf32>
    %134 = arith.mulf %133, %131 : vector<4x16xf32>
    %135 = arith.mulf %125, %100 : vector<4x16xf32>
    %136 = arith.addf %134, %135 : vector<4x16xf32>
    %c3_i32 = arith.constant 3 : i32
    %c4_i32_69 = arith.constant 4 : i32
    %137 = arith.muli %c3_i32, %c4_i32_69 : i32
    %138 = tpu.assume_multiple %137, 4 : i32
    %c0_70 = arith.constant 0 : index
    %139 = arith.index_cast %138 : i32 to index
    %c0_71 = arith.constant 0 : index
    %140 = vector.load %arg5[%c0_70, %139, %c0_71] : memref<3x28x16xf32, #tpu.memory_space<vmem>>, vector<1x4x16xf32>
    %141 = vector.shape_cast %140 : vector<1x4x16xf32> to vector<4x16xf32>
    %c1_72 = arith.constant 1 : index
    %142 = arith.index_cast %138 : i32 to index
    %c0_73 = arith.constant 0 : index
    %143 = vector.load %arg5[%c1_72, %142, %c0_73] : memref<3x28x16xf32, #tpu.memory_space<vmem>>, vector<1x4x16xf32>
    %144 = vector.shape_cast %143 : vector<1x4x16xf32> to vector<4x16xf32>
    %c2_74 = arith.constant 2 : index
    %145 = arith.index_cast %138 : i32 to index
    %c0_75 = arith.constant 0 : index
    %146 = vector.load %arg5[%c2_74, %145, %c0_75] : memref<3x28x16xf32, #tpu.memory_space<vmem>>, vector<1x4x16xf32>
    %147 = vector.shape_cast %146 : vector<1x4x16xf32> to vector<4x16xf32>
    %cst_76 = arith.constant dense<0.000000e+00> : vector<4x16xf32>
    %148 = tpu.matmul %136, %21, %cst_76 {dimension_numbers = #tpu.dot_dimension_numbers<[1], [0], [0], [1], [0, 0, 1, 1], [], []>} : vector<4x16xf32>, vector<16x16xf32>, vector<4x16xf32> -> vector<4x16xf32>
    %149 = arith.addf %141, %148 : vector<4x16xf32>
    %150 = arith.negf %149 : vector<4x16xf32>
    %151 = math.exp %150 : vector<4x16xf32>
    %cst_77 = arith.constant 1.000000e+00 : f32
    %152 = vector.broadcast %cst_77 : f32 to vector<4x16xf32>
    %153 = arith.addf %152, %151 : vector<4x16xf32>
    %154 = arith.divf %152, %153 : vector<4x16xf32>
    %cst_78 = arith.constant dense<0.000000e+00> : vector<4x16xf32>
    %155 = tpu.matmul %136, %23, %cst_78 {dimension_numbers = #tpu.dot_dimension_numbers<[1], [0], [0], [1], [0, 0, 1, 1], [], []>} : vector<4x16xf32>, vector<16x16xf32>, vector<4x16xf32> -> vector<4x16xf32>
    %156 = arith.addf %144, %155 : vector<4x16xf32>
    %157 = arith.negf %156 : vector<4x16xf32>
    %158 = math.exp %157 : vector<4x16xf32>
    %cst_79 = arith.constant 1.000000e+00 : f32
    %159 = vector.broadcast %cst_79 : f32 to vector<4x16xf32>
    %160 = arith.addf %159, %158 : vector<4x16xf32>
    %161 = arith.divf %159, %160 : vector<4x16xf32>
    %cst_80 = arith.constant dense<0.000000e+00> : vector<4x16xf32>
    %162 = tpu.matmul %136, %25, %cst_80 {dimension_numbers = #tpu.dot_dimension_numbers<[1], [0], [0], [1], [0, 0, 1, 1], [], []>} : vector<4x16xf32>, vector<16x16xf32>, vector<4x16xf32> -> vector<4x16xf32>
    %163 = vector.broadcast %27 : vector<1x16xf32> to vector<4x16xf32>
    %164 = arith.addf %162, %163 : vector<4x16xf32>
    %165 = arith.mulf %154, %164 : vector<4x16xf32>
    %166 = arith.addf %147, %165 : vector<4x16xf32>
    %167 = math.tanh %166 : vector<4x16xf32>
    %cst_81 = arith.constant 1.000000e+00 : f32
    %168 = vector.broadcast %cst_81 : f32 to vector<4x16xf32>
    %169 = arith.subf %168, %161 : vector<4x16xf32>
    %170 = arith.mulf %169, %167 : vector<4x16xf32>
    %171 = arith.mulf %161, %136 : vector<4x16xf32>
    %172 = arith.addf %170, %171 : vector<4x16xf32>
    %c4_i32_82 = arith.constant 4 : i32
    %c4_i32_83 = arith.constant 4 : i32
    %173 = arith.muli %c4_i32_82, %c4_i32_83 : i32
    %174 = tpu.assume_multiple %173, 4 : i32
    %c0_84 = arith.constant 0 : index
    %175 = arith.index_cast %174 : i32 to index
    %c0_85 = arith.constant 0 : index
    %176 = vector.load %arg5[%c0_84, %175, %c0_85] : memref<3x28x16xf32, #tpu.memory_space<vmem>>, vector<1x4x16xf32>
    %177 = vector.shape_cast %176 : vector<1x4x16xf32> to vector<4x16xf32>
    %c1_86 = arith.constant 1 : index
    %178 = arith.index_cast %174 : i32 to index
    %c0_87 = arith.constant 0 : index
    %179 = vector.load %arg5[%c1_86, %178, %c0_87] : memref<3x28x16xf32, #tpu.memory_space<vmem>>, vector<1x4x16xf32>
    %180 = vector.shape_cast %179 : vector<1x4x16xf32> to vector<4x16xf32>
    %c2_88 = arith.constant 2 : index
    %181 = arith.index_cast %174 : i32 to index
    %c0_89 = arith.constant 0 : index
    %182 = vector.load %arg5[%c2_88, %181, %c0_89] : memref<3x28x16xf32, #tpu.memory_space<vmem>>, vector<1x4x16xf32>
    %183 = vector.shape_cast %182 : vector<1x4x16xf32> to vector<4x16xf32>
    %cst_90 = arith.constant dense<0.000000e+00> : vector<4x16xf32>
    %184 = tpu.matmul %172, %21, %cst_90 {dimension_numbers = #tpu.dot_dimension_numbers<[1], [0], [0], [1], [0, 0, 1, 1], [], []>} : vector<4x16xf32>, vector<16x16xf32>, vector<4x16xf32> -> vector<4x16xf32>
    %185 = arith.addf %177, %184 : vector<4x16xf32>
    %186 = arith.negf %185 : vector<4x16xf32>
    %187 = math.exp %186 : vector<4x16xf32>
    %cst_91 = arith.constant 1.000000e+00 : f32
    %188 = vector.broadcast %cst_91 : f32 to vector<4x16xf32>
    %189 = arith.addf %188, %187 : vector<4x16xf32>
    %190 = arith.divf %188, %189 : vector<4x16xf32>
    %cst_92 = arith.constant dense<0.000000e+00> : vector<4x16xf32>
    %191 = tpu.matmul %172, %23, %cst_92 {dimension_numbers = #tpu.dot_dimension_numbers<[1], [0], [0], [1], [0, 0, 1, 1], [], []>} : vector<4x16xf32>, vector<16x16xf32>, vector<4x16xf32> -> vector<4x16xf32>
    %192 = arith.addf %180, %191 : vector<4x16xf32>
    %193 = arith.negf %192 : vector<4x16xf32>
    %194 = math.exp %193 : vector<4x16xf32>
    %cst_93 = arith.constant 1.000000e+00 : f32
    %195 = vector.broadcast %cst_93 : f32 to vector<4x16xf32>
    %196 = arith.addf %195, %194 : vector<4x16xf32>
    %197 = arith.divf %195, %196 : vector<4x16xf32>
    %cst_94 = arith.constant dense<0.000000e+00> : vector<4x16xf32>
    %198 = tpu.matmul %172, %25, %cst_94 {dimension_numbers = #tpu.dot_dimension_numbers<[1], [0], [0], [1], [0, 0, 1, 1], [], []>} : vector<4x16xf32>, vector<16x16xf32>, vector<4x16xf32> -> vector<4x16xf32>
    %199 = vector.broadcast %27 : vector<1x16xf32> to vector<4x16xf32>
    %200 = arith.addf %198, %199 : vector<4x16xf32>
    %201 = arith.mulf %190, %200 : vector<4x16xf32>
    %202 = arith.addf %183, %201 : vector<4x16xf32>
    %203 = math.tanh %202 : vector<4x16xf32>
    %cst_95 = arith.constant 1.000000e+00 : f32
    %204 = vector.broadcast %cst_95 : f32 to vector<4x16xf32>
    %205 = arith.subf %204, %197 : vector<4x16xf32>
    %206 = arith.mulf %205, %203 : vector<4x16xf32>
    %207 = arith.mulf %197, %172 : vector<4x16xf32>
    %208 = arith.addf %206, %207 : vector<4x16xf32>
    %c5_i32 = arith.constant 5 : i32
    %c4_i32_96 = arith.constant 4 : i32
    %209 = arith.muli %c5_i32, %c4_i32_96 : i32
    %210 = tpu.assume_multiple %209, 4 : i32
    %c0_97 = arith.constant 0 : index
    %211 = arith.index_cast %210 : i32 to index
    %c0_98 = arith.constant 0 : index
    %212 = vector.load %arg5[%c0_97, %211, %c0_98] : memref<3x28x16xf32, #tpu.memory_space<vmem>>, vector<1x4x16xf32>
    %213 = vector.shape_cast %212 : vector<1x4x16xf32> to vector<4x16xf32>
    %c1_99 = arith.constant 1 : index
    %214 = arith.index_cast %210 : i32 to index
    %c0_100 = arith.constant 0 : index
    %215 = vector.load %arg5[%c1_99, %214, %c0_100] : memref<3x28x16xf32, #tpu.memory_space<vmem>>, vector<1x4x16xf32>
    %216 = vector.shape_cast %215 : vector<1x4x16xf32> to vector<4x16xf32>
    %c2_101 = arith.constant 2 : index
    %217 = arith.index_cast %210 : i32 to index
    %c0_102 = arith.constant 0 : index
    %218 = vector.load %arg5[%c2_101, %217, %c0_102] : memref<3x28x16xf32, #tpu.memory_space<vmem>>, vector<1x4x16xf32>
    %219 = vector.shape_cast %218 : vector<1x4x16xf32> to vector<4x16xf32>
    %cst_103 = arith.constant dense<0.000000e+00> : vector<4x16xf32>
    %220 = tpu.matmul %208, %21, %cst_103 {dimension_numbers = #tpu.dot_dimension_numbers<[1], [0], [0], [1], [0, 0, 1, 1], [], []>} : vector<4x16xf32>, vector<16x16xf32>, vector<4x16xf32> -> vector<4x16xf32>
    %221 = arith.addf %213, %220 : vector<4x16xf32>
    %222 = arith.negf %221 : vector<4x16xf32>
    %223 = math.exp %222 : vector<4x16xf32>
    %cst_104 = arith.constant 1.000000e+00 : f32
    %224 = vector.broadcast %cst_104 : f32 to vector<4x16xf32>
    %225 = arith.addf %224, %223 : vector<4x16xf32>
    %226 = arith.divf %224, %225 : vector<4x16xf32>
    %cst_105 = arith.constant dense<0.000000e+00> : vector<4x16xf32>
    %227 = tpu.matmul %208, %23, %cst_105 {dimension_numbers = #tpu.dot_dimension_numbers<[1], [0], [0], [1], [0, 0, 1, 1], [], []>} : vector<4x16xf32>, vector<16x16xf32>, vector<4x16xf32> -> vector<4x16xf32>
    %228 = arith.addf %216, %227 : vector<4x16xf32>
    %229 = arith.negf %228 : vector<4x16xf32>
    %230 = math.exp %229 : vector<4x16xf32>
    %cst_106 = arith.constant 1.000000e+00 : f32
    %231 = vector.broadcast %cst_106 : f32 to vector<4x16xf32>
    %232 = arith.addf %231, %230 : vector<4x16xf32>
    %233 = arith.divf %231, %232 : vector<4x16xf32>
    %cst_107 = arith.constant dense<0.000000e+00> : vector<4x16xf32>
    %234 = tpu.matmul %208, %25, %cst_107 {dimension_numbers = #tpu.dot_dimension_numbers<[1], [0], [0], [1], [0, 0, 1, 1], [], []>} : vector<4x16xf32>, vector<16x16xf32>, vector<4x16xf32> -> vector<4x16xf32>
    %235 = vector.broadcast %27 : vector<1x16xf32> to vector<4x16xf32>
    %236 = arith.addf %234, %235 : vector<4x16xf32>
    %237 = arith.mulf %226, %236 : vector<4x16xf32>
    %238 = arith.addf %219, %237 : vector<4x16xf32>
    %239 = math.tanh %238 : vector<4x16xf32>
    %cst_108 = arith.constant 1.000000e+00 : f32
    %240 = vector.broadcast %cst_108 : f32 to vector<4x16xf32>
    %241 = arith.subf %240, %233 : vector<4x16xf32>
    %242 = arith.mulf %241, %239 : vector<4x16xf32>
    %243 = arith.mulf %233, %208 : vector<4x16xf32>
    %244 = arith.addf %242, %243 : vector<4x16xf32>
    %c6_i32 = arith.constant 6 : i32
    %c4_i32_109 = arith.constant 4 : i32
    %245 = arith.muli %c6_i32, %c4_i32_109 : i32
    %246 = tpu.assume_multiple %245, 4 : i32
    %c0_110 = arith.constant 0 : index
    %247 = arith.index_cast %246 : i32 to index
    %c0_111 = arith.constant 0 : index
    %248 = vector.load %arg5[%c0_110, %247, %c0_111] : memref<3x28x16xf32, #tpu.memory_space<vmem>>, vector<1x4x16xf32>
    %249 = vector.shape_cast %248 : vector<1x4x16xf32> to vector<4x16xf32>
    %c1_112 = arith.constant 1 : index
    %250 = arith.index_cast %246 : i32 to index
    %c0_113 = arith.constant 0 : index
    %251 = vector.load %arg5[%c1_112, %250, %c0_113] : memref<3x28x16xf32, #tpu.memory_space<vmem>>, vector<1x4x16xf32>
    %252 = vector.shape_cast %251 : vector<1x4x16xf32> to vector<4x16xf32>
    %c2_114 = arith.constant 2 : index
    %253 = arith.index_cast %246 : i32 to index
    %c0_115 = arith.constant 0 : index
    %254 = vector.load %arg5[%c2_114, %253, %c0_115] : memref<3x28x16xf32, #tpu.memory_space<vmem>>, vector<1x4x16xf32>
    %255 = vector.shape_cast %254 : vector<1x4x16xf32> to vector<4x16xf32>
    %cst_116 = arith.constant dense<0.000000e+00> : vector<4x16xf32>
    %256 = tpu.matmul %244, %21, %cst_116 {dimension_numbers = #tpu.dot_dimension_numbers<[1], [0], [0], [1], [0, 0, 1, 1], [], []>} : vector<4x16xf32>, vector<16x16xf32>, vector<4x16xf32> -> vector<4x16xf32>
    %257 = arith.addf %249, %256 : vector<4x16xf32>
    %258 = arith.negf %257 : vector<4x16xf32>
    %259 = math.exp %258 : vector<4x16xf32>
    %cst_117 = arith.constant 1.000000e+00 : f32
    %260 = vector.broadcast %cst_117 : f32 to vector<4x16xf32>
    %261 = arith.addf %260, %259 : vector<4x16xf32>
    %262 = arith.divf %260, %261 : vector<4x16xf32>
    %cst_118 = arith.constant dense<0.000000e+00> : vector<4x16xf32>
    %263 = tpu.matmul %244, %23, %cst_118 {dimension_numbers = #tpu.dot_dimension_numbers<[1], [0], [0], [1], [0, 0, 1, 1], [], []>} : vector<4x16xf32>, vector<16x16xf32>, vector<4x16xf32> -> vector<4x16xf32>
    %264 = arith.addf %252, %263 : vector<4x16xf32>
    %265 = arith.negf %264 : vector<4x16xf32>
    %266 = math.exp %265 : vector<4x16xf32>
    %cst_119 = arith.constant 1.000000e+00 : f32
    %267 = vector.broadcast %cst_119 : f32 to vector<4x16xf32>
    %268 = arith.addf %267, %266 : vector<4x16xf32>
    %269 = arith.divf %267, %268 : vector<4x16xf32>
    %cst_120 = arith.constant dense<0.000000e+00> : vector<4x16xf32>
    %270 = tpu.matmul %244, %25, %cst_120 {dimension_numbers = #tpu.dot_dimension_numbers<[1], [0], [0], [1], [0, 0, 1, 1], [], []>} : vector<4x16xf32>, vector<16x16xf32>, vector<4x16xf32> -> vector<4x16xf32>
    %271 = vector.broadcast %27 : vector<1x16xf32> to vector<4x16xf32>
    %272 = arith.addf %270, %271 : vector<4x16xf32>
    %273 = arith.mulf %262, %272 : vector<4x16xf32>
    %274 = arith.addf %255, %273 : vector<4x16xf32>
    %275 = math.tanh %274 : vector<4x16xf32>
    %cst_121 = arith.constant 1.000000e+00 : f32
    %276 = vector.broadcast %cst_121 : f32 to vector<4x16xf32>
    %277 = arith.subf %276, %269 : vector<4x16xf32>
    %278 = arith.mulf %277, %275 : vector<4x16xf32>
    %279 = arith.mulf %269, %244 : vector<4x16xf32>
    %280 = arith.addf %278, %279 : vector<4x16xf32>
    %c7_i32 = arith.constant 7 : i32
    %c16 = arith.constant 16 : index
    %c0_122 = arith.constant 0 : index
    %281 = vector.load %arg3[%c16, %c0_122] : memref<160x64xf32, #tpu.memory_space<vmem>>, vector<16x64xf32>
    %cst_123 = arith.constant dense<0.000000e+00> : vector<4x64xf32>
    %282 = tpu.matmul %280, %281, %cst_123 {dimension_numbers = #tpu.dot_dimension_numbers<[1], [0], [0], [1], [0, 0, 1, 1], [], []>} : vector<4x16xf32>, vector<16x64xf32>, vector<4x64xf32> -> vector<4x64xf32>
    %c32 = arith.constant 32 : index
    %c0_124 = arith.constant 0 : index
    %283 = vector.load %arg3[%c32, %c0_124] : memref<160x64xf32, #tpu.memory_space<vmem>>, vector<64x64xf32>
    %cst_125 = arith.constant dense<0.000000e+00> : vector<4x64xf32>
    %284 = tpu.matmul %282, %283, %cst_125 {dimension_numbers = #tpu.dot_dimension_numbers<[1], [0], [0], [1], [0, 0, 1, 1], [], []>} : vector<4x64xf32>, vector<64x64xf32>, vector<4x64xf32> -> vector<4x64xf32>
    %285 = vector.extract_strided_slice %284 {offsets = [0, 0], sizes = [4, 4], strides = [1, 1]} : vector<4x64xf32> to vector<4x4xf32>
    %286 = vector.extract_strided_slice %284 {offsets = [0, 4], sizes = [1, 4], strides = [1, 1]} : vector<4x64xf32> to vector<1x4xf32>
    %287 = vector.broadcast %286 : vector<1x4xf32> to vector<4x4xf32>
    %288 = arith.addf %285, %287 : vector<4x4xf32>
    %cst_126 = arith.constant 0.000000e+00 : f32
    %289 = vector.broadcast %cst_126 : f32 to vector<4x4xf32>
    %290 = arith.cmpf oge, %288, %289 : vector<4x4xf32>
    %cst_127 = arith.constant 2.000000e-01 : f32
    %291 = vector.broadcast %cst_127 : f32 to vector<4x4xf32>
    %292 = arith.mulf %291, %288 : vector<4x4xf32>
    %293 = arith.select %290, %288, %292 : vector<4x4xi1>, vector<4x4xf32>
    %cst_128 = arith.constant dense<0xFF800000> : vector<4xf32>
    %294 = vector.multi_reduction <maximumf>, %293, %cst_128 [0] : vector<4x4xf32> to vector<4xf32>
    %295 = vector.shape_cast %294 : vector<4xf32> to vector<1x4xf32>
    %296 = vector.broadcast %295 : vector<1x4xf32> to vector<4x4xf32>
    %297 = arith.subf %293, %296 : vector<4x4xf32>
    %298 = math.exp %297 : vector<4x4xf32>
    %cst_129 = arith.constant dense<0.000000e+00> : vector<4xf32>
    %299 = vector.multi_reduction <add>, %298, %cst_129 [0] : vector<4x4xf32> to vector<4xf32>
    %300 = vector.shape_cast %299 : vector<4xf32> to vector<1x4xf32>
    %301 = vector.broadcast %300 : vector<1x4xf32> to vector<4x4xf32>
    %302 = arith.divf %298, %301 : vector<4x4xf32>
    %c8_130 = arith.constant 8 : index
    %c0_131 = arith.constant 0 : index
    %303 = vector.load %arg3[%c8_130, %c0_131] : memref<160x64xf32, #tpu.memory_space<vmem>>, vector<4x64xf32>
    %cst_132 = arith.constant dense<0.000000e+00> : vector<4x64xf32>
    %304 = tpu.matmul %302, %303, %cst_132 {dimension_numbers = #tpu.dot_dimension_numbers<[1], [0], [0], [1], [0, 0, 1, 1], [], []>} : vector<4x4xf32>, vector<4x64xf32>, vector<4x64xf32> -> vector<4x64xf32>
    %305 = arith.mulf %304, %282 : vector<4x64xf32>
    %cst_133 = arith.constant dense<0.000000e+00> : vector<64xf32>
    %306 = vector.multi_reduction <add>, %305, %cst_133 [0] : vector<4x64xf32> to vector<64xf32>
    %307 = vector.shape_cast %306 : vector<64xf32> to vector<1x64xf32>
    %c96 = arith.constant 96 : index
    %c0_134 = arith.constant 0 : index
    %308 = vector.load %arg3[%c96, %c0_134] : memref<160x64xf32, #tpu.memory_space<vmem>>, vector<64x64xf32>
    %cst_135 = arith.constant dense<0.000000e+00> : vector<1x64xf32>
    %309 = tpu.matmul %307, %308, %cst_135 {dimension_numbers = #tpu.dot_dimension_numbers<[1], [0], [0], [1], [0, 0, 1, 1], [], []>} : vector<1x64xf32>, vector<64x64xf32>, vector<1x64xf32> -> vector<1x64xf32>
    %c0_136 = arith.constant 0 : index
    %c0_137 = arith.constant 0 : index
    %310 = vector.load %arg3[%c0_136, %c0_137] : memref<160x64xf32, #tpu.memory_space<vmem>>, vector<1x64xf32>
    %311 = arith.addf %309, %310 : vector<1x64xf32>
    %312 = vector.extract_strided_slice %311 {offsets = [0, 0], sizes = [1, 16], strides = [1, 1]} : vector<1x64xf32> to vector<1x16xf32>
    %c0_138 = arith.constant 0 : index
    %c0_139 = arith.constant 0 : index
    %c0_140 = arith.constant 0 : index
    %313 = vector.load %arg4[%c0_138, %c0_139, %c0_140] : memref<1x1x16xf32, #tpu.memory_space<vmem>>, vector<1x1x16xf32>
    %314 = vector.shape_cast %313 : vector<1x1x16xf32> to vector<1x16xf32>
    %315 = vector.shape_cast %312 : vector<1x16xf32> to vector<1x1x16xf32>
    tpu.vector_store %arg4[%c0_138, %c0_139, %c0_140], %315 {strides = array<i32>} : memref<1x1x16xf32, #tpu.memory_space<vmem>>, vector<1x1x16xf32>,
    return
  }
  func.func @transform_0(%arg0: i32) -> (i32, i32, i32) {
    %c0_i32 = arith.constant 0 : i32
    %c0_i32_0 = arith.constant 0 : i32
    %c0_i32_1 = arith.constant 0 : i32
    return %arg0, %c0_i32, %c0_i32_0 : i32, i32, i32
  }
  func.func @transform_1(%arg0: i32) -> (i32, i32, i32) {
    %c0_i32 = arith.constant 0 : i32
    %c0_i32_0 = arith.constant 0 : i32
    %c0_i32_1 = arith.constant 0 : i32
    %c0_i32_2 = arith.constant 0 : i32
    return %c0_i32, %c0_i32_0, %c0_i32_1 : i32, i32, i32
  }
  func.func @transform_2(%arg0: i32) -> (i32, i32) {
    %c0_i32 = arith.constant 0 : i32
    %c0_i32_0 = arith.constant 0 : i32
    %c0_i32_1 = arith.constant 0 : i32
    return %c0_i32, %c0_i32_0 : i32, i32
  }
  func.func @transform_3(%arg0: i32) -> (i32, i32, i32) {
    %c0_i32 = arith.constant 0 : i32
    %c0_i32_0 = arith.constant 0 : i32
    %c0_i32_1 = arith.constant 0 : i32
    return %arg0, %c0_i32, %c0_i32_0 : i32, i32, i32
  }
}

</mosaic_0001>

<llo_original>
// kernel: context_encoder_forward.1
$region0: #{context_encoder_forward.1}
  #allocation0 [shape = 'u32[]', space=smem, size = 0x4, offset = 0x4, fixed_abs, tag = 'smem constant byte address 0x4 - core index']
  #allocation1 [shape = 'u32[144,128]{1,0:T(1,128)}', space=vmem, size = 0x12000, scoped, tag = 'internal scratch']
  #allocation2 [shape = 'f32[3,28,16]{2,1,0:T(8,128)}', space=vmem, size = 0xc000, scoped, tag = 'scratch operand']
  %s0 = inlined_call_operand.vmem [shape: f32[2,28,8], index: 0, kind: input, shape index: {}]
  %s1 = inlined_call_operand.vmem [shape: f32[3,32,16], index: 1, kind: input, shape index: {}]
  %s2 = inlined_call_operand.vmem [shape: f32[160,64], index: 2, kind: input, shape index: {}]
  %s3 = inlined_call_operand.hbm [shape: f32[2,1,16], index: 3, kind: output, shape index: {}]
  %s4 = sld [smem:[#allocation0]]
  $region45: #{context_encoder_forward.1} parent=0
    _
  %s6 = ssub.s32 1, %s4
  %s7 = scalar_select 0, %s6, %s4
  $region1: #{context_encoder_forward.1} parent=0
    #allocation3 [shape = 'u8[1024]{0}', space=vmem, size = 0x400, scoped, tag = 'output window, operand 0']
    #allocation4 [shape = 's32[2]{0}', space=sflag, size = 0x8, scoped, tag = 'scoped memory for context_encoder_forward.1']
    %8 = vsyncpa [#allocation4], 0
    %s9 = scalar_lea.sflag [#allocation4], 1
    %10 = vsyncpa %s9, 0
    loop: start=0, step=1, limit=4
    $region2: #{context_encoder_forward.1} parent=1 // loop_pre_header
      _
    $region3: #{context_encoder_forward.1} parent=1 // loop_header
      %s12 = sphi 0, %s16
      %p13 = scmp.ge.s32.totalorder %s12, 4
      %s22 = sphi 0, %s24
      %s25 = sphi 0, %s22
      %s26 = sphi 0, %s25
      %s42 = sphi 0, %s26
      %s46 = sphi 0, %s46
      %s48 = sphi 0, %s46
      %s49 = sphi 0, %s48
      %s63 = sphi 0, %s49
      %s67 = sphi 0, %s67
      %s69 = sphi 0, %s67
      %s70 = sphi 0, %s69
      %s84 = sphi 0, %s70
      %s90 = sphi 0, %s92
      %s93 = sphi 0, %s90
      %s94 = sphi 0, %s93
      %s110 = sphi 0, %s94
    $region4: #{context_encoder_forward.1} parent=1 // loop_header_branch
      %15 = sbr.rel (%p13) target = $region8
    $region5: #{context_encoder_forward.1} parent=1 // loop_body
      %s17 = ssub.s32 %s12, 1
      %s18 = ssub.s32 %s12, 2
      %s19 = sadd.s32 %s12, 1
      %s20 = ssub.s32 %s12, %s19
      %p21 = scmp.eq.s32.totalorder %s20, 0
      %s23 = sadd.s32 %s22, 1
      %s24 = scalar_select %p21, %s22, %s23
      %p27 = pneg %p21
      %p28 = scmp.eq.s32.totalorder %s12, 1
      %p29 = por %p27, %p28
      %p30 = scmp.ne.s32.totalorder %s22, %s25
      %p31 = scmp.eq.s32.totalorder %s12, 0
      %p32 = por %p30, %p31
      %p33 = scmp.ne.s32.totalorder %s22, %s25
      %p34 = scmp.eq.s32.totalorder %s17, 1
      %p35 = por %p33, %p34
      %p36 = scmp.ne.s32.totalorder %s25, %s26
      %p37 = scmp.eq.s32.totalorder %s17, 0
      %p38 = por %p36, %p37
      %p39 = scmp.ne.s32.totalorder %s25, %s26
      %p40 = scmp.eq.s32.totalorder %s18, 1
      %p41 = por %p39, %p40
      %p43 = scmp.ne.s32.totalorder %s26, %s42
      %p44 = scmp.eq.s32.totalorder %s18, 0
      %p45 = por %p43, %p44
      %s47 = sadd.s32 %s46, 1
      %p50 = scmp.eq.s32.totalorder %s12, 1
      %p51 = scmp.ne.s32.totalorder %s46, %s48
      %p52 = scmp.eq.s32.totalorder %s12, 0
      %p53 = por %p51, %p52
      %p54 = scmp.ne.s32.totalorder %s46, %s48
      %p55 = scmp.eq.s32.totalorder %s17, 1
      %p56 = por %p54, %p55
      %p57 = scmp.ne.s32.totalorder %s48, %s49
      %p58 = scmp.eq.s32.totalorder %s17, 0
      %p59 = por %p57, %p58
      %p60 = scmp.ne.s32.totalorder %s48, %s49
      %p61 = scmp.eq.s32.totalorder %s18, 1
      %p62 = por %p60, %p61
      %p64 = scmp.ne.s32.totalorder %s49, %s63
      %p65 = scmp.eq.s32.totalorder %s18, 0
      %p66 = por %p64, %p65
      %s68 = sadd.s32 %s67, 1
      %p71 = scmp.eq.s32.totalorder %s12, 1
      %p72 = scmp.ne.s32.totalorder %s67, %s69
      %p73 = scmp.eq.s32.totalorder %s12, 0
      %p74 = por %p72, %p73
      %p75 = scmp.ne.s32.totalorder %s67, %s69
      %p76 = scmp.eq.s32.totalorder %s17, 1
      %p77 = por %p75, %p76
      %p78 = scmp.ne.s32.totalorder %s69, %s70
      %p79 = scmp.eq.s32.totalorder %s17, 0
      %p80 = por %p78, %p79
      %p81 = scmp.ne.s32.totalorder %s69, %s70
      %p82 = scmp.eq.s32.totalorder %s18, 1
      %p83 = por %p81, %p82
      %p85 = scmp.ne.s32.totalorder %s70, %s84
      %p86 = scmp.eq.s32.totalorder %s18, 0
      %p87 = por %p85, %p86
      %s88 = ssub.s32 %s12, %s19
      %p89 = scmp.eq.s32.totalorder %s88, 0
      %s91 = sadd.s32 %s90, 1
      %s92 = scalar_select %p89, %s90, %s91
      %p95 = pneg %p89
      %p96 = scmp.eq.s32.totalorder %s12, 1
      %p97 = por %p95, %p96
      %p98 = scmp.ne.s32.totalorder %s90, %s93
      %p99 = scmp.eq.s32.totalorder %s12, 0
      %p100 = por %p98, %p99
      %p101 = scmp.ne.s32.totalorder %s90, %s93
      %p102 = scmp.eq.s32.totalorder %s17, 1
      %p103 = por %p101, %p102
      %p104 = scmp.ne.s32.totalorder %s93, %s94
      %p105 = scmp.eq.s32.totalorder %s17, 0
      %p106 = por %p104, %p105
      %p107 = scmp.ne.s32.totalorder %s93, %s94
      %p108 = scmp.eq.s32.totalorder %s18, 1
      %p109 = por %p107, %p108
      %p111 = scmp.ne.s32.totalorder %s94, %s110
      %p112 = scmp.eq.s32.totalorder %s18, 0
      %p113 = por %p111, %p112
      %p114 = scmp.le.s32.totalorder 1, %s12
      %p115 = scmp.lt.s32.totalorder %s12, 3
      %p116 = pnand %p114, %p115
      %p117 = pneg %p116
      // Predicated region
      $region9: #{context_encoder_forward.1} parent=5 // pred_check
        _
      $region10: #{context_encoder_forward.1} parent=5 // pred_check_branch
        %119 = sbr.rel (%p116) target = $region12
      $region11: #{context_encoder_forward.1} parent=5 // pred_region
        %s120 = ssub.s32 %s12, 1
        // Predicated region
        $region13: #{context_encoder_forward.1} parent=11 // pred_check
          %p121 = pneg %p59
        $region14: #{context_encoder_forward.1} parent=11 // pred_check_branch
          %123 = sbr.rel (%p121) target = $region16
        $region15: #{context_encoder_forward.1} parent=11 // pred_region
          _
        $region16: #{context_encoder_forward.1} parent=11 // pred_fallthru
          _
        // Predicated region
        $region17: #{context_encoder_forward.1} parent=11 // pred_check
          %p124 = pneg %p80
        $region18: #{context_encoder_forward.1} parent=11 // pred_check_branch
          %126 = sbr.rel (%p124) target = $region20
        $region19: #{context_encoder_forward.1} parent=11 // pred_region
          _
        $region20: #{context_encoder_forward.1} parent=11 // pred_fallthru
          _
      $region12: #{context_encoder_forward.1} parent=5 // pred_fallthru
        _
      %p127 = scmp.lt.s32.totalorder %s12, 2
      // Predicated region
      $region21: #{context_encoder_forward.1} parent=5 // pred_check
        %p128 = pneg %p127
      $region22: #{context_encoder_forward.1} parent=5 // pred_check_branch
        %130 = sbr.rel (%p128) target = $region24
      $region23: #{context_encoder_forward.1} parent=5 // pred_region
        // Predicated region
        $region25: #{context_encoder_forward.1} parent=23 // pred_check
          %p131 = pneg %p32
        $region26: #{context_encoder_forward.1} parent=23 // pred_check_branch
          %133 = sbr.rel (%p131) target = $region28
        $region27: #{context_encoder_forward.1} parent=23 // pred_region
          %p134 = scmp.lt.s32.totalorder %s12, 1
          %s135 = scalar_select %p134, %s12, 1
          %s136 = smul.addr %s135, 4
          %s137 = smul.addr %s136, 8
          %s138 = scalar_lea.vmem %s0, %s137
        $region28: #{context_encoder_forward.1} parent=23 // pred_fallthru
          _
      $region24: #{context_encoder_forward.1} parent=5 // pred_fallthru
        _
      %p139 = scmp.le.s32.totalorder 1, %s12
      %p140 = scmp.lt.s32.totalorder %s12, 3
      %p141 = pnand %p139, %p140
      %p142 = pneg %p141
      // Predicated region
      $region29: #{context_encoder_forward.1} parent=5 // pred_check
        _
      $region30: #{context_encoder_forward.1} parent=5 // pred_check_branch
        %144 = sbr.rel (%p141) target = $region32
      $region31: #{context_encoder_forward.1} parent=5 // pred_region
        %s145 = ssub.s32 %s12, 1
        %p146 = scmp.lt.s32.totalorder %s17, 1
        %s147 = scalar_select %p146, %s17, 1
        %s148 = smul.addr %s147, 4
        %s149 = smul.addr %s148, 8
        %s150 = scalar_lea.vmem %s0, %s149
        %p151 = pneg %p38
        %p152 = pneg %p35
        %p153 = pneg %p59
        %p154 = pneg %p56
        %p155 = pneg %p80
        %p156 = pneg %p77
        %p157 = pneg %p106
        %p158 = pneg %p103
        %s159 = sand.u32 %s93, 1
        %s160 = scalar_lea.sflag [#allocation4], %s159
        %s161 = sand.u32 %s93, 1
        %s162 = scalar_lea.vmem [#allocation3], %s161
        %p163 = scmp.lt.s32.totalorder %s17, 1
        %s164 = scalar_select %p163, %s17, 1
        %s165 = smul.addr %s164, 4
        %s166 = smul.addr %s165, 8
        %s167 = scalar_lea.vmem %s0, %s166
        %v168 = vld [vmem:[%s167] sm:$0xff]
        %v169 = vld [vmem:[%s167 + $0x8] sm:$0xff]
        %v170 = vld [vmem:[%s167 + $0x10] sm:$0xff]
        %v171 = vld [vmem:[%s167 + $0x18] sm:$0xf]
        %v172 = vld [vmem:[%s1] sm:$0xff]
        %vm173 = vcmask 64512
        %v175 = vsel %vm173, %v168, 0
        %v178 = vsel %vm173, %v169, 0
        %v181 = vsel %vm173, %v170, 0
        %v184 = vsel %vm173, %v171, 0
        %186 = vmatprep.subr.mxu0 0.0
        %187 = vmatpush1.msra.mxu0 %v172
        %188 = vmatprep.subr.mxu0 0.0
        %189 = vmatpush1.msra.mxu0 0.0
        %190 = vmatprep.subr.mxu0 0.0
        %191 = vmatpush1.msra.mxu0 0.0
        %192 = vmatprep.subr.mxu0 0.0
        %193 = vmatpush1.msra.mxu0 0.0
        %194 = vmatprep.subr.mxu0 0.0
        %195 = vmatpush1.msra.mxu0 0.0
        %196 = vmatprep.subr.mxu0 0.0
        %197 = vmatpush1.msra.mxu0 0.0
        %198 = vmatprep.subr.mxu0 0.0
        %199 = vmatpush1.msra.mxu0 0.0
        %200 = vmatprep.subr.mxu0 0.0
        %201 = vmatpush1.msra.mxu0 0.0
        %202 = vmatprep.subr.mxu0 0.0
        %203 = vmatpush1.msra.mxu0 0.0
        %204 = vmatprep.subr.mxu0 0.0
        %205 = vmatpush1.msra.mxu0 0.0
        %206 = vmatprep.subr.mxu0 0.0
        %207 = vmatpush1.msra.mxu0 0.0
        %208 = vmatprep.subr.mxu0 0.0
        %209 = vmatpush1.msra.mxu0 0.0
        %210 = vmatprep.subr.mxu0 0.0
        %211 = vmatpush1.msra.mxu0 0.0
        %212 = vmatprep.subr.mxu0 0.0
        %213 = vmatpush1.msra.mxu0 0.0
        %214 = vmatprep.subr.mxu0 0.0
        %215 = vmatpush1.msra.mxu0 0.0
        %216 = vmatprep.subr.mxu0 0.0
        %217 = vmatpush1.msra.mxu0 0.0
        %218 = vmatprep.subr.mxu0 0.0
        %219 = vmatpush1.msra.mxu0 0.0
        %220 = vmatprep.subr.mxu0 0.0
        %221 = vmatpush1.msra.mxu0 0.0
        %222 = vmatprep.subr.mxu0 0.0
        %223 = vmatpush1.msra.mxu0 0.0
        %224 = vmatprep.subr.mxu0 0.0
        %225 = vmatpush1.msra.mxu0 0.0
        %226 = vmatprep.subr.mxu0 0.0
        %227 = vmatpush1.msra.mxu0 0.0
        %228 = vmatprep.subr.mxu0 0.0
        %229 = vmatpush1.msra.mxu0 0.0
        %230 = vmatprep.subr.mxu0 0.0
        %231 = vmatpush1.msra.mxu0 0.0
        %232 = vmatprep.subr.mxu0 0.0
        %233 = vmatpush1.msra.mxu0 0.0
        %234 = vmatprep.subr.mxu0 0.0
        %235 = vmatpush1.msra.mxu0 0.0
        %236 = vmatprep.subr.mxu0 0.0
        %237 = vmatpush1.msra.mxu0 0.0
        %238 = vmatprep.subr.mxu0 0.0
        %239 = vmatpush1.msra.mxu0 0.0
        %240 = vmatprep.subr.mxu0 0.0
        %241 = vmatpush1.msra.mxu0 0.0
        %242 = vmatprep.subr.mxu0 0.0
        %243 = vmatpush1.msra.mxu0 0.0
        %244 = vmatprep.subr.mxu0 0.0
        %245 = vmatpush1.msra.mxu0 0.0
        %246 = vmatprep.subr.mxu0 0.0
        %247 = vmatpush1.msra.mxu0 0.0
        %248 = vmatprep.subr.mxu0 0.0
        %249 = vmatpush1.msra.mxu0 0.0
        %250 = vmatprep.mubr.f32.mxu0 0.0
        %251 = vmatmul.mubr.f32.gmra.mrb[0].mxu0 %v175
        %v252 = vpop.f32.mrb[0].mxu0
        %v253 = vadd.f32 0.0, %v252
        %v254 = vpop.f32.mrb[0].mxu0
        %255 = vmatprep.mubr.f32.mxu0 0.0
        %256 = vmatmul.mubr.f32.gmra.mrb[0].mxu0 %v178
        %v257 = vpop.f32.mrb[0].mxu0
        %v258 = vadd.f32 0.0, %v257
        %v259 = vpop.f32.mrb[0].mxu0
        %260 = vmatprep.mubr.f32.mxu0 0.0
        %261 = vmatmul.mubr.f32.gmra.mrb[0].mxu0 %v181
        %v262 = vpop.f32.mrb[0].mxu0
        %v263 = vadd.f32 0.0, %v262
        %v264 = vpop.f32.mrb[0].mxu0
        %265 = vmatprep.mubr.f32.mxu0 0.0
        %266 = vmatmul.mubr.f32.gmra.mrb[0].mxu0 %v184
        %v267 = vpop.f32.mrb[0].mxu0
        %v268 = vadd.f32 0.0, %v267
        %v269 = vpop.f32.mrb[0].mxu0
        %270 = vdwg.mxu0
        %vm271 = vcmask 130048
        %272 = vst.msk [vmem:[#allocation2] sm:$0xff] %vm271, %v253
        %273 = vst.msk [vmem:[#allocation2 + $0x8] sm:$0xff] %vm271, %v258
        %274 = vst.msk [vmem:[#allocation2 + $0x10] sm:$0xff] %vm271, %v263
        %vm275 = vcmask 125952
        %276 = vst.msk [vmem:[#allocation2 + $0x18] sm:$0xf] %vm275, %v268
        %s277 = scalar_lea.vmem %s1, 32
        %v278 = vld [vmem:[%s277] sm:$0xff]
        %279 = vmatprep.subr.mxu0 0.0
        %280 = vmatpush1.msra.mxu0 %v278
        %281 = vmatprep.subr.mxu0 0.0
        %282 = vmatpush1.msra.mxu0 0.0
        %283 = vmatprep.subr.mxu0 0.0
        %284 = vmatpush1.msra.mxu0 0.0
        %285 = vmatprep.subr.mxu0 0.0
        %286 = vmatpush1.msra.mxu0 0.0
        %287 = vmatprep.subr.mxu0 0.0
        %288 = vmatpush1.msra.mxu0 0.0
        %289 = vmatprep.subr.mxu0 0.0
        %290 = vmatpush1.msra.mxu0 0.0
        %291 = vmatprep.subr.mxu0 0.0
        %292 = vmatpush1.msra.mxu0 0.0
        %293 = vmatprep.subr.mxu0 0.0
        %294 = vmatpush1.msra.mxu0 0.0
        %295 = vmatprep.subr.mxu0 0.0
        %296 = vmatpush1.msra.mxu0 0.0
        %297 = vmatprep.subr.mxu0 0.0
        %298 = vmatpush1.msra.mxu0 0.0
        %299 = vmatprep.subr.mxu0 0.0
        %300 = vmatpush1.msra.mxu0 0.0
        %301 = vmatprep.subr.mxu0 0.0
        %302 = vmatpush1.msra.mxu0 0.0
        %303 = vmatprep.subr.mxu0 0.0
        %304 = vmatpush1.msra.mxu0 0.0
        %305 = vmatprep.subr.mxu0 0.0
        %306 = vmatpush1.msra.mxu0 0.0
        %307 = vmatprep.subr.mxu0 0.0
        %308 = vmatpush1.msra.mxu0 0.0
        %309 = vmatprep.subr.mxu0 0.0
        %310 = vmatpush1.msra.mxu0 0.0
        %311 = vmatprep.subr.mxu0 0.0
        %312 = vmatpush1.msra.mxu0 0.0
        %313 = vmatprep.subr.mxu0 0.0
        %314 = vmatpush1.msra.mxu0 0.0
        %315 = vmatprep.subr.mxu0 0.0
        %316 = vmatpush1.msra.mxu0 0.0
        %317 = vmatprep.subr.mxu0 0.0
        %318 = vmatpush1.msra.mxu0 0.0
        %319 = vmatprep.subr.mxu0 0.0
        %320 = vmatpush1.msra.mxu0 0.0
        %321 = vmatprep.subr.mxu0 0.0
        %322 = vmatpush1.msra.mxu0 0.0
        %323 = vmatprep.subr.mxu0 0.0
        %324 = vmatpush1.msra.mxu0 0.0
        %325 = vmatprep.subr.mxu0 0.0
        %326 = vmatpush1.msra.mxu0 0.0
        %327 = vmatprep.subr.mxu0 0.0
        %328 = vmatpush1.msra.mxu0 0.0
        %329 = vmatprep.subr.mxu0 0.0
        %330 = vmatpush1.msra.mxu0 0.0
        %331 = vmatprep.subr.mxu0 0.0
        %332 = vmatpush1.msra.mxu0 0.0
        %333 = vmatprep.subr.mxu0 0.0
        %334 = vmatpush1.msra.mxu0 0.0
        %335 = vmatprep.subr.mxu0 0.0
        %336 = vmatpush1.msra.mxu0 0.0
        %337 = vmatprep.subr.mxu0 0.0
        %338 = vmatpush1.msra.mxu0 0.0
        %339 = vmatprep.subr.mxu0 0.0
        %340 = vmatpush1.msra.mxu0 0.0
        %341 = vmatprep.subr.mxu0 0.0
        %342 = vmatpush1.msra.mxu0 0.0
        %343 = vmatprep.mubr.f32.mxu0 0.0
        %344 = vmatmul.mubr.f32.gmra.mrb[0].mxu0 %v175
        %v345 = vpop.f32.mrb[0].mxu0
        %v346 = vadd.f32 0.0, %v345
        %v347 = vpop.f32.mrb[0].mxu0
        %348 = vmatprep.mubr.f32.mxu0 0.0
        %349 = vmatmul.mubr.f32.gmra.mrb[0].mxu0 %v178
        %v350 = vpop.f32.mrb[0].mxu0
        %v351 = vadd.f32 0.0, %v350
        %v352 = vpop.f32.mrb[0].mxu0
        %353 = vmatprep.mubr.f32.mxu0 0.0
        %354 = vmatmul.mubr.f32.gmra.mrb[0].mxu0 %v181
        %v355 = vpop.f32.mrb[0].mxu0
        %v356 = vadd.f32 0.0, %v355
        %v357 = vpop.f32.mrb[0].mxu0
        %358 = vmatprep.mubr.f32.mxu0 0.0
        %359 = vmatmul.mubr.f32.gmra.mrb[0].mxu0 %v184
        %v360 = vpop.f32.mrb[0].mxu0
        %v361 = vadd.f32 0.0, %v360
        %v362 = vpop.f32.mrb[0].mxu0
        %363 = vdwg.mxu0
        %s364 = scalar_lea.vmem [#allocation2], 32
        %365 = vst.msk [vmem:[%s364] sm:$0xff] %vm271, %v346
        %366 = vst.msk [vmem:[%s364 + $0x8] sm:$0xff] %vm271, %v351
        %367 = vst.msk [vmem:[%s364 + $0x10] sm:$0xff] %vm271, %v356
        %368 = vst.msk [vmem:[%s364 + $0x18] sm:$0xf] %vm275, %v361
        %s369 = scalar_lea.vmem %s1, 64
        %v370 = vld [vmem:[%s369] sm:$0xff]
        %371 = vmatprep.subr.mxu0 0.0
        %372 = vmatpush1.msra.mxu0 %v370
        %373 = vmatprep.subr.mxu0 0.0
        %374 = vmatpush1.msra.mxu0 0.0
        %375 = vmatprep.subr.mxu0 0.0
        %376 = vmatpush1.msra.mxu0 0.0
        %377 = vmatprep.subr.mxu0 0.0
        %378 = vmatpush1.msra.mxu0 0.0
        %379 = vmatprep.subr.mxu0 0.0
        %380 = vmatpush1.msra.mxu0 0.0
        %381 = vmatprep.subr.mxu0 0.0
        %382 = vmatpush1.msra.mxu0 0.0
        %383 = vmatprep.subr.mxu0 0.0
        %384 = vmatpush1.msra.mxu0 0.0
        %385 = vmatprep.subr.mxu0 0.0
        %386 = vmatpush1.msra.mxu0 0.0
        %387 = vmatprep.subr.mxu0 0.0
        %388 = vmatpush1.msra.mxu0 0.0
        %389 = vmatprep.subr.mxu0 0.0
        %390 = vmatpush1.msra.mxu0 0.0
        %391 = vmatprep.subr.mxu0 0.0
        %392 = vmatpush1.msra.mxu0 0.0
        %393 = vmatprep.subr.mxu0 0.0
        %394 = vmatpush1.msra.mxu0 0.0
        %395 = vmatprep.subr.mxu0 0.0
        %396 = vmatpush1.msra.mxu0 0.0
        %397 = vmatprep.subr.mxu0 0.0
        %398 = vmatpush1.msra.mxu0 0.0
        %399 = vmatprep.subr.mxu0 0.0
        %400 = vmatpush1.msra.mxu0 0.0
        %401 = vmatprep.subr.mxu0 0.0
        %402 = vmatpush1.msra.mxu0 0.0
        %403 = vmatprep.subr.mxu0 0.0
        %404 = vmatpush1.msra.mxu0 0.0
        %405 = vmatprep.subr.mxu0 0.0
        %406 = vmatpush1.msra.mxu0 0.0
        %407 = vmatprep.subr.mxu0 0.0
        %408 = vmatpush1.msra.mxu0 0.0
        %409 = vmatprep.subr.mxu0 0.0
        %410 = vmatpush1.msra.mxu0 0.0
        %411 = vmatprep.subr.mxu0 0.0
        %412 = vmatpush1.msra.mxu0 0.0
        %413 = vmatprep.subr.mxu0 0.0
        %414 = vmatpush1.msra.mxu0 0.0
        %415 = vmatprep.subr.mxu0 0.0
        %416 = vmatpush1.msra.mxu0 0.0
        %417 = vmatprep.subr.mxu0 0.0
        %418 = vmatpush1.msra.mxu0 0.0
        %419 = vmatprep.subr.mxu0 0.0
        %420 = vmatpush1.msra.mxu0 0.0
        %421 = vmatprep.subr.mxu0 0.0
        %422 = vmatpush1.msra.mxu0 0.0
        %423 = vmatprep.subr.mxu0 0.0
        %424 = vmatpush1.msra.mxu0 0.0
        %425 = vmatprep.subr.mxu0 0.0
        %426 = vmatpush1.msra.mxu0 0.0
        %427 = vmatprep.subr.mxu0 0.0
        %428 = vmatpush1.msra.mxu0 0.0
        %429 = vmatprep.subr.mxu0 0.0
        %430 = vmatpush1.msra.mxu0 0.0
        %431 = vmatprep.subr.mxu0 0.0
        %432 = vmatpush1.msra.mxu0 0.0
        %433 = vmatprep.subr.mxu0 0.0
        %434 = vmatpush1.msra.mxu0 0.0
        %435 = vmatprep.mubr.f32.mxu0 0.0
        %436 = vmatmul.mubr.f32.gmra.mrb[0].mxu0 %v175
        %v437 = vpop.f32.mrb[0].mxu0
        %v438 = vadd.f32 0.0, %v437
        %v439 = vpop.f32.mrb[0].mxu0
        %440 = vmatprep.mubr.f32.mxu0 0.0
        %441 = vmatmul.mubr.f32.gmra.mrb[0].mxu0 %v178
        %v442 = vpop.f32.mrb[0].mxu0
        %v443 = vadd.f32 0.0, %v442
        %v444 = vpop.f32.mrb[0].mxu0
        %445 = vmatprep.mubr.f32.mxu0 0.0
        %446 = vmatmul.mubr.f32.gmra.mrb[0].mxu0 %v181
        %v447 = vpop.f32.mrb[0].mxu0
        %v448 = vadd.f32 0.0, %v447
        %v449 = vpop.f32.mrb[0].mxu0
        %450 = vmatprep.mubr.f32.mxu0 0.0
        %451 = vmatmul.mubr.f32.gmra.mrb[0].mxu0 %v184
        %v452 = vpop.f32.mrb[0].mxu0
        %v453 = vadd.f32 0.0, %v452
        %v454 = vpop.f32.mrb[0].mxu0
        %455 = vdwg.mxu0
        %s456 = scalar_lea.vmem [#allocation2], 64
        %457 = vst.msk [vmem:[%s456] sm:$0xff] %vm271, %v438
        %458 = vst.msk [vmem:[%s456 + $0x8] sm:$0xff] %vm271, %v443
        %459 = vst.msk [vmem:[%s456 + $0x10] sm:$0xff] %vm271, %v448
        %460 = vst.msk [vmem:[%s456 + $0x18] sm:$0xf] %vm275, %v453
        %v461 = vld [vmem:[%s1 + $0x8] sm:$0xff]
        %v462 = vld [vmem:[%s1 + $0x10] sm:$0xff]
        %v463 = vld [vmem:[%s277 + $0x8] sm:$0xff]
        %v464 = vld [vmem:[%s277 + $0x10] sm:$0xff]
        %v465 = vld [vmem:[%s369 + $0x8] sm:$0xff]
        %v466 = vld [vmem:[%s369 + $0x10] sm:$0xff]
        %v467 = vld [vmem:[%s369 + $0x18] sm:$0x1]
        %v468 = vld [vmem:[#allocation2] sm:$0xf]
        %s469 = sadd.s32 0, 32
        %s470 = scalar_lea.vmem [#allocation2], %s469
        %v471 = vld [vmem:[%s470] sm:$0xf]
        %s472 = sadd.s32 0, 64
        %s473 = scalar_lea.vmem [#allocation2], %s472
        %v474 = vld [vmem:[%s473] sm:$0xf]
        %v476 = vsel %vm271, 0.0, 0
        %478 = vmatprep.subr.mxu0 0.0
        %479 = vmatpush1.msra.mxu0 %v461
        %480 = vmatprep.subr.mxu0 0.0
        %481 = vmatpush1.msra.mxu0 %v462
        %482 = vmatprep.subr.mxu0 0.0
        %483 = vmatpush1.msra.mxu0 0.0
        %484 = vmatprep.subr.mxu0 0.0
        %485 = vmatpush1.msra.mxu0 0.0
        %486 = vmatprep.subr.mxu0 0.0
        %487 = vmatpush1.msra.mxu0 0.0
        %488 = vmatprep.subr.mxu0 0.0
        %489 = vmatpush1.msra.mxu0 0.0
        %490 = vmatprep.subr.mxu0 0.0
        %491 = vmatpush1.msra.mxu0 0.0
        %492 = vmatprep.subr.mxu0 0.0
        %493 = vmatpush1.msra.mxu0 0.0
        %494 = vmatprep.subr.mxu0 0.0
        %495 = vmatpush1.msra.mxu0 0.0
        %496 = vmatprep.subr.mxu0 0.0
        %497 = vmatpush1.msra.mxu0 0.0
        %498 = vmatprep.subr.mxu0 0.0
        %499 = vmatpush1.msra.mxu0 0.0
        %500 = vmatprep.subr.mxu0 0.0
        %501 = vmatpush1.msra.mxu0 0.0
        %502 = vmatprep.subr.mxu0 0.0
        %503 = vmatpush1.msra.mxu0 0.0
        %504 = vmatprep.subr.mxu0 0.0
        %505 = vmatpush1.msra.mxu0 0.0
        %506 = vmatprep.subr.mxu0 0.0
        %507 = vmatpush1.msra.mxu0 0.0
        %508 = vmatprep.subr.mxu0 0.0
        %509 = vmatpush1.msra.mxu0 0.0
        %510 = vmatprep.subr.mxu0 0.0
        %511 = vmatpush1.msra.mxu0 0.0
        %512 = vmatprep.subr.mxu0 0.0
        %513 = vmatpush1.msra.mxu0 0.0
        %514 = vmatprep.subr.mxu0 0.0
        %515 = vmatpush1.msra.mxu0 0.0
        %516 = vmatprep.subr.mxu0 0.0
        %517 = vmatpush1.msra.mxu0 0.0
        %518 = vmatprep.subr.mxu0 0.0
        %519 = vmatpush1.msra.mxu0 0.0
        %520 = vmatprep.subr.mxu0 0.0
        %521 = vmatpush1.msra.mxu0 0.0
        %522 = vmatprep.subr.mxu0 0.0
        %523 = vmatpush1.msra.mxu0 0.0
        %524 = vmatprep.subr.mxu0 0.0
        %525 = vmatpush1.msra.mxu0 0.0
        %526 = vmatprep.subr.mxu0 0.0
        %527 = vmatpush1.msra.mxu0 0.0
        %528 = vmatprep.subr.mxu0 0.0
        %529 = vmatpush1.msra.mxu0 0.0
        %530 = vmatprep.subr.mxu0 0.0
        %531 = vmatpush1.msra.mxu0 0.0
        %532 = vmatprep.subr.mxu0 0.0
        %533 = vmatpush1.msra.mxu0 0.0
        %534 = vmatprep.subr.mxu0 0.0
        %535 = vmatpush1.msra.mxu0 0.0
        %536 = vmatprep.subr.mxu0 0.0
        %537 = vmatpush1.msra.mxu0 0.0
        %538 = vmatprep.subr.mxu0 0.0
        %539 = vmatpush1.msra.mxu0 0.0
        %540 = vmatprep.subr.mxu0 0.0
        %541 = vmatpush1.msra.mxu0 0.0
        %542 = vmatprep.mubr.f32.mxu0 0.0
        %543 = vmatmul.mubr.f32.gmra.mrb[0].mxu0 %v476
        %v544 = vpop.f32.mrb[0].mxu0
        %v545 = vadd.f32 0.0, %v544
        %v546 = vpop.f32.mrb[0].mxu0
        %547 = vdwg.mxu0
        %v548 = vadd.f32 %v468, %v545
        %v549 = vxor.u32 %v548, 2147483648
        %v550 = vmul.f32 %v549, 1.442695
        %v551 = vpow.pop %v550
        %v552 = vadd.f32 %v551, 1.0
        %v553 = vrcp.pop %v552
        %v554 = vmul.f32 1.0, %v553
        %555 = vmatprep.subr.mxu0 0.0
        %556 = vmatpush1.msra.mxu0 %v463
        %557 = vmatprep.subr.mxu0 0.0
        %558 = vmatpush1.msra.mxu0 %v464
        %559 = vmatprep.subr.mxu0 0.0
        %560 = vmatpush1.msra.mxu0 0.0
        %561 = vmatprep.subr.mxu0 0.0
        %562 = vmatpush1.msra.mxu0 0.0
        %563 = vmatprep.subr.mxu0 0.0
        %564 = vmatpush1.msra.mxu0 0.0
        %565 = vmatprep.subr.mxu0 0.0
        %566 = vmatpush1.msra.mxu0 0.0
        %567 = vmatprep.subr.mxu0 0.0
        %568 = vmatpush1.msra.mxu0 0.0
        %569 = vmatprep.subr.mxu0 0.0
        %570 = vmatpush1.msra.mxu0 0.0
        %571 = vmatprep.subr.mxu0 0.0
        %572 = vmatpush1.msra.mxu0 0.0
        %573 = vmatprep.subr.mxu0 0.0
        %574 = vmatpush1.msra.mxu0 0.0
        %575 = vmatprep.subr.mxu0 0.0
        %576 = vmatpush1.msra.mxu0 0.0
        %577 = vmatprep.subr.mxu0 0.0
        %578 = vmatpush1.msra.mxu0 0.0
        %579 = vmatprep.subr.mxu0 0.0
        %580 = vmatpush1.msra.mxu0 0.0
        %581 = vmatprep.subr.mxu0 0.0
        %582 = vmatpush1.msra.mxu0 0.0
        %583 = vmatprep.subr.mxu0 0.0
        %584 = vmatpush1.msra.mxu0 0.0
        %585 = vmatprep.subr.mxu0 0.0
        %586 = vmatpush1.msra.mxu0 0.0
        %587 = vmatprep.subr.mxu0 0.0
        %588 = vmatpush1.msra.mxu0 0.0
        %589 = vmatprep.subr.mxu0 0.0
        %590 = vmatpush1.msra.mxu0 0.0
        %591 = vmatprep.subr.mxu0 0.0
        %592 = vmatpush1.msra.mxu0 0.0
        %593 = vmatprep.subr.mxu0 0.0
        %594 = vmatpush1.msra.mxu0 0.0
        %595 = vmatprep.subr.mxu0 0.0
        %596 = vmatpush1.msra.mxu0 0.0
        %597 = vmatprep.subr.mxu0 0.0
        %598 = vmatpush1.msra.mxu0 0.0
        %599 = vmatprep.subr.mxu0 0.0
        %600 = vmatpush1.msra.mxu0 0.0
        %601 = vmatprep.subr.mxu0 0.0
        %602 = vmatpush1.msra.mxu0 0.0
        %603 = vmatprep.subr.mxu0 0.0
        %604 = vmatpush1.msra.mxu0 0.0
        %605 = vmatprep.subr.mxu0 0.0
        %606 = vmatpush1.msra.mxu0 0.0
        %607 = vmatprep.subr.mxu0 0.0
        %608 = vmatpush1.msra.mxu0 0.0
        %609 = vmatprep.subr.mxu0 0.0
        %610 = vmatpush1.msra.mxu0 0.0
        %611 = vmatprep.subr.mxu0 0.0
        %612 = vmatpush1.msra.mxu0 0.0
        %613 = vmatprep.subr.mxu0 0.0
        %614 = vmatpush1.msra.mxu0 0.0
        %615 = vmatprep.subr.mxu0 0.0
        %616 = vmatpush1.msra.mxu0 0.0
        %617 = vmatprep.subr.mxu0 0.0
        %618 = vmatpush1.msra.mxu0 0.0
        %619 = vmatprep.mubr.f32.mxu0 0.0
        %620 = vmatmul.mubr.f32.gmra.mrb[0].mxu0 %v476
        %v621 = vpop.f32.mrb[0].mxu0
        %v622 = vadd.f32 0.0, %v621
        %v623 = vpop.f32.mrb[0].mxu0
        %624 = vdwg.mxu0
        %v625 = vadd.f32 %v471, %v622
        %v626 = vxor.u32 %v625, 2147483648
        %v627 = vmul.f32 %v626, 1.442695
        %v628 = vpow.pop %v627
        %v629 = vadd.f32 %v628, 1.0
        %v630 = vrcp.pop %v629
        %v631 = vmul.f32 1.0, %v630
        %v632 = vlaneseq
        %v633 = vshrl.u32 %v632, 7
        %v634 = vsub.s32 0, %v633
        %v635 = vrot.slane %v467, %v634
        %636 = vmatprep.subr.mxu0 0.0
        %637 = vmatpush1.msra.mxu0 %v465
        %638 = vmatprep.subr.mxu0 0.0
        %639 = vmatpush1.msra.mxu0 %v466
        %640 = vmatprep.subr.mxu0 0.0
        %641 = vmatpush1.msra.mxu0 0.0
        %642 = vmatprep.subr.mxu0 0.0
        %643 = vmatpush1.msra.mxu0 0.0
        %644 = vmatprep.subr.mxu0 0.0
        %645 = vmatpush1.msra.mxu0 0.0
        %646 = vmatprep.subr.mxu0 0.0
        %647 = vmatpush1.msra.mxu0 0.0
        %648 = vmatprep.subr.mxu0 0.0
        %649 = vmatpush1.msra.mxu0 0.0
        %650 = vmatprep.subr.mxu0 0.0
        %651 = vmatpush1.msra.mxu0 0.0
        %652 = vmatprep.subr.mxu0 0.0
        %653 = vmatpush1.msra.mxu0 0.0
        %654 = vmatprep.subr.mxu0 0.0
        %655 = vmatpush1.msra.mxu0 0.0
        %656 = vmatprep.subr.mxu0 0.0
        %657 = vmatpush1.msra.mxu0 0.0
        %658 = vmatprep.subr.mxu0 0.0
        %659 = vmatpush1.msra.mxu0 0.0
        %660 = vmatprep.subr.mxu0 0.0
        %661 = vmatpush1.msra.mxu0 0.0
        %662 = vmatprep.subr.mxu0 0.0
        %663 = vmatpush1.msra.mxu0 0.0
        %664 = vmatprep.subr.mxu0 0.0
        %665 = vmatpush1.msra.mxu0 0.0
        %666 = vmatprep.subr.mxu0 0.0
        %667 = vmatpush1.msra.mxu0 0.0
        %668 = vmatprep.subr.mxu0 0.0
        %669 = vmatpush1.msra.mxu0 0.0
        %670 = vmatprep.subr.mxu0 0.0
        %671 = vmatpush1.msra.mxu0 0.0
        %672 = vmatprep.subr.mxu0 0.0
        %673 = vmatpush1.msra.mxu0 0.0
        %674 = vmatprep.subr.mxu0 0.0
        %675 = vmatpush1.msra.mxu0 0.0
        %676 = vmatprep.subr.mxu0 0.0
        %677 = vmatpush1.msra.mxu0 0.0
        %678 = vmatprep.subr.mxu0 0.0
        %679 = vmatpush1.msra.mxu0 0.0
        %680 = vmatprep.subr.mxu0 0.0
        %681 = vmatpush1.msra.mxu0 0.0
        %682 = vmatprep.subr.mxu0 0.0
        %683 = vmatpush1.msra.mxu0 0.0
        %684 = vmatprep.subr.mxu0 0.0
        %685 = vmatpush1.msra.mxu0 0.0
        %686 = vmatprep.subr.mxu0 0.0
        %687 = vmatpush1.msra.mxu0 0.0
        %688 = vmatprep.subr.mxu0 0.0
        %689 = vmatpush1.msra.mxu0 0.0
        %690 = vmatprep.subr.mxu0 0.0
        %691 = vmatpush1.msra.mxu0 0.0
        %692 = vmatprep.subr.mxu0 0.0
        %693 = vmatpush1.msra.mxu0 0.0
        %694 = vmatprep.subr.mxu0 0.0
        %695 = vmatpush1.msra.mxu0 0.0
        %696 = vmatprep.subr.mxu0 0.0
        %697 = vmatpush1.msra.mxu0 0.0
        %698 = vmatprep.subr.mxu0 0.0
        %699 = vmatpush1.msra.mxu0 0.0
        %700 = vmatprep.mubr.f32.mxu0 0.0
        %701 = vmatmul.mubr.f32.gmra.mrb[0].mxu0 %v476
        %v702 = vpop.f32.mrb[0].mxu0
        %v703 = vadd.f32 %v635, %v702
        %v704 = vpop.f32.mrb[0].mxu0
        %705 = vdwg.mxu0
        %v706 = vmul.f32 %v554, %v703
        %v707 = vadd.f32 %v474, %v706
        %v708 = vtanh.pop %v707
        %v709 = vsub.f32 1.0, %v631
        %v710 = vmul.f32 %v709, %v708
        %v711 = vmul.f32 %v631, 0.0
        %v712 = vadd.f32 %v710, %v711
        %s713 = scalar_lea.vmem [#allocation2], 4
        %v714 = vld [vmem:[%s713] sm:$0xf]
        %s715 = sadd.s32 4, 32
        %s716 = scalar_lea.vmem [#allocation2], %s715
        %v717 = vld [vmem:[%s716] sm:$0xf]
        %s718 = sadd.s32 4, 64
        %s719 = scalar_lea.vmem [#allocation2], %s718
        %v720 = vld [vmem:[%s719] sm:$0xf]
        %v722 = vsel %vm271, %v712, 0
        %724 = vmatprep.subr.mxu0 0.0
        %725 = vmatpush1.msra.mxu0 %v461
        %726 = vmatprep.subr.mxu0 0.0
        %727 = vmatpush1.msra.mxu0 %v462
        %728 = vmatprep.subr.mxu0 0.0
        %729 = vmatpush1.msra.mxu0 0.0
        %730 = vmatprep.subr.mxu0 0.0
        %731 = vmatpush1.msra.mxu0 0.0
        %732 = vmatprep.subr.mxu0 0.0
        %733 = vmatpush1.msra.mxu0 0.0
        %734 = vmatprep.subr.mxu0 0.0
        %735 = vmatpush1.msra.mxu0 0.0
        %736 = vmatprep.subr.mxu0 0.0
        %737 = vmatpush1.msra.mxu0 0.0
        %738 = vmatprep.subr.mxu0 0.0
        %739 = vmatpush1.msra.mxu0 0.0
        %740 = vmatprep.subr.mxu0 0.0
        %741 = vmatpush1.msra.mxu0 0.0
        %742 = vmatprep.subr.mxu0 0.0
        %743 = vmatpush1.msra.mxu0 0.0
        %744 = vmatprep.subr.mxu0 0.0
        %745 = vmatpush1.msra.mxu0 0.0
        %746 = vmatprep.subr.mxu0 0.0
        %747 = vmatpush1.msra.mxu0 0.0
        %748 = vmatprep.subr.mxu0 0.0
        %749 = vmatpush1.msra.mxu0 0.0
        %750 = vmatprep.subr.mxu0 0.0
        %751 = vmatpush1.msra.mxu0 0.0
        %752 = vmatprep.subr.mxu0 0.0
        %753 = vmatpush1.msra.mxu0 0.0
        %754 = vmatprep.subr.mxu0 0.0
        %755 = vmatpush1.msra.mxu0 0.0
        %756 = vmatprep.subr.mxu0 0.0
        %757 = vmatpush1.msra.mxu0 0.0
        %758 = vmatprep.subr.mxu0 0.0
        %759 = vmatpush1.msra.mxu0 0.0
        %760 = vmatprep.subr.mxu0 0.0
        %761 = vmatpush1.msra.mxu0 0.0
        %762 = vmatprep.subr.mxu0 0.0
        %763 = vmatpush1.msra.mxu0 0.0
        %764 = vmatprep.subr.mxu0 0.0
        %765 = vmatpush1.msra.mxu0 0.0
        %766 = vmatprep.subr.mxu0 0.0
        %767 = vmatpush1.msra.mxu0 0.0
        %768 = vmatprep.subr.mxu0 0.0
        %769 = vmatpush1.msra.mxu0 0.0
        %770 = vmatprep.subr.mxu0 0.0
        %771 = vmatpush1.msra.mxu0 0.0
        %772 = vmatprep.subr.mxu0 0.0
        %773 = vmatpush1.msra.mxu0 0.0
        %774 = vmatprep.subr.mxu0 0.0
        %775 = vmatpush1.msra.mxu0 0.0
        %776 = vmatprep.subr.mxu0 0.0
        %777 = vmatpush1.msra.mxu0 0.0
        %778 = vmatprep.subr.mxu0 0.0
        %779 = vmatpush1.msra.mxu0 0.0
        %780 = vmatprep.subr.mxu0 0.0
        %781 = vmatpush1.msra.mxu0 0.0
        %782 = vmatprep.subr.mxu0 0.0
        %783 = vmatpush1.msra.mxu0 0.0
        %784 = vmatprep.subr.mxu0 0.0
        %785 = vmatpush1.msra.mxu0 0.0
        %786 = vmatprep.subr.mxu0 0.0
        %787 = vmatpush1.msra.mxu0 0.0
        %788 = vmatprep.mubr.f32.mxu0 0.0
        %789 = vmatmul.mubr.f32.gmra.mrb[0].mxu0 %v722
        %v790 = vpop.f32.mrb[0].mxu0
        %v791 = vadd.f32 0.0, %v790
        %v792 = vpop.f32.mrb[0].mxu0
        %793 = vdwg.mxu0
        %v794 = vadd.f32 %v714, %v791
        %v795 = vxor.u32 %v794, 2147483648
        %v796 = vmul.f32 %v795, 1.442695
        %v797 = vpow.pop %v796
        %v798 = vadd.f32 %v797, 1.0
        %v799 = vrcp.pop %v798
        %v800 = vmul.f32 1.0, %v799
        %801 = vmatprep.subr.mxu0 0.0
        %802 = vmatpush1.msra.mxu0 %v463
        %803 = vmatprep.subr.mxu0 0.0
        %804 = vmatpush1.msra.mxu0 %v464
        %805 = vmatprep.subr.mxu0 0.0
        %806 = vmatpush1.msra.mxu0 0.0
        %807 = vmatprep.subr.mxu0 0.0
        %808 = vmatpush1.msra.mxu0 0.0
        %809 = vmatprep.subr.mxu0 0.0
        %810 = vmatpush1.msra.mxu0 0.0
        %811 = vmatprep.subr.mxu0 0.0
        %812 = vmatpush1.msra.mxu0 0.0
        %813 = vmatprep.subr.mxu0 0.0
        %814 = vmatpush1.msra.mxu0 0.0
        %815 = vmatprep.subr.mxu0 0.0
        %816 = vmatpush1.msra.mxu0 0.0
        %817 = vmatprep.subr.mxu0 0.0
        %818 = vmatpush1.msra.mxu0 0.0
        %819 = vmatprep.subr.mxu0 0.0
        %820 = vmatpush1.msra.mxu0 0.0
        %821 = vmatprep.subr.mxu0 0.0
        %822 = vmatpush1.msra.mxu0 0.0
        %823 = vmatprep.subr.mxu0 0.0
        %824 = vmatpush1.msra.mxu0 0.0
        %825 = vmatprep.subr.mxu0 0.0
        %826 = vmatpush1.msra.mxu0 0.0
        %827 = vmatprep.subr.mxu0 0.0
        %828 = vmatpush1.msra.mxu0 0.0
        %829 = vmatprep.subr.mxu0 0.0
        %830 = vmatpush1.msra.mxu0 0.0
        %831 = vmatprep.subr.mxu0 0.0
        %832 = vmatpush1.msra.mxu0 0.0
        %833 = vmatprep.subr.mxu0 0.0
        %834 = vmatpush1.msra.mxu0 0.0
        %835 = vmatprep.subr.mxu0 0.0
        %836 = vmatpush1.msra.mxu0 0.0
        %837 = vmatprep.subr.mxu0 0.0
        %838 = vmatpush1.msra.mxu0 0.0
        %839 = vmatprep.subr.mxu0 0.0
        %840 = vmatpush1.msra.mxu0 0.0
        %841 = vmatprep.subr.mxu0 0.0
        %842 = vmatpush1.msra.mxu0 0.0
        %843 = vmatprep.subr.mxu0 0.0
        %844 = vmatpush1.msra.mxu0 0.0
        %845 = vmatprep.subr.mxu0 0.0
        %846 = vmatpush1.msra.mxu0 0.0
        %847 = vmatprep.subr.mxu0 0.0
        %848 = vmatpush1.msra.mxu0 0.0
        %849 = vmatprep.subr.mxu0 0.0
        %850 = vmatpush1.msra.mxu0 0.0
        %851 = vmatprep.subr.mxu0 0.0
        %852 = vmatpush1.msra.mxu0 0.0
        %853 = vmatprep.subr.mxu0 0.0
        %854 = vmatpush1.msra.mxu0 0.0
        %855 = vmatprep.subr.mxu0 0.0
        %856 = vmatpush1.msra.mxu0 0.0
        %857 = vmatprep.subr.mxu0 0.0
        %858 = vmatpush1.msra.mxu0 0.0
        %859 = vmatprep.subr.mxu0 0.0
        %860 = vmatpush1.msra.mxu0 0.0
        %861 = vmatprep.subr.mxu0 0.0
        %862 = vmatpush1.msra.mxu0 0.0
        %863 = vmatprep.subr.mxu0 0.0
        %864 = vmatpush1.msra.mxu0 0.0
        %865 = vmatprep.mubr.f32.mxu0 0.0
        %866 = vmatmul.mubr.f32.gmra.mrb[0].mxu0 %v722
        %v867 = vpop.f32.mrb[0].mxu0
        %v868 = vadd.f32 0.0, %v867
        %v869 = vpop.f32.mrb[0].mxu0
        %870 = vdwg.mxu0
        %v871 = vadd.f32 %v717, %v868
        %v872 = vxor.u32 %v871, 2147483648
        %v873 = vmul.f32 %v872, 1.442695
        %v874 = vpow.pop %v873
        %v875 = vadd.f32 %v874, 1.0
        %v876 = vrcp.pop %v875
        %v877 = vmul.f32 1.0, %v876
        %878 = vmatprep.subr.mxu0 0.0
        %879 = vmatpush1.msra.mxu0 %v465
        %880 = vmatprep.subr.mxu0 0.0
        %881 = vmatpush1.msra.mxu0 %v466
        %882 = vmatprep.subr.mxu0 0.0
        %883 = vmatpush1.msra.mxu0 0.0
        %884 = vmatprep.subr.mxu0 0.0
        %885 = vmatpush1.msra.mxu0 0.0
        %886 = vmatprep.subr.mxu0 0.0
        %887 = vmatpush1.msra.mxu0 0.0
        %888 = vmatprep.subr.mxu0 0.0
        %889 = vmatpush1.msra.mxu0 0.0
        %890 = vmatprep.subr.mxu0 0.0
        %891 = vmatpush1.msra.mxu0 0.0
        %892 = vmatprep.subr.mxu0 0.0
        %893 = vmatpush1.msra.mxu0 0.0
        %894 = vmatprep.subr.mxu0 0.0
        %895 = vmatpush1.msra.mxu0 0.0
        %896 = vmatprep.subr.mxu0 0.0
        %897 = vmatpush1.msra.mxu0 0.0
        %898 = vmatprep.subr.mxu0 0.0
        %899 = vmatpush1.msra.mxu0 0.0
        %900 = vmatprep.subr.mxu0 0.0
        %901 = vmatpush1.msra.mxu0 0.0
        %902 = vmatprep.subr.mxu0 0.0
        %903 = vmatpush1.msra.mxu0 0.0
        %904 = vmatprep.subr.mxu0 0.0
        %905 = vmatpush1.msra.mxu0 0.0
        %906 = vmatprep.subr.mxu0 0.0
        %907 = vmatpush1.msra.mxu0 0.0
        %908 = vmatprep.subr.mxu0 0.0
        %909 = vmatpush1.msra.mxu0 0.0
        %910 = vmatprep.subr.mxu0 0.0
        %911 = vmatpush1.msra.mxu0 0.0
        %912 = vmatprep.subr.mxu0 0.0
        %913 = vmatpush1.msra.mxu0 0.0
        %914 = vmatprep.subr.mxu0 0.0
        %915 = vmatpush1.msra.mxu0 0.0
        %916 = vmatprep.subr.mxu0 0.0
        %917 = vmatpush1.msra.mxu0 0.0
        %918 = vmatprep.subr.mxu0 0.0
        %919 = vmatpush1.msra.mxu0 0.0
        %920 = vmatprep.subr.mxu0 0.0
        %921 = vmatpush1.msra.mxu0 0.0
        %922 = vmatprep.subr.mxu0 0.0
        %923 = vmatpush1.msra.mxu0 0.0
        %924 = vmatprep.subr.mxu0 0.0
        %925 = vmatpush1.msra.mxu0 0.0
        %926 = vmatprep.subr.mxu0 0.0
        %927 = vmatpush1.msra.mxu0 0.0
        %928 = vmatprep.subr.mxu0 0.0
        %929 = vmatpush1.msra.mxu0 0.0
        %930 = vmatprep.subr.mxu0 0.0
        %931 = vmatpush1.msra.mxu0 0.0
        %932 = vmatprep.subr.mxu0 0.0
        %933 = vmatpush1.msra.mxu0 0.0
        %934 = vmatprep.subr.mxu0 0.0
        %935 = vmatpush1.msra.mxu0 0.0
        %936 = vmatprep.subr.mxu0 0.0
        %937 = vmatpush1.msra.mxu0 0.0
        %938 = vmatprep.subr.mxu0 0.0
        %939 = vmatpush1.msra.mxu0 0.0
        %940 = vmatprep.subr.mxu0 0.0
        %941 = vmatpush1.msra.mxu0 0.0
        %942 = vmatprep.mubr.f32.mxu0 0.0
        %943 = vmatmul.mubr.f32.gmra.mrb[0].mxu0 %v722
        %v944 = vpop.f32.mrb[0].mxu0
        %v945 = vadd.f32 %v635, %v944
        %v946 = vpop.f32.mrb[0].mxu0
        %947 = vdwg.mxu0
        %v948 = vmul.f32 %v800, %v945
        %v949 = vadd.f32 %v720, %v948
        %v950 = vtanh.pop %v949
        %v951 = vsub.f32 1.0, %v877
        %v952 = vmul.f32 %v951, %v950
        %v953 = vmul.f32 %v877, %v712
        %v954 = vadd.f32 %v952, %v953
        %s955 = scalar_lea.vmem [#allocation2], 8
        %v956 = vld [vmem:[%s955] sm:$0xf]
        %s957 = sadd.s32 8, 32
        %s958 = scalar_lea.vmem [#allocation2], %s957
        %v959 = vld [vmem:[%s958] sm:$0xf]
        %s960 = sadd.s32 8, 64
        %s961 = scalar_lea.vmem [#allocation2], %s960
        %v962 = vld [vmem:[%s961] sm:$0xf]
        %v964 = vsel %vm271, %v954, 0
        %966 = vmatprep.subr.mxu0 0.0
        %967 = vmatpush1.msra.mxu0 %v461
        %968 = vmatprep.subr.mxu0 0.0
        %969 = vmatpush1.msra.mxu0 %v462
        %970 = vmatprep.subr.mxu0 0.0
        %971 = vmatpush1.msra.mxu0 0.0
        %972 = vmatprep.subr.mxu0 0.0
        %973 = vmatpush1.msra.mxu0 0.0
        %974 = vmatprep.subr.mxu0 0.0
        %975 = vmatpush1.msra.mxu0 0.0
        %976 = vmatprep.subr.mxu0 0.0
        %977 = vmatpush1.msra.mxu0 0.0
        %978 = vmatprep.subr.mxu0 0.0
        %979 = vmatpush1.msra.mxu0 0.0
        %980 = vmatprep.subr.mxu0 0.0
        %981 = vmatpush1.msra.mxu0 0.0
        %982 = vmatprep.subr.mxu0 0.0
        %983 = vmatpush1.msra.mxu0 0.0
        %984 = vmatprep.subr.mxu0 0.0
        %985 = vmatpush1.msra.mxu0 0.0
        %986 = vmatprep.subr.mxu0 0.0
        %987 = vmatpush1.msra.mxu0 0.0
        %988 = vmatprep.subr.mxu0 0.0
        %989 = vmatpush1.msra.mxu0 0.0
        %990 = vmatprep.subr.mxu0 0.0
        %991 = vmatpush1.msra.mxu0 0.0
        %992 = vmatprep.subr.mxu0 0.0
        %993 = vmatpush1.msra.mxu0 0.0
        %994 = vmatprep.subr.mxu0 0.0
        %995 = vmatpush1.msra.mxu0 0.0
        %996 = vmatprep.subr.mxu0 0.0
        %997 = vmatpush1.msra.mxu0 0.0
        %998 = vmatprep.subr.mxu0 0.0
        %999 = vmatpush1.msra.mxu0 0.0
        %1000 = vmatprep.subr.mxu0 0.0
        %1001 = vmatpush1.msra.mxu0 0.0
        %1002 = vmatprep.subr.mxu0 0.0
        %1003 = vmatpush1.msra.mxu0 0.0
        %1004 = vmatprep.subr.mxu0 0.0
        %1005 = vmatpush1.msra.mxu0 0.0
        %1006 = vmatprep.subr.mxu0 0.0
        %1007 = vmatpush1.msra.mxu0 0.0
        %1008 = vmatprep.subr.mxu0 0.0
        %1009 = vmatpush1.msra.mxu0 0.0
        %1010 = vmatprep.subr.mxu0 0.0
        %1011 = vmatpush1.msra.mxu0 0.0
        %1012 = vmatprep.subr.mxu0 0.0
        %1013 = vmatpush1.msra.mxu0 0.0
        %1014 = vmatprep.subr.mxu0 0.0
        %1015 = vmatpush1.msra.mxu0 0.0
        %1016 = vmatprep.subr.mxu0 0.0
        %1017 = vmatpush1.msra.mxu0 0.0
        %1018 = vmatprep.subr.mxu0 0.0
        %1019 = vmatpush1.msra.mxu0 0.0
        %1020 = vmatprep.subr.mxu0 0.0
        %1021 = vmatpush1.msra.mxu0 0.0
        %1022 = vmatprep.subr.mxu0 0.0
        %1023 = vmatpush1.msra.mxu0 0.0
        %1024 = vmatprep.subr.mxu0 0.0
        %1025 = vmatpush1.msra.mxu0 0.0
        %1026 = vmatprep.subr.mxu0 0.0
        %1027 = vmatpush1.msra.mxu0 0.0
        %1028 = vmatprep.subr.mxu0 0.0
        %1029 = vmatpush1.msra.mxu0 0.0
        %1030 = vmatprep.mubr.f32.mxu0 0.0
        %1031 = vmatmul.mubr.f32.gmra.mrb[0].mxu0 %v964
        %v1032 = vpop.f32.mrb[0].mxu0
        %v1033 = vadd.f32 0.0, %v1032
        %v1034 = vpop.f32.mrb[0].mxu0
        %1035 = vdwg.mxu0
        %v1036 = vadd.f32 %v956, %v1033
        %v1037 = vxor.u32 %v1036, 2147483648
        %v1038 = vmul.f32 %v1037, 1.442695
        %v1039 = vpow.pop %v1038
        %v1040 = vadd.f32 %v1039, 1.0
        %v1041 = vrcp.pop %v1040
        %v1042 = vmul.f32 1.0, %v1041
        %1043 = vmatprep.subr.mxu0 0.0
        %1044 = vmatpush1.msra.mxu0 %v463
        %1045 = vmatprep.subr.mxu0 0.0
        %1046 = vmatpush1.msra.mxu0 %v464
        %1047 = vmatprep.subr.mxu0 0.0
        %1048 = vmatpush1.msra.mxu0 0.0
        %1049 = vmatprep.subr.mxu0 0.0
        %1050 = vmatpush1.msra.mxu0 0.0
        %1051 = vmatprep.subr.mxu0 0.0
        %1052 = vmatpush1.msra.mxu0 0.0
        %1053 = vmatprep.subr.mxu0 0.0
        %1054 = vmatpush1.msra.mxu0 0.0
        %1055 = vmatprep.subr.mxu0 0.0
        %1056 = vmatpush1.msra.mxu0 0.0
        %1057 = vmatprep.subr.mxu0 0.0
        %1058 = vmatpush1.msra.mxu0 0.0
        %1059 = vmatprep.subr.mxu0 0.0
        %1060 = vmatpush1.msra.mxu0 0.0
        %1061 = vmatprep.subr.mxu0 0.0
        %1062 = vmatpush1.msra.mxu0 0.0
        %1063 = vmatprep.subr.mxu0 0.0
        %1064 = vmatpush1.msra.mxu0 0.0
        %1065 = vmatprep.subr.mxu0 0.0
        %1066 = vmatpush1.msra.mxu0 0.0
        %1067 = vmatprep.subr.mxu0 0.0
        %1068 = vmatpush1.msra.mxu0 0.0
        %1069 = vmatprep.subr.mxu0 0.0
        %1070 = vmatpush1.msra.mxu0 0.0
        %1071 = vmatprep.subr.mxu0 0.0
        %1072 = vmatpush1.msra.mxu0 0.0
        %1073 = vmatprep.subr.mxu0 0.0
        %1074 = vmatpush1.msra.mxu0 0.0
        %1075 = vmatprep.subr.mxu0 0.0
        %1076 = vmatpush1.msra.mxu0 0.0
        %1077 = vmatprep.subr.mxu0 0.0
        %1078 = vmatpush1.msra.mxu0 0.0
        %1079 = vmatprep.subr.mxu0 0.0
        %1080 = vmatpush1.msra.mxu0 0.0
        %1081 = vmatprep.subr.mxu0 0.0
        %1082 = vmatpush1.msra.mxu0 0.0
        %1083 = vmatprep.subr.mxu0 0.0
        %1084 = vmatpush1.msra.mxu0 0.0
        %1085 = vmatprep.subr.mxu0 0.0
        %1086 = vmatpush1.msra.mxu0 0.0
        %1087 = vmatprep.subr.mxu0 0.0
        %1088 = vmatpush1.msra.mxu0 0.0
        %1089 = vmatprep.subr.mxu0 0.0
        %1090 = vmatpush1.msra.mxu0 0.0
        %1091 = vmatprep.subr.mxu0 0.0
        %1092 = vmatpush1.msra.mxu0 0.0
        %1093 = vmatprep.subr.mxu0 0.0
        %1094 = vmatpush1.msra.mxu0 0.0
        %1095 = vmatprep.subr.mxu0 0.0
        %1096 = vmatpush1.msra.mxu0 0.0
        %1097 = vmatprep.subr.mxu0 0.0
        %1098 = vmatpush1.msra.mxu0 0.0
        %1099 = vmatprep.subr.mxu0 0.0
        %1100 = vmatpush1.msra.mxu0 0.0
        %1101 = vmatprep.subr.mxu0 0.0
        %1102 = vmatpush1.msra.mxu0 0.0
        %1103 = vmatprep.subr.mxu0 0.0
        %1104 = vmatpush1.msra.mxu0 0.0
        %1105 = vmatprep.subr.mxu0 0.0
        %1106 = vmatpush1.msra.mxu0 0.0
        %1107 = vmatprep.mubr.f32.mxu0 0.0
        %1108 = vmatmul.mubr.f32.gmra.mrb[0].mxu0 %v964
        %v1109 = vpop.f32.mrb[0].mxu0
        %v1110 = vadd.f32 0.0, %v1109
        %v1111 = vpop.f32.mrb[0].mxu0
        %1112 = vdwg.mxu0
        %v1113 = vadd.f32 %v959, %v1110
        %v1114 = vxor.u32 %v1113, 2147483648
        %v1115 = vmul.f32 %v1114, 1.442695
        %v1116 = vpow.pop %v1115
        %v1117 = vadd.f32 %v1116, 1.0
        %v1118 = vrcp.pop %v1117
        %v1119 = vmul.f32 1.0, %v1118
        %1120 = vmatprep.subr.mxu0 0.0
        %1121 = vmatpush1.msra.mxu0 %v465
        %1122 = vmatprep.subr.mxu0 0.0
        %1123 = vmatpush1.msra.mxu0 %v466
        %1124 = vmatprep.subr.mxu0 0.0
        %1125 = vmatpush1.msra.mxu0 0.0
        %1126 = vmatprep.subr.mxu0 0.0
        %1127 = vmatpush1.msra.mxu0 0.0
        %1128 = vmatprep.subr.mxu0 0.0
        %1129 = vmatpush1.msra.mxu0 0.0
        %1130 = vmatprep.subr.mxu0 0.0
        %1131 = vmatpush1.msra.mxu0 0.0
        %1132 = vmatprep.subr.mxu0 0.0
        %1133 = vmatpush1.msra.mxu0 0.0
        %1134 = vmatprep.subr.mxu0 0.0
        %1135 = vmatpush1.msra.mxu0 0.0
        %1136 = vmatprep.subr.mxu0 0.0
        %1137 = vmatpush1.msra.mxu0 0.0
        %1138 = vmatprep.subr.mxu0 0.0
        %1139 = vmatpush1.msra.mxu0 0.0
        %1140 = vmatprep.subr.mxu0 0.0
        %1141 = vmatpush1.msra.mxu0 0.0
        %1142 = vmatprep.subr.mxu0 0.0
        %1143 = vmatpush1.msra.mxu0 0.0
        %1144 = vmatprep.subr.mxu0 0.0
        %1145 = vmatpush1.msra.mxu0 0.0
        %1146 = vmatprep.subr.mxu0 0.0
        %1147 = vmatpush1.msra.mxu0 0.0
        %1148 = vmatprep.subr.mxu0 0.0
        %1149 = vmatpush1.msra.mxu0 0.0
        %1150 = vmatprep.subr.mxu0 0.0
        %1151 = vmatpush1.msra.mxu0 0.0
        %1152 = vmatprep.subr.mxu0 0.0
        %1153 = vmatpush1.msra.mxu0 0.0
        %1154 = vmatprep.subr.mxu0 0.0
        %1155 = vmatpush1.msra.mxu0 0.0
        %1156 = vmatprep.subr.mxu0 0.0
        %1157 = vmatpush1.msra.mxu0 0.0
        %1158 = vmatprep.subr.mxu0 0.0
        %1159 = vmatpush1.msra.mxu0 0.0
        %1160 = vmatprep.subr.mxu0 0.0
        %1161 = vmatpush1.msra.mxu0 0.0
        %1162 = vmatprep.subr.mxu0 0.0
        %1163 = vmatpush1.msra.mxu0 0.0
        %1164 = vmatprep.subr.mxu0 0.0
        %1165 = vmatpush1.msra.mxu0 0.0
        %1166 = vmatprep.subr.mxu0 0.0
        %1167 = vmatpush1.msra.mxu0 0.0
        %1168 = vmatprep.subr.mxu0 0.0
        %1169 = vmatpush1.msra.mxu0 0.0
        %1170 = vmatprep.subr.mxu0 0.0
        %1171 = vmatpush1.msra.mxu0 0.0
        %1172 = vmatprep.subr.mxu0 0.0
        %1173 = vmatpush1.msra.mxu0 0.0
        %1174 = vmatprep.subr.mxu0 0.0
        %1175 = vmatpush1.msra.mxu0 0.0
        %1176 = vmatprep.subr.mxu0 0.0
        %1177 = vmatpush1.msra.mxu0 0.0
        %1178 = vmatprep.subr.mxu0 0.0
        %1179 = vmatpush1.msra.mxu0 0.0
        %1180 = vmatprep.subr.mxu0 0.0
        %1181 = vmatpush1.msra.mxu0 0.0
        %1182 = vmatprep.subr.mxu0 0.0
        %1183 = vmatpush1.msra.mxu0 0.0
        %1184 = vmatprep.mubr.f32.mxu0 0.0
        %1185 = vmatmul.mubr.f32.gmra.mrb[0].mxu0 %v964
        %v1186 = vpop.f32.mrb[0].mxu0
        %v1187 = vadd.f32 %v635, %v1186
        %v1188 = vpop.f32.mrb[0].mxu0
        %1189 = vdwg.mxu0
        %v1190 = vmul.f32 %v1042, %v1187
        %v1191 = vadd.f32 %v962, %v1190
        %v1192 = vtanh.pop %v1191
        %v1193 = vsub.f32 1.0, %v1119
        %v1194 = vmul.f32 %v1193, %v1192
        %v1195 = vmul.f32 %v1119, %v954
        %v1196 = vadd.f32 %v1194, %v1195
        %s1197 = scalar_lea.vmem [#allocation2], 12
        %v1198 = vld [vmem:[%s1197] sm:$0xf]
        %s1199 = sadd.s32 12, 32
        %s1200 = scalar_lea.vmem [#allocation2], %s1199
        %v1201 = vld [vmem:[%s1200] sm:$0xf]
        %s1202 = sadd.s32 12, 64
        %s1203 = scalar_lea.vmem [#allocation2], %s1202
        %v1204 = vld [vmem:[%s1203] sm:$0xf]
        %v1206 = vsel %vm271, %v1196, 0
        %1208 = vmatprep.subr.mxu0 0.0
        %1209 = vmatpush1.msra.mxu0 %v461
        %1210 = vmatprep.subr.mxu0 0.0
        %1211 = vmatpush1.msra.mxu0 %v462
        %1212 = vmatprep.subr.mxu0 0.0
        %1213 = vmatpush1.msra.mxu0 0.0
        %1214 = vmatprep.subr.mxu0 0.0
        %1215 = vmatpush1.msra.mxu0 0.0
        %1216 = vmatprep.subr.mxu0 0.0
        %1217 = vmatpush1.msra.mxu0 0.0
        %1218 = vmatprep.subr.mxu0 0.0
        %1219 = vmatpush1.msra.mxu0 0.0
        %1220 = vmatprep.subr.mxu0 0.0
        %1221 = vmatpush1.msra.mxu0 0.0
        %1222 = vmatprep.subr.mxu0 0.0
        %1223 = vmatpush1.msra.mxu0 0.0
        %1224 = vmatprep.subr.mxu0 0.0
        %1225 = vmatpush1.msra.mxu0 0.0
        %1226 = vmatprep.subr.mxu0 0.0
        %1227 = vmatpush1.msra.mxu0 0.0
        %1228 = vmatprep.subr.mxu0 0.0
        %1229 = vmatpush1.msra.mxu0 0.0
        %1230 = vmatprep.subr.mxu0 0.0
        %1231 = vmatpush1.msra.mxu0 0.0
        %1232 = vmatprep.subr.mxu0 0.0
        %1233 = vmatpush1.msra.mxu0 0.0
        %1234 = vmatprep.subr.mxu0 0.0
        %1235 = vmatpush1.msra.mxu0 0.0
        %1236 = vmatprep.subr.mxu0 0.0
        %1237 = vmatpush1.msra.mxu0 0.0
        %1238 = vmatprep.subr.mxu0 0.0
        %1239 = vmatpush1.msra.mxu0 0.0
        %1240 = vmatprep.subr.mxu0 0.0
        %1241 = vmatpush1.msra.mxu0 0.0
        %1242 = vmatprep.subr.mxu0 0.0
        %1243 = vmatpush1.msra.mxu0 0.0
        %1244 = vmatprep.subr.mxu0 0.0
        %1245 = vmatpush1.msra.mxu0 0.0
        %1246 = vmatprep.subr.mxu0 0.0
        %1247 = vmatpush1.msra.mxu0 0.0
        %1248 = vmatprep.subr.mxu0 0.0
        %1249 = vmatpush1.msra.mxu0 0.0
        %1250 = vmatprep.subr.mxu0 0.0
        %1251 = vmatpush1.msra.mxu0 0.0
        %1252 = vmatprep.subr.mxu0 0.0
        %1253 = vmatpush1.msra.mxu0 0.0
        %1254 = vmatprep.subr.mxu0 0.0
        %1255 = vmatpush1.msra.mxu0 0.0
        %1256 = vmatprep.subr.mxu0 0.0
        %1257 = vmatpush1.msra.mxu0 0.0
        %1258 = vmatprep.subr.mxu0 0.0
        %1259 = vmatpush1.msra.mxu0 0.0
        %1260 = vmatprep.subr.mxu0 0.0
        %1261 = vmatpush1.msra.mxu0 0.0
        %1262 = vmatprep.subr.mxu0 0.0
        %1263 = vmatpush1.msra.mxu0 0.0
        %1264 = vmatprep.subr.mxu0 0.0
        %1265 = vmatpush1.msra.mxu0 0.0
        %1266 = vmatprep.subr.mxu0 0.0
        %1267 = vmatpush1.msra.mxu0 0.0
        %1268 = vmatprep.subr.mxu0 0.0
        %1269 = vmatpush1.msra.mxu0 0.0
        %1270 = vmatprep.subr.mxu0 0.0
        %1271 = vmatpush1.msra.mxu0 0.0
        %1272 = vmatprep.mubr.f32.mxu0 0.0
        %1273 = vmatmul.mubr.f32.gmra.mrb[0].mxu0 %v1206
        %v1274 = vpop.f32.mrb[0].mxu0
        %v1275 = vadd.f32 0.0, %v1274
        %v1276 = vpop.f32.mrb[0].mxu0
        %1277 = vdwg.mxu0
        %v1278 = vadd.f32 %v1198, %v1275
        %v1279 = vxor.u32 %v1278, 2147483648
        %v1280 = vmul.f32 %v1279, 1.442695
        %v1281 = vpow.pop %v1280
        %v1282 = vadd.f32 %v1281, 1.0
        %v1283 = vrcp.pop %v1282
        %v1284 = vmul.f32 1.0, %v1283
        %1285 = vmatprep.subr.mxu0 0.0
        %1286 = vmatpush1.msra.mxu0 %v463
        %1287 = vmatprep.subr.mxu0 0.0
        %1288 = vmatpush1.msra.mxu0 %v464
        %1289 = vmatprep.subr.mxu0 0.0
        %1290 = vmatpush1.msra.mxu0 0.0
        %1291 = vmatprep.subr.mxu0 0.0
        %1292 = vmatpush1.msra.mxu0 0.0
        %1293 = vmatprep.subr.mxu0 0.0
        %1294 = vmatpush1.msra.mxu0 0.0
        %1295 = vmatprep.subr.mxu0 0.0
        %1296 = vmatpush1.msra.mxu0 0.0
        %1297 = vmatprep.subr.mxu0 0.0
        %1298 = vmatpush1.msra.mxu0 0.0
        %1299 = vmatprep.subr.mxu0 0.0
        %1300 = vmatpush1.msra.mxu0 0.0
        %1301 = vmatprep.subr.mxu0 0.0
        %1302 = vmatpush1.msra.mxu0 0.0
        %1303 = vmatprep.subr.mxu0 0.0
        %1304 = vmatpush1.msra.mxu0 0.0
        %1305 = vmatprep.subr.mxu0 0.0
        %1306 = vmatpush1.msra.mxu0 0.0
        %1307 = vmatprep.subr.mxu0 0.0
        %1308 = vmatpush1.msra.mxu0 0.0
        %1309 = vmatprep.subr.mxu0 0.0
        %1310 = vmatpush1.msra.mxu0 0.0
        %1311 = vmatprep.subr.mxu0 0.0
        %1312 = vmatpush1.msra.mxu0 0.0
        %1313 = vmatprep.subr.mxu0 0.0
        %1314 = vmatpush1.msra.mxu0 0.0
        %1315 = vmatprep.subr.mxu0 0.0
        %1316 = vmatpush1.msra.mxu0 0.0
        %1317 = vmatprep.subr.mxu0 0.0
        %1318 = vmatpush1.msra.mxu0 0.0
        %1319 = vmatprep.subr.mxu0 0.0
        %1320 = vmatpush1.msra.mxu0 0.0
        %1321 = vmatprep.subr.mxu0 0.0
        %1322 = vmatpush1.msra.mxu0 0.0
        %1323 = vmatprep.subr.mxu0 0.0
        %1324 = vmatpush1.msra.mxu0 0.0
        %1325 = vmatprep.subr.mxu0 0.0
        %1326 = vmatpush1.msra.mxu0 0.0
        %1327 = vmatprep.subr.mxu0 0.0
        %1328 = vmatpush1.msra.mxu0 0.0
        %1329 = vmatprep.subr.mxu0 0.0
        %1330 = vmatpush1.msra.mxu0 0.0
        %1331 = vmatprep.subr.mxu0 0.0
        %1332 = vmatpush1.msra.mxu0 0.0
        %1333 = vmatprep.subr.mxu0 0.0
        %1334 = vmatpush1.msra.mxu0 0.0
        %1335 = vmatprep.subr.mxu0 0.0
        %1336 = vmatpush1.msra.mxu0 0.0
        %1337 = vmatprep.subr.mxu0 0.0
        %1338 = vmatpush1.msra.mxu0 0.0
        %1339 = vmatprep.subr.mxu0 0.0
        %1340 = vmatpush1.msra.mxu0 0.0
        %1341 = vmatprep.subr.mxu0 0.0
        %1342 = vmatpush1.msra.mxu0 0.0
        %1343 = vmatprep.subr.mxu0 0.0
        %1344 = vmatpush1.msra.mxu0 0.0
        %1345 = vmatprep.subr.mxu0 0.0
        %1346 = vmatpush1.msra.mxu0 0.0
        %1347 = vmatprep.subr.mxu0 0.0
        %1348 = vmatpush1.msra.mxu0 0.0
        %1349 = vmatprep.mubr.f32.mxu0 0.0
        %1350 = vmatmul.mubr.f32.gmra.mrb[0].mxu0 %v1206
        %v1351 = vpop.f32.mrb[0].mxu0
        %v1352 = vadd.f32 0.0, %v1351
        %v1353 = vpop.f32.mrb[0].mxu0
        %1354 = vdwg.mxu0
        %v1355 = vadd.f32 %v1201, %v1352
        %v1356 = vxor.u32 %v1355, 2147483648
        %v1357 = vmul.f32 %v1356, 1.442695
        %v1358 = vpow.pop %v1357
        %v1359 = vadd.f32 %v1358, 1.0
        %v1360 = vrcp.pop %v1359
        %v1361 = vmul.f32 1.0, %v1360
        %1362 = vmatprep.subr.mxu0 0.0
        %1363 = vmatpush1.msra.mxu0 %v465
        %1364 = vmatprep.subr.mxu0 0.0
        %1365 = vmatpush1.msra.mxu0 %v466
        %1366 = vmatprep.subr.mxu0 0.0
        %1367 = vmatpush1.msra.mxu0 0.0
        %1368 = vmatprep.subr.mxu0 0.0
        %1369 = vmatpush1.msra.mxu0 0.0
        %1370 = vmatprep.subr.mxu0 0.0
        %1371 = vmatpush1.msra.mxu0 0.0
        %1372 = vmatprep.subr.mxu0 0.0
        %1373 = vmatpush1.msra.mxu0 0.0
        %1374 = vmatprep.subr.mxu0 0.0
        %1375 = vmatpush1.msra.mxu0 0.0
        %1376 = vmatprep.subr.mxu0 0.0
        %1377 = vmatpush1.msra.mxu0 0.0
        %1378 = vmatprep.subr.mxu0 0.0
        %1379 = vmatpush1.msra.mxu0 0.0
        %1380 = vmatprep.subr.mxu0 0.0
        %1381 = vmatpush1.msra.mxu0 0.0
        %1382 = vmatprep.subr.mxu0 0.0
        %1383 = vmatpush1.msra.mxu0 0.0
        %1384 = vmatprep.subr.mxu0 0.0
        %1385 = vmatpush1.msra.mxu0 0.0
        %1386 = vmatprep.subr.mxu0 0.0
        %1387 = vmatpush1.msra.mxu0 0.0
        %1388 = vmatprep.subr.mxu0 0.0
        %1389 = vmatpush1.msra.mxu0 0.0
        %1390 = vmatprep.subr.mxu0 0.0
        %1391 = vmatpush1.msra.mxu0 0.0
        %1392 = vmatprep.subr.mxu0 0.0
        %1393 = vmatpush1.msra.mxu0 0.0
        %1394 = vmatprep.subr.mxu0 0.0
        %1395 = vmatpush1.msra.mxu0 0.0
        %1396 = vmatprep.subr.mxu0 0.0
        %1397 = vmatpush1.msra.mxu0 0.0
        %1398 = vmatprep.subr.mxu0 0.0
        %1399 = vmatpush1.msra.mxu0 0.0
        %1400 = vmatprep.subr.mxu0 0.0
        %1401 = vmatpush1.msra.mxu0 0.0
        %1402 = vmatprep.subr.mxu0 0.0
        %1403 = vmatpush1.msra.mxu0 0.0
        %1404 = vmatprep.subr.mxu0 0.0
        %1405 = vmatpush1.msra.mxu0 0.0
        %1406 = vmatprep.subr.mxu0 0.0
        %1407 = vmatpush1.msra.mxu0 0.0
        %1408 = vmatprep.subr.mxu0 0.0
        %1409 = vmatpush1.msra.mxu0 0.0
        %1410 = vmatprep.subr.mxu0 0.0
        %1411 = vmatpush1.msra.mxu0 0.0
        %1412 = vmatprep.subr.mxu0 0.0
        %1413 = vmatpush1.msra.mxu0 0.0
        %1414 = vmatprep.subr.mxu0 0.0
        %1415 = vmatpush1.msra.mxu0 0.0
        %1416 = vmatprep.subr.mxu0 0.0
        %1417 = vmatpush1.msra.mxu0 0.0
        %1418 = vmatprep.subr.mxu0 0.0
        %1419 = vmatpush1.msra.mxu0 0.0
        %1420 = vmatprep.subr.mxu0 0.0
        %1421 = vmatpush1.msra.mxu0 0.0
        %1422 = vmatprep.subr.mxu0 0.0
        %1423 = vmatpush1.msra.mxu0 0.0
        %1424 = vmatprep.subr.mxu0 0.0
        %1425 = vmatpush1.msra.mxu0 0.0
        %1426 = vmatprep.mubr.f32.mxu0 0.0
        %1427 = vmatmul.mubr.f32.gmra.mrb[0].mxu0 %v1206
        %v1428 = vpop.f32.mrb[0].mxu0
        %v1429 = vadd.f32 %v635, %v1428
        %v1430 = vpop.f32.mrb[0].mxu0
        %1431 = vdwg.mxu0
        %v1432 = vmul.f32 %v1284, %v1429
        %v1433 = vadd.f32 %v1204, %v1432
        %v1434 = vtanh.pop %v1433
        %v1435 = vsub.f32 1.0, %v1361
        %v1436 = vmul.f32 %v1435, %v1434
        %v1437 = vmul.f32 %v1361, %v1196
        %v1438 = vadd.f32 %v1436, %v1437
        %s1439 = scalar_lea.vmem [#allocation2], 16
        %v1440 = vld [vmem:[%s1439] sm:$0xf]
        %s1441 = sadd.s32 16, 32
        %s1442 = scalar_lea.vmem [#allocation2], %s1441
        %v1443 = vld [vmem:[%s1442] sm:$0xf]
        %s1444 = sadd.s32 16, 64
        %s1445 = scalar_lea.vmem [#allocation2], %s1444
        %v1446 = vld [vmem:[%s1445] sm:$0xf]
        %v1448 = vsel %vm271, %v1438, 0
        %1450 = vmatprep.subr.mxu0 0.0
        %1451 = vmatpush1.msra.mxu0 %v461
        %1452 = vmatprep.subr.mxu0 0.0
        %1453 = vmatpush1.msra.mxu0 %v462
        %1454 = vmatprep.subr.mxu0 0.0
        %1455 = vmatpush1.msra.mxu0 0.0
        %1456 = vmatprep.subr.mxu0 0.0
        %1457 = vmatpush1.msra.mxu0 0.0
        %1458 = vmatprep.subr.mxu0 0.0
        %1459 = vmatpush1.msra.mxu0 0.0
        %1460 = vmatprep.subr.mxu0 0.0
        %1461 = vmatpush1.msra.mxu0 0.0
        %1462 = vmatprep.subr.mxu0 0.0
        %1463 = vmatpush1.msra.mxu0 0.0
        %1464 = vmatprep.subr.mxu0 0.0
        %1465 = vmatpush1.msra.mxu0 0.0
        %1466 = vmatprep.subr.mxu0 0.0
        %1467 = vmatpush1.msra.mxu0 0.0
        %1468 = vmatprep.subr.mxu0 0.0
        %1469 = vmatpush1.msra.mxu0 0.0
        %1470 = vmatprep.subr.mxu0 0.0
        %1471 = vmatpush1.msra.mxu0 0.0
        %1472 = vmatprep.subr.mxu0 0.0
        %1473 = vmatpush1.msra.mxu0 0.0
        %1474 = vmatprep.subr.mxu0 0.0
        %1475 = vmatpush1.msra.mxu0 0.0
        %1476 = vmatprep.subr.mxu0 0.0
        %1477 = vmatpush1.msra.mxu0 0.0
        %1478 = vmatprep.subr.mxu0 0.0
        %1479 = vmatpush1.msra.mxu0 0.0
        %1480 = vmatprep.subr.mxu0 0.0
        %1481 = vmatpush1.msra.mxu0 0.0
        %1482 = vmatprep.subr.mxu0 0.0
        %1483 = vmatpush1.msra.mxu0 0.0
        %1484 = vmatprep.subr.mxu0 0.0
        %1485 = vmatpush1.msra.mxu0 0.0
        %1486 = vmatprep.subr.mxu0 0.0
        %1487 = vmatpush1.msra.mxu0 0.0
        %1488 = vmatprep.subr.mxu0 0.0
        %1489 = vmatpush1.msra.mxu0 0.0
        %1490 = vmatprep.subr.mxu0 0.0
        %1491 = vmatpush1.msra.mxu0 0.0
        %1492 = vmatprep.subr.mxu0 0.0
        %1493 = vmatpush1.msra.mxu0 0.0
        %1494 = vmatprep.subr.mxu0 0.0
        %1495 = vmatpush1.msra.mxu0 0.0
        %1496 = vmatprep.subr.mxu0 0.0
        %1497 = vmatpush1.msra.mxu0 0.0
        %1498 = vmatprep.subr.mxu0 0.0
        %1499 = vmatpush1.msra.mxu0 0.0
        %1500 = vmatprep.subr.mxu0 0.0
        %1501 = vmatpush1.msra.mxu0 0.0
        %1502 = vmatprep.subr.mxu0 0.0
        %1503 = vmatpush1.msra.mxu0 0.0
        %1504 = vmatprep.subr.mxu0 0.0
        %1505 = vmatpush1.msra.mxu0 0.0
        %1506 = vmatprep.subr.mxu0 0.0
        %1507 = vmatpush1.msra.mxu0 0.0
        %1508 = vmatprep.subr.mxu0 0.0
        %1509 = vmatpush1.msra.mxu0 0.0
        %1510 = vmatprep.subr.mxu0 0.0
        %1511 = vmatpush1.msra.mxu0 0.0
        %1512 = vmatprep.subr.mxu0 0.0
        %1513 = vmatpush1.msra.mxu0 0.0
        %1514 = vmatprep.mubr.f32.mxu0 0.0
        %1515 = vmatmul.mubr.f32.gmra.mrb[0].mxu0 %v1448
        %v1516 = vpop.f32.mrb[0].mxu0
        %v1517 = vadd.f32 0.0, %v1516
        %v1518 = vpop.f32.mrb[0].mxu0
        %1519 = vdwg.mxu0
        %v1520 = vadd.f32 %v1440, %v1517
        %v1521 = vxor.u32 %v1520, 2147483648
        %v1522 = vmul.f32 %v1521, 1.442695
        %v1523 = vpow.pop %v1522
        %v1524 = vadd.f32 %v1523, 1.0
        %v1525 = vrcp.pop %v1524
        %v1526 = vmul.f32 1.0, %v1525
        %1527 = vmatprep.subr.mxu0 0.0
        %1528 = vmatpush1.msra.mxu0 %v463
        %1529 = vmatprep.subr.mxu0 0.0
        %1530 = vmatpush1.msra.mxu0 %v464
        %1531 = vmatprep.subr.mxu0 0.0
        %1532 = vmatpush1.msra.mxu0 0.0
        %1533 = vmatprep.subr.mxu0 0.0
        %1534 = vmatpush1.msra.mxu0 0.0
        %1535 = vmatprep.subr.mxu0 0.0
        %1536 = vmatpush1.msra.mxu0 0.0
        %1537 = vmatprep.subr.mxu0 0.0
        %1538 = vmatpush1.msra.mxu0 0.0
        %1539 = vmatprep.subr.mxu0 0.0
        %1540 = vmatpush1.msra.mxu0 0.0
        %1541 = vmatprep.subr.mxu0 0.0
        %1542 = vmatpush1.msra.mxu0 0.0
        %1543 = vmatprep.subr.mxu0 0.0
        %1544 = vmatpush1.msra.mxu0 0.0
        %1545 = vmatprep.subr.mxu0 0.0
        %1546 = vmatpush1.msra.mxu0 0.0
        %1547 = vmatprep.subr.mxu0 0.0
        %1548 = vmatpush1.msra.mxu0 0.0
        %1549 = vmatprep.subr.mxu0 0.0
        %1550 = vmatpush1.msra.mxu0 0.0
        %1551 = vmatprep.subr.mxu0 0.0
        %1552 = vmatpush1.msra.mxu0 0.0
        %1553 = vmatprep.subr.mxu0 0.0
        %1554 = vmatpush1.msra.mxu0 0.0
        %1555 = vmatprep.subr.mxu0 0.0
        %1556 = vmatpush1.msra.mxu0 0.0
        %1557 = vmatprep.subr.mxu0 0.0
        %1558 = vmatpush1.msra.mxu0 0.0
        %1559 = vmatprep.subr.mxu0 0.0
        %1560 = vmatpush1.msra.mxu0 0.0
        %1561 = vmatprep.subr.mxu0 0.0
        %1562 = vmatpush1.msra.mxu0 0.0
        %1563 = vmatprep.subr.mxu0 0.0
        %1564 = vmatpush1.msra.mxu0 0.0
        %1565 = vmatprep.subr.mxu0 0.0
        %1566 = vmatpush1.msra.mxu0 0.0
        %1567 = vmatprep.subr.mxu0 0.0
        %1568 = vmatpush1.msra.mxu0 0.0
        %1569 = vmatprep.subr.mxu0 0.0
        %1570 = vmatpush1.msra.mxu0 0.0
        %1571 = vmatprep.subr.mxu0 0.0
        %1572 = vmatpush1.msra.mxu0 0.0
        %1573 = vmatprep.subr.mxu0 0.0
        %1574 = vmatpush1.msra.mxu0 0.0
        %1575 = vmatprep.subr.mxu0 0.0
        %1576 = vmatpush1.msra.mxu0 0.0
        %1577 = vmatprep.subr.mxu0 0.0
        %1578 = vmatpush1.msra.mxu0 0.0
        %1579 = vmatprep.subr.mxu0 0.0
        %1580 = vmatpush1.msra.mxu0 0.0
        %1581 = vmatprep.subr.mxu0 0.0
        %1582 = vmatpush1.msra.mxu0 0.0
        %1583 = vmatprep.subr.mxu0 0.0
        %1584 = vmatpush1.msra.mxu0 0.0
        %1585 = vmatprep.subr.mxu0 0.0
        %1586 = vmatpush1.msra.mxu0 0.0
        %1587 = vmatprep.subr.mxu0 0.0
        %1588 = vmatpush1.msra.mxu0 0.0
        %1589 = vmatprep.subr.mxu0 0.0
        %1590 = vmatpush1.msra.mxu0 0.0
        %1591 = vmatprep.mubr.f32.mxu0 0.0
        %1592 = vmatmul.mubr.f32.gmra.mrb[0].mxu0 %v1448
        %v1593 = vpop.f32.mrb[0].mxu0
        %v1594 = vadd.f32 0.0, %v1593
        %v1595 = vpop.f32.mrb[0].mxu0
        %1596 = vdwg.mxu0
        %v1597 = vadd.f32 %v1443, %v1594
        %v1598 = vxor.u32 %v1597, 2147483648
        %v1599 = vmul.f32 %v1598, 1.442695
        %v1600 = vpow.pop %v1599
        %v1601 = vadd.f32 %v1600, 1.0
        %v1602 = vrcp.pop %v1601
        %v1603 = vmul.f32 1.0, %v1602
        %1604 = vmatprep.subr.mxu0 0.0
        %1605 = vmatpush1.msra.mxu0 %v465
        %1606 = vmatprep.subr.mxu0 0.0
        %1607 = vmatpush1.msra.mxu0 %v466
        %1608 = vmatprep.subr.mxu0 0.0
        %1609 = vmatpush1.msra.mxu0 0.0
        %1610 = vmatprep.subr.mxu0 0.0
        %1611 = vmatpush1.msra.mxu0 0.0
        %1612 = vmatprep.subr.mxu0 0.0
        %1613 = vmatpush1.msra.mxu0 0.0
        %1614 = vmatprep.subr.mxu0 0.0
        %1615 = vmatpush1.msra.mxu0 0.0
        %1616 = vmatprep.subr.mxu0 0.0
        %1617 = vmatpush1.msra.mxu0 0.0
        %1618 = vmatprep.subr.mxu0 0.0
        %1619 = vmatpush1.msra.mxu0 0.0
        %1620 = vmatprep.subr.mxu0 0.0
        %1621 = vmatpush1.msra.mxu0 0.0
        %1622 = vmatprep.subr.mxu0 0.0
        %1623 = vmatpush1.msra.mxu0 0.0
        %1624 = vmatprep.subr.mxu0 0.0
        %1625 = vmatpush1.msra.mxu0 0.0
        %1626 = vmatprep.subr.mxu0 0.0
        %1627 = vmatpush1.msra.mxu0 0.0
        %1628 = vmatprep.subr.mxu0 0.0
        %1629 = vmatpush1.msra.mxu0 0.0
        %1630 = vmatprep.subr.mxu0 0.0
        %1631 = vmatpush1.msra.mxu0 0.0
        %1632 = vmatprep.subr.mxu0 0.0
        %1633 = vmatpush1.msra.mxu0 0.0
        %1634 = vmatprep.subr.mxu0 0.0
        %1635 = vmatpush1.msra.mxu0 0.0
        %1636 = vmatprep.subr.mxu0 0.0
        %1637 = vmatpush1.msra.mxu0 0.0
        %1638 = vmatprep.subr.mxu0 0.0
        %1639 = vmatpush1.msra.mxu0 0.0
        %1640 = vmatprep.subr.mxu0 0.0
        %1641 = vmatpush1.msra.mxu0 0.0
        %1642 = vmatprep.subr.mxu0 0.0
        %1643 = vmatpush1.msra.mxu0 0.0
        %1644 = vmatprep.subr.mxu0 0.0
        %1645 = vmatpush1.msra.mxu0 0.0
        %1646 = vmatprep.subr.mxu0 0.0
        %1647 = vmatpush1.msra.mxu0 0.0
        %1648 = vmatprep.subr.mxu0 0.0
        %1649 = vmatpush1.msra.mxu0 0.0
        %1650 = vmatprep.subr.mxu0 0.0
        %1651 = vmatpush1.msra.mxu0 0.0
        %1652 = vmatprep.subr.mxu0 0.0
        %1653 = vmatpush1.msra.mxu0 0.0
        %1654 = vmatprep.subr.mxu0 0.0
        %1655 = vmatpush1.msra.mxu0 0.0
        %1656 = vmatprep.subr.mxu0 0.0
        %1657 = vmatpush1.msra.mxu0 0.0
        %1658 = vmatprep.subr.mxu0 0.0
        %1659 = vmatpush1.msra.mxu0 0.0
        %1660 = vmatprep.subr.mxu0 0.0
        %1661 = vmatpush1.msra.mxu0 0.0
        %1662 = vmatprep.subr.mxu0 0.0
        %1663 = vmatpush1.msra.mxu0 0.0
        %1664 = vmatprep.subr.mxu0 0.0
        %1665 = vmatpush1.msra.mxu0 0.0
        %1666 = vmatprep.subr.mxu0 0.0
        %1667 = vmatpush1.msra.mxu0 0.0
        %1668 = vmatprep.mubr.f32.mxu0 0.0
        %1669 = vmatmul.mubr.f32.gmra.mrb[0].mxu0 %v1448
        %v1670 = vpop.f32.mrb[0].mxu0
        %v1671 = vadd.f32 %v635, %v1670
        %v1672 = vpop.f32.mrb[0].mxu0
        %1673 = vdwg.mxu0
        %v1674 = vmul.f32 %v1526, %v1671
        %v1675 = vadd.f32 %v1446, %v1674
        %v1676 = vtanh.pop %v1675
        %v1677 = vsub.f32 1.0, %v1603
        %v1678 = vmul.f32 %v1677, %v1676
        %v1679 = vmul.f32 %v1603, %v1438
        %v1680 = vadd.f32 %v1678, %v1679
        %s1681 = scalar_lea.vmem [#allocation2], 20
        %v1682 = vld [vmem:[%s1681] sm:$0xf]
        %s1683 = sadd.s32 20, 32
        %s1684 = scalar_lea.vmem [#allocation2], %s1683
        %v1685 = vld [vmem:[%s1684] sm:$0xf]
        %s1686 = sadd.s32 20, 64
        %s1687 = scalar_lea.vmem [#allocation2], %s1686
        %v1688 = vld [vmem:[%s1687] sm:$0xf]
        %v1690 = vsel %vm271, %v1680, 0
        %1692 = vmatprep.subr.mxu0 0.0
        %1693 = vmatpush1.msra.mxu0 %v461
        %1694 = vmatprep.subr.mxu0 0.0
        %1695 = vmatpush1.msra.mxu0 %v462
        %1696 = vmatprep.subr.mxu0 0.0
        %1697 = vmatpush1.msra.mxu0 0.0
        %1698 = vmatprep.subr.mxu0 0.0
        %1699 = vmatpush1.msra.mxu0 0.0
        %1700 = vmatprep.subr.mxu0 0.0
        %1701 = vmatpush1.msra.mxu0 0.0
        %1702 = vmatprep.subr.mxu0 0.0
        %1703 = vmatpush1.msra.mxu0 0.0
        %1704 = vmatprep.subr.mxu0 0.0
        %1705 = vmatpush1.msra.mxu0 0.0
        %1706 = vmatprep.subr.mxu0 0.0
        %1707 = vmatpush1.msra.mxu0 0.0
        %1708 = vmatprep.subr.mxu0 0.0
        %1709 = vmatpush1.msra.mxu0 0.0
        %1710 = vmatprep.subr.mxu0 0.0
        %1711 = vmatpush1.msra.mxu0 0.0
        %1712 = vmatprep.subr.mxu0 0.0
        %1713 = vmatpush1.msra.mxu0 0.0
        %1714 = vmatprep.subr.mxu0 0.0
        %1715 = vmatpush1.msra.mxu0 0.0
        %1716 = vmatprep.subr.mxu0 0.0
        %1717 = vmatpush1.msra.mxu0 0.0
        %1718 = vmatprep.subr.mxu0 0.0
        %1719 = vmatpush1.msra.mxu0 0.0
        %1720 = vmatprep.subr.mxu0 0.0
        %1721 = vmatpush1.msra.mxu0 0.0
        %1722 = vmatprep.subr.mxu0 0.0
        %1723 = vmatpush1.msra.mxu0 0.0
        %1724 = vmatprep.subr.mxu0 0.0
        %1725 = vmatpush1.msra.mxu0 0.0
        %1726 = vmatprep.subr.mxu0 0.0
        %1727 = vmatpush1.msra.mxu0 0.0
        %1728 = vmatprep.subr.mxu0 0.0
        %1729 = vmatpush1.msra.mxu0 0.0
        %1730 = vmatprep.subr.mxu0 0.0
        %1731 = vmatpush1.msra.mxu0 0.0
        %1732 = vmatprep.subr.mxu0 0.0
        %1733 = vmatpush1.msra.mxu0 0.0
        %1734 = vmatprep.subr.mxu0 0.0
        %1735 = vmatpush1.msra.mxu0 0.0
        %1736 = vmatprep.subr.mxu0 0.0
        %1737 = vmatpush1.msra.mxu0 0.0
        %1738 = vmatprep.subr.mxu0 0.0
        %1739 = vmatpush1.msra.mxu0 0.0
        %1740 = vmatprep.subr.mxu0 0.0
        %1741 = vmatpush1.msra.mxu0 0.0
        %1742 = vmatprep.subr.mxu0 0.0
        %1743 = vmatpush1.msra.mxu0 0.0
        %1744 = vmatprep.subr.mxu0 0.0
        %1745 = vmatpush1.msra.mxu0 0.0
        %1746 = vmatprep.subr.mxu0 0.0
        %1747 = vmatpush1.msra.mxu0 0.0
        %1748 = vmatprep.subr.mxu0 0.0
        %1749 = vmatpush1.msra.mxu0 0.0
        %1750 = vmatprep.subr.mxu0 0.0
        %1751 = vmatpush1.msra.mxu0 0.0
        %1752 = vmatprep.subr.mxu0 0.0
        %1753 = vmatpush1.msra.mxu0 0.0
        %1754 = vmatprep.subr.mxu0 0.0
        %1755 = vmatpush1.msra.mxu0 0.0
        %1756 = vmatprep.mubr.f32.mxu0 0.0
        %1757 = vmatmul.mubr.f32.gmra.mrb[0].mxu0 %v1690
        %v1758 = vpop.f32.mrb[0].mxu0
        %v1759 = vadd.f32 0.0, %v1758
        %v1760 = vpop.f32.mrb[0].mxu0
        %1761 = vdwg.mxu0
        %v1762 = vadd.f32 %v1682, %v1759
        %v1763 = vxor.u32 %v1762, 2147483648
        %v1764 = vmul.f32 %v1763, 1.442695
        %v1765 = vpow.pop %v1764
        %v1766 = vadd.f32 %v1765, 1.0
        %v1767 = vrcp.pop %v1766
        %v1768 = vmul.f32 1.0, %v1767
        %1769 = vmatprep.subr.mxu0 0.0
        %1770 = vmatpush1.msra.mxu0 %v463
        %1771 = vmatprep.subr.mxu0 0.0
        %1772 = vmatpush1.msra.mxu0 %v464
        %1773 = vmatprep.subr.mxu0 0.0
        %1774 = vmatpush1.msra.mxu0 0.0
        %1775 = vmatprep.subr.mxu0 0.0
        %1776 = vmatpush1.msra.mxu0 0.0
        %1777 = vmatprep.subr.mxu0 0.0
        %1778 = vmatpush1.msra.mxu0 0.0
        %1779 = vmatprep.subr.mxu0 0.0
        %1780 = vmatpush1.msra.mxu0 0.0
        %1781 = vmatprep.subr.mxu0 0.0
        %1782 = vmatpush1.msra.mxu0 0.0
        %1783 = vmatprep.subr.mxu0 0.0
        %1784 = vmatpush1.msra.mxu0 0.0
        %1785 = vmatprep.subr.mxu0 0.0
        %1786 = vmatpush1.msra.mxu0 0.0
        %1787 = vmatprep.subr.mxu0 0.0
        %1788 = vmatpush1.msra.mxu0 0.0
        %1789 = vmatprep.subr.mxu0 0.0
        %1790 = vmatpush1.msra.mxu0 0.0
        %1791 = vmatprep.subr.mxu0 0.0
        %1792 = vmatpush1.msra.mxu0 0.0
        %1793 = vmatprep.subr.mxu0 0.0
        %1794 = vmatpush1.msra.mxu0 0.0
        %1795 = vmatprep.subr.mxu0 0.0
        %1796 = vmatpush1.msra.mxu0 0.0
        %1797 = vmatprep.subr.mxu0 0.0
        %1798 = vmatpush1.msra.mxu0 0.0
        %1799 = vmatprep.subr.mxu0 0.0
        %1800 = vmatpush1.msra.mxu0 0.0
        %1801 = vmatprep.subr.mxu0 0.0
        %1802 = vmatpush1.msra.mxu0 0.0
        %1803 = vmatprep.subr.mxu0 0.0
        %1804 = vmatpush1.msra.mxu0 0.0
        %1805 = vmatprep.subr.mxu0 0.0
        %1806 = vmatpush1.msra.mxu0 0.0
        %1807 = vmatprep.subr.mxu0 0.0
        %1808 = vmatpush1.msra.mxu0 0.0
        %1809 = vmatprep.subr.mxu0 0.0
        %1810 = vmatpush1.msra.mxu0 0.0
        %1811 = vmatprep.subr.mxu0 0.0
        %1812 = vmatpush1.msra.mxu0 0.0
        %1813 = vmatprep.subr.mxu0 0.0
        %1814 = vmatpush1.msra.mxu0 0.0
        %1815 = vmatprep.subr.mxu0 0.0
        %1816 = vmatpush1.msra.mxu0 0.0
        %1817 = vmatprep.subr.mxu0 0.0
        %1818 = vmatpush1.msra.mxu0 0.0
        %1819 = vmatprep.subr.mxu0 0.0
        %1820 = vmatpush1.msra.mxu0 0.0
        %1821 = vmatprep.subr.mxu0 0.0
        %1822 = vmatpush1.msra.mxu0 0.0
        %1823 = vmatprep.subr.mxu0 0.0
        %1824 = vmatpush1.msra.mxu0 0.0
        %1825 = vmatprep.subr.mxu0 0.0
        %1826 = vmatpush1.msra.mxu0 0.0
        %1827 = vmatprep.subr.mxu0 0.0
        %1828 = vmatpush1.msra.mxu0 0.0
        %1829 = vmatprep.subr.mxu0 0.0
        %1830 = vmatpush1.msra.mxu0 0.0
        %1831 = vmatprep.subr.mxu0 0.0
        %1832 = vmatpush1.msra.mxu0 0.0
        %1833 = vmatprep.mubr.f32.mxu0 0.0
        %1834 = vmatmul.mubr.f32.gmra.mrb[0].mxu0 %v1690
        %v1835 = vpop.f32.mrb[0].mxu0
        %v1836 = vadd.f32 0.0, %v1835
        %v1837 = vpop.f32.mrb[0].mxu0
        %1838 = vdwg.mxu0
        %v1839 = vadd.f32 %v1685, %v1836
        %v1840 = vxor.u32 %v1839, 2147483648
        %v1841 = vmul.f32 %v1840, 1.442695
        %v1842 = vpow.pop %v1841
        %v1843 = vadd.f32 %v1842, 1.0
        %v1844 = vrcp.pop %v1843
        %v1845 = vmul.f32 1.0, %v1844
        %1846 = vmatprep.subr.mxu0 0.0
        %1847 = vmatpush1.msra.mxu0 %v465
        %1848 = vmatprep.subr.mxu0 0.0
        %1849 = vmatpush1.msra.mxu0 %v466
        %1850 = vmatprep.subr.mxu0 0.0
        %1851 = vmatpush1.msra.mxu0 0.0
        %1852 = vmatprep.subr.mxu0 0.0
        %1853 = vmatpush1.msra.mxu0 0.0
        %1854 = vmatprep.subr.mxu0 0.0
        %1855 = vmatpush1.msra.mxu0 0.0
        %1856 = vmatprep.subr.mxu0 0.0
        %1857 = vmatpush1.msra.mxu0 0.0
        %1858 = vmatprep.subr.mxu0 0.0
        %1859 = vmatpush1.msra.mxu0 0.0
        %1860 = vmatprep.subr.mxu0 0.0
        %1861 = vmatpush1.msra.mxu0 0.0
        %1862 = vmatprep.subr.mxu0 0.0
        %1863 = vmatpush1.msra.mxu0 0.0
        %1864 = vmatprep.subr.mxu0 0.0
        %1865 = vmatpush1.msra.mxu0 0.0
        %1866 = vmatprep.subr.mxu0 0.0
        %1867 = vmatpush1.msra.mxu0 0.0
        %1868 = vmatprep.subr.mxu0 0.0
        %1869 = vmatpush1.msra.mxu0 0.0
        %1870 = vmatprep.subr.mxu0 0.0
        %1871 = vmatpush1.msra.mxu0 0.0
        %1872 = vmatprep.subr.mxu0 0.0
        %1873 = vmatpush1.msra.mxu0 0.0
        %1874 = vmatprep.subr.mxu0 0.0
        %1875 = vmatpush1.msra.mxu0 0.0
        %1876 = vmatprep.subr.mxu0 0.0
        %1877 = vmatpush1.msra.mxu0 0.0
        %1878 = vmatprep.subr.mxu0 0.0
        %1879 = vmatpush1.msra.mxu0 0.0
        %1880 = vmatprep.subr.mxu0 0.0
        %1881 = vmatpush1.msra.mxu0 0.0
        %1882 = vmatprep.subr.mxu0 0.0
        %1883 = vmatpush1.msra.mxu0 0.0
        %1884 = vmatprep.subr.mxu0 0.0
        %1885 = vmatpush1.msra.mxu0 0.0
        %1886 = vmatprep.subr.mxu0 0.0
        %1887 = vmatpush1.msra.mxu0 0.0
        %1888 = vmatprep.subr.mxu0 0.0
        %1889 = vmatpush1.msra.mxu0 0.0
        %1890 = vmatprep.subr.mxu0 0.0
        %1891 = vmatpush1.msra.mxu0 0.0
        %1892 = vmatprep.subr.mxu0 0.0
        %1893 = vmatpush1.msra.mxu0 0.0
        %1894 = vmatprep.subr.mxu0 0.0
        %1895 = vmatpush1.msra.mxu0 0.0
        %1896 = vmatprep.subr.mxu0 0.0
        %1897 = vmatpush1.msra.mxu0 0.0
        %1898 = vmatprep.subr.mxu0 0.0
        %1899 = vmatpush1.msra.mxu0 0.0
        %1900 = vmatprep.subr.mxu0 0.0
        %1901 = vmatpush1.msra.mxu0 0.0
        %1902 = vmatprep.subr.mxu0 0.0
        %1903 = vmatpush1.msra.mxu0 0.0
        %1904 = vmatprep.subr.mxu0 0.0
        %1905 = vmatpush1.msra.mxu0 0.0
        %1906 = vmatprep.subr.mxu0 0.0
        %1907 = vmatpush1.msra.mxu0 0.0
        %1908 = vmatprep.subr.mxu0 0.0
        %1909 = vmatpush1.msra.mxu0 0.0
        %1910 = vmatprep.mubr.f32.mxu0 0.0
        %1911 = vmatmul.mubr.f32.gmra.mrb[0].mxu0 %v1690
        %v1912 = vpop.f32.mrb[0].mxu0
        %v1913 = vadd.f32 %v635, %v1912
        %v1914 = vpop.f32.mrb[0].mxu0
        %1915 = vdwg.mxu0
        %v1916 = vmul.f32 %v1768, %v1913
        %v1917 = vadd.f32 %v1688, %v1916
        %v1918 = vtanh.pop %v1917
        %v1919 = vsub.f32 1.0, %v1845
        %v1920 = vmul.f32 %v1919, %v1918
        %v1921 = vmul.f32 %v1845, %v1680
        %v1922 = vadd.f32 %v1920, %v1921
        %s1923 = scalar_lea.vmem [#allocation2], 24
        %v1924 = vld [vmem:[%s1923] sm:$0xf]
        %s1925 = sadd.s32 24, 32
        %s1926 = scalar_lea.vmem [#allocation2], %s1925
        %v1927 = vld [vmem:[%s1926] sm:$0xf]
        %s1928 = sadd.s32 24, 64
        %s1929 = scalar_lea.vmem [#allocation2], %s1928
        %v1930 = vld [vmem:[%s1929] sm:$0xf]
        %v1932 = vsel %vm271, %v1922, 0
        %1934 = vmatprep.subr.mxu0 0.0
        %1935 = vmatpush1.msra.mxu0 %v461
        %1936 = vmatprep.subr.mxu0 0.0
        %1937 = vmatpush1.msra.mxu0 %v462
        %1938 = vmatprep.subr.mxu0 0.0
        %1939 = vmatpush1.msra.mxu0 0.0
        %1940 = vmatprep.subr.mxu0 0.0
        %1941 = vmatpush1.msra.mxu0 0.0
        %1942 = vmatprep.subr.mxu0 0.0
        %1943 = vmatpush1.msra.mxu0 0.0
        %1944 = vmatprep.subr.mxu0 0.0
        %1945 = vmatpush1.msra.mxu0 0.0
        %1946 = vmatprep.subr.mxu0 0.0
        %1947 = vmatpush1.msra.mxu0 0.0
        %1948 = vmatprep.subr.mxu0 0.0
        %1949 = vmatpush1.msra.mxu0 0.0
        %1950 = vmatprep.subr.mxu0 0.0
        %1951 = vmatpush1.msra.mxu0 0.0
        %1952 = vmatprep.subr.mxu0 0.0
        %1953 = vmatpush1.msra.mxu0 0.0
        %1954 = vmatprep.subr.mxu0 0.0
        %1955 = vmatpush1.msra.mxu0 0.0
        %1956 = vmatprep.subr.mxu0 0.0
        %1957 = vmatpush1.msra.mxu0 0.0
        %1958 = vmatprep.subr.mxu0 0.0
        %1959 = vmatpush1.msra.mxu0 0.0
        %1960 = vmatprep.subr.mxu0 0.0
        %1961 = vmatpush1.msra.mxu0 0.0
        %1962 = vmatprep.subr.mxu0 0.0
        %1963 = vmatpush1.msra.mxu0 0.0
        %1964 = vmatprep.subr.mxu0 0.0
        %1965 = vmatpush1.msra.mxu0 0.0
        %1966 = vmatprep.subr.mxu0 0.0
        %1967 = vmatpush1.msra.mxu0 0.0
        %1968 = vmatprep.subr.mxu0 0.0
        %1969 = vmatpush1.msra.mxu0 0.0
        %1970 = vmatprep.subr.mxu0 0.0
        %1971 = vmatpush1.msra.mxu0 0.0
        %1972 = vmatprep.subr.mxu0 0.0
        %1973 = vmatpush1.msra.mxu0 0.0
        %1974 = vmatprep.subr.mxu0 0.0
        %1975 = vmatpush1.msra.mxu0 0.0
        %1976 = vmatprep.subr.mxu0 0.0
        %1977 = vmatpush1.msra.mxu0 0.0
        %1978 = vmatprep.subr.mxu0 0.0
        %1979 = vmatpush1.msra.mxu0 0.0
        %1980 = vmatprep.subr.mxu0 0.0
        %1981 = vmatpush1.msra.mxu0 0.0
        %1982 = vmatprep.subr.mxu0 0.0
        %1983 = vmatpush1.msra.mxu0 0.0
        %1984 = vmatprep.subr.mxu0 0.0
        %1985 = vmatpush1.msra.mxu0 0.0
        %1986 = vmatprep.subr.mxu0 0.0
        %1987 = vmatpush1.msra.mxu0 0.0
        %1988 = vmatprep.subr.mxu0 0.0
        %1989 = vmatpush1.msra.mxu0 0.0
        %1990 = vmatprep.subr.mxu0 0.0
        %1991 = vmatpush1.msra.mxu0 0.0
        %1992 = vmatprep.subr.mxu0 0.0
        %1993 = vmatpush1.msra.mxu0 0.0
        %1994 = vmatprep.subr.mxu0 0.0
        %1995 = vmatpush1.msra.mxu0 0.0
        %1996 = vmatprep.subr.mxu0 0.0
        %1997 = vmatpush1.msra.mxu0 0.0
        %1998 = vmatprep.mubr.f32.mxu0 0.0
        %1999 = vmatmul.mubr.f32.gmra.mrb[0].mxu0 %v1932
        %v2000 = vpop.f32.mrb[0].mxu0
        %v2001 = vadd.f32 0.0, %v2000
        %v2002 = vpop.f32.mrb[0].mxu0
        %2003 = vdwg.mxu0
        %v2004 = vadd.f32 %v1924, %v2001
        %v2005 = vxor.u32 %v2004, 2147483648
        %v2006 = vmul.f32 %v2005, 1.442695
        %v2007 = vpow.pop %v2006
        %v2008 = vadd.f32 %v2007, 1.0
        %v2009 = vrcp.pop %v2008
        %v2010 = vmul.f32 1.0, %v2009
        %2011 = vmatprep.subr.mxu0 0.0
        %2012 = vmatpush1.msra.mxu0 %v463
        %2013 = vmatprep.subr.mxu0 0.0
        %2014 = vmatpush1.msra.mxu0 %v464
        %2015 = vmatprep.subr.mxu0 0.0
        %2016 = vmatpush1.msra.mxu0 0.0
        %2017 = vmatprep.subr.mxu0 0.0
        %2018 = vmatpush1.msra.mxu0 0.0
        %2019 = vmatprep.subr.mxu0 0.0
        %2020 = vmatpush1.msra.mxu0 0.0
        %2021 = vmatprep.subr.mxu0 0.0
        %2022 = vmatpush1.msra.mxu0 0.0
        %2023 = vmatprep.subr.mxu0 0.0
        %2024 = vmatpush1.msra.mxu0 0.0
        %2025 = vmatprep.subr.mxu0 0.0
        %2026 = vmatpush1.msra.mxu0 0.0
        %2027 = vmatprep.subr.mxu0 0.0
        %2028 = vmatpush1.msra.mxu0 0.0
        %2029 = vmatprep.subr.mxu0 0.0
        %2030 = vmatpush1.msra.mxu0 0.0
        %2031 = vmatprep.subr.mxu0 0.0
        %2032 = vmatpush1.msra.mxu0 0.0
        %2033 = vmatprep.subr.mxu0 0.0
        %2034 = vmatpush1.msra.mxu0 0.0
        %2035 = vmatprep.subr.mxu0 0.0
        %2036 = vmatpush1.msra.mxu0 0.0
        %2037 = vmatprep.subr.mxu0 0.0
        %2038 = vmatpush1.msra.mxu0 0.0
        %2039 = vmatprep.subr.mxu0 0.0
        %2040 = vmatpush1.msra.mxu0 0.0
        %2041 = vmatprep.subr.mxu0 0.0
        %2042 = vmatpush1.msra.mxu0 0.0
        %2043 = vmatprep.subr.mxu0 0.0
        %2044 = vmatpush1.msra.mxu0 0.0
        %2045 = vmatprep.subr.mxu0 0.0
        %2046 = vmatpush1.msra.mxu0 0.0
        %2047 = vmatprep.subr.mxu0 0.0
        %2048 = vmatpush1.msra.mxu0 0.0
        %2049 = vmatprep.subr.mxu0 0.0
        %2050 = vmatpush1.msra.mxu0 0.0
        %2051 = vmatprep.subr.mxu0 0.0
        %2052 = vmatpush1.msra.mxu0 0.0
        %2053 = vmatprep.subr.mxu0 0.0
        %2054 = vmatpush1.msra.mxu0 0.0
        %2055 = vmatprep.subr.mxu0 0.0
        %2056 = vmatpush1.msra.mxu0 0.0
        %2057 = vmatprep.subr.mxu0 0.0
        %2058 = vmatpush1.msra.mxu0 0.0
        %2059 = vmatprep.subr.mxu0 0.0
        %2060 = vmatpush1.msra.mxu0 0.0
        %2061 = vmatprep.subr.mxu0 0.0
        %2062 = vmatpush1.msra.mxu0 0.0
        %2063 = vmatprep.subr.mxu0 0.0
        %2064 = vmatpush1.msra.mxu0 0.0
        %2065 = vmatprep.subr.mxu0 0.0
        %2066 = vmatpush1.msra.mxu0 0.0
        %2067 = vmatprep.subr.mxu0 0.0
        %2068 = vmatpush1.msra.mxu0 0.0
        %2069 = vmatprep.subr.mxu0 0.0
        %2070 = vmatpush1.msra.mxu0 0.0
        %2071 = vmatprep.subr.mxu0 0.0
        %2072 = vmatpush1.msra.mxu0 0.0
        %2073 = vmatprep.subr.mxu0 0.0
        %2074 = vmatpush1.msra.mxu0 0.0
        %2075 = vmatprep.mubr.f32.mxu0 0.0
        %2076 = vmatmul.mubr.f32.gmra.mrb[0].mxu0 %v1932
        %v2077 = vpop.f32.mrb[0].mxu0
        %v2078 = vadd.f32 0.0, %v2077
        %v2079 = vpop.f32.mrb[0].mxu0
        %2080 = vdwg.mxu0
        %v2081 = vadd.f32 %v1927, %v2078
        %v2082 = vxor.u32 %v2081, 2147483648
        %v2083 = vmul.f32 %v2082, 1.442695
        %v2084 = vpow.pop %v2083
        %v2085 = vadd.f32 %v2084, 1.0
        %v2086 = vrcp.pop %v2085
        %v2087 = vmul.f32 1.0, %v2086
        %2088 = vmatprep.subr.mxu0 0.0
        %2089 = vmatpush1.msra.mxu0 %v465
        %2090 = vmatprep.subr.mxu0 0.0
        %2091 = vmatpush1.msra.mxu0 %v466
        %2092 = vmatprep.subr.mxu0 0.0
        %2093 = vmatpush1.msra.mxu0 0.0
        %2094 = vmatprep.subr.mxu0 0.0
        %2095 = vmatpush1.msra.mxu0 0.0
        %2096 = vmatprep.subr.mxu0 0.0
        %2097 = vmatpush1.msra.mxu0 0.0
        %2098 = vmatprep.subr.mxu0 0.0
        %2099 = vmatpush1.msra.mxu0 0.0
        %2100 = vmatprep.subr.mxu0 0.0
        %2101 = vmatpush1.msra.mxu0 0.0
        %2102 = vmatprep.subr.mxu0 0.0
        %2103 = vmatpush1.msra.mxu0 0.0
        %2104 = vmatprep.subr.mxu0 0.0
        %2105 = vmatpush1.msra.mxu0 0.0
        %2106 = vmatprep.subr.mxu0 0.0
        %2107 = vmatpush1.msra.mxu0 0.0
        %2108 = vmatprep.subr.mxu0 0.0
        %2109 = vmatpush1.msra.mxu0 0.0
        %2110 = vmatprep.subr.mxu0 0.0
        %2111 = vmatpush1.msra.mxu0 0.0
        %2112 = vmatprep.subr.mxu0 0.0
        %2113 = vmatpush1.msra.mxu0 0.0
        %2114 = vmatprep.subr.mxu0 0.0
        %2115 = vmatpush1.msra.mxu0 0.0
        %2116 = vmatprep.subr.mxu0 0.0
        %2117 = vmatpush1.msra.mxu0 0.0
        %2118 = vmatprep.subr.mxu0 0.0
        %2119 = vmatpush1.msra.mxu0 0.0
        %2120 = vmatprep.subr.mxu0 0.0
        %2121 = vmatpush1.msra.mxu0 0.0
        %2122 = vmatprep.subr.mxu0 0.0
        %2123 = vmatpush1.msra.mxu0 0.0
        %2124 = vmatprep.subr.mxu0 0.0
        %2125 = vmatpush1.msra.mxu0 0.0
        %2126 = vmatprep.subr.mxu0 0.0
        %2127 = vmatpush1.msra.mxu0 0.0
        %2128 = vmatprep.subr.mxu0 0.0
        %2129 = vmatpush1.msra.mxu0 0.0
        %2130 = vmatprep.subr.mxu0 0.0
        %2131 = vmatpush1.msra.mxu0 0.0
        %2132 = vmatprep.subr.mxu0 0.0
        %2133 = vmatpush1.msra.mxu0 0.0
        %2134 = vmatprep.subr.mxu0 0.0
        %2135 = vmatpush1.msra.mxu0 0.0
        %2136 = vmatprep.subr.mxu0 0.0
        %2137 = vmatpush1.msra.mxu0 0.0
        %2138 = vmatprep.subr.mxu0 0.0
        %2139 = vmatpush1.msra.mxu0 0.0
        %2140 = vmatprep.subr.mxu0 0.0
        %2141 = vmatpush1.msra.mxu0 0.0
        %2142 = vmatprep.subr.mxu0 0.0
        %2143 = vmatpush1.msra.mxu0 0.0
        %2144 = vmatprep.subr.mxu0 0.0
        %2145 = vmatpush1.msra.mxu0 0.0
        %2146 = vmatprep.subr.mxu0 0.0
        %2147 = vmatpush1.msra.mxu0 0.0
        %2148 = vmatprep.subr.mxu0 0.0
        %2149 = vmatpush1.msra.mxu0 0.0
        %2150 = vmatprep.subr.mxu0 0.0
        %2151 = vmatpush1.msra.mxu0 0.0
        %2152 = vmatprep.mubr.f32.mxu0 0.0
        %2153 = vmatmul.mubr.f32.gmra.mrb[0].mxu0 %v1932
        %v2154 = vpop.f32.mrb[0].mxu0
        %v2155 = vadd.f32 %v635, %v2154
        %v2156 = vpop.f32.mrb[0].mxu0
        %2157 = vdwg.mxu0
        %v2158 = vmul.f32 %v2010, %v2155
        %v2159 = vadd.f32 %v1930, %v2158
        %v2160 = vtanh.pop %v2159
        %v2161 = vsub.f32 1.0, %v2087
        %v2162 = vmul.f32 %v2161, %v2160
        %v2163 = vmul.f32 %v2087, %v1922
        %v2164 = vadd.f32 %v2162, %v2163
        %v2165 = vld [vmem:[%s2 + $0x10] sm:$0xff]
        %v2166 = vld [vmem:[%s2 + $0x18] sm:$0xff]
        %v2168 = vsel %vm271, %v2164, 0
        %2170 = vmatprep.subr.mxu0 0.0
        %2171 = vmatpush1.msra.mxu0 %v2165
        %2172 = vmatprep.subr.mxu0 0.0
        %2173 = vmatpush1.msra.mxu0 %v2166
        %2174 = vmatprep.subr.mxu0 0.0
        %2175 = vmatpush1.msra.mxu0 0.0
        %2176 = vmatprep.subr.mxu0 0.0
        %2177 = vmatpush1.msra.mxu0 0.0
        %2178 = vmatprep.subr.mxu0 0.0
        %2179 = vmatpush1.msra.mxu0 0.0
        %2180 = vmatprep.subr.mxu0 0.0
        %2181 = vmatpush1.msra.mxu0 0.0
        %2182 = vmatprep.subr.mxu0 0.0
        %2183 = vmatpush1.msra.mxu0 0.0
        %2184 = vmatprep.subr.mxu0 0.0
        %2185 = vmatpush1.msra.mxu0 0.0
        %2186 = vmatprep.subr.mxu0 0.0
        %2187 = vmatpush1.msra.mxu0 0.0
        %2188 = vmatprep.subr.mxu0 0.0
        %2189 = vmatpush1.msra.mxu0 0.0
        %2190 = vmatprep.subr.mxu0 0.0
        %2191 = vmatpush1.msra.mxu0 0.0
        %2192 = vmatprep.subr.mxu0 0.0
        %2193 = vmatpush1.msra.mxu0 0.0
        %2194 = vmatprep.subr.mxu0 0.0
        %2195 = vmatpush1.msra.mxu0 0.0
        %2196 = vmatprep.subr.mxu0 0.0
        %2197 = vmatpush1.msra.mxu0 0.0
        %2198 = vmatprep.subr.mxu0 0.0
        %2199 = vmatpush1.msra.mxu0 0.0
        %2200 = vmatprep.subr.mxu0 0.0
        %2201 = vmatpush1.msra.mxu0 0.0
        %2202 = vmatprep.subr.mxu0 0.0
        %2203 = vmatpush1.msra.mxu0 0.0
        %2204 = vmatprep.subr.mxu0 0.0
        %2205 = vmatpush1.msra.mxu0 0.0
        %2206 = vmatprep.subr.mxu0 0.0
        %2207 = vmatpush1.msra.mxu0 0.0
        %2208 = vmatprep.subr.mxu0 0.0
        %2209 = vmatpush1.msra.mxu0 0.0
        %2210 = vmatprep.subr.mxu0 0.0
        %2211 = vmatpush1.msra.mxu0 0.0
        %2212 = vmatprep.subr.mxu0 0.0
        %2213 = vmatpush1.msra.mxu0 0.0
        %2214 = vmatprep.subr.mxu0 0.0
        %2215 = vmatpush1.msra.mxu0 0.0
        %2216 = vmatprep.subr.mxu0 0.0
        %2217 = vmatpush1.msra.mxu0 0.0
        %2218 = vmatprep.subr.mxu0 0.0
        %2219 = vmatpush1.msra.mxu0 0.0
        %2220 = vmatprep.subr.mxu0 0.0
        %2221 = vmatpush1.msra.mxu0 0.0
        %2222 = vmatprep.subr.mxu0 0.0
        %2223 = vmatpush1.msra.mxu0 0.0
        %2224 = vmatprep.subr.mxu0 0.0
        %2225 = vmatpush1.msra.mxu0 0.0
        %2226 = vmatprep.subr.mxu0 0.0
        %2227 = vmatpush1.msra.mxu0 0.0
        %2228 = vmatprep.subr.mxu0 0.0
        %2229 = vmatpush1.msra.mxu0 0.0
        %2230 = vmatprep.subr.mxu0 0.0
        %2231 = vmatpush1.msra.mxu0 0.0
        %2232 = vmatprep.subr.mxu0 0.0
        %2233 = vmatpush1.msra.mxu0 0.0
        %2234 = vmatprep.mubr.f32.mxu0 0.0
        %2235 = vmatmul.mubr.f32.gmra.mrb[0].mxu0 %v2168
        %v2236 = vpop.f32.mrb[0].mxu0
        %v2237 = vadd.f32 0.0, %v2236
        %v2238 = vpop.f32.mrb[0].mxu0
        %2239 = vdwg.mxu0
        %v2240 = vld [vmem:[%s2 + $0x20] sm:$0xff]
        %v2241 = vld [vmem:[%s2 + $0x28] sm:$0xff]
        %v2242 = vld [vmem:[%s2 + $0x30] sm:$0xff]
        %v2243 = vld [vmem:[%s2 + $0x38] sm:$0xff]
        %v2244 = vld [vmem:[%s2 + $0x40] sm:$0xff]
        %v2245 = vld [vmem:[%s2 + $0x48] sm:$0xff]
        %v2246 = vld [vmem:[%s2 + $0x50] sm:$0xff]
        %v2247 = vld [vmem:[%s2 + $0x58] sm:$0xff]
        %vm2248 = vcmask 523264
        %v2250 = vsel %vm2248, %v2237, 0
        %2252 = vmatprep.subr.mxu0 0.0
        %2253 = vmatpush1.msra.mxu0 %v2240
        %2254 = vmatprep.subr.mxu0 0.0
        %2255 = vmatpush1.msra.mxu0 %v2241
        %2256 = vmatprep.subr.mxu0 0.0
        %2257 = vmatpush1.msra.mxu0 %v2242
        %2258 = vmatprep.subr.mxu0 0.0
        %2259 = vmatpush1.msra.mxu0 %v2243
        %2260 = vmatprep.subr.mxu0 0.0
        %2261 = vmatpush1.msra.mxu0 %v2244
        %2262 = vmatprep.subr.mxu0 0.0
        %2263 = vmatpush1.msra.mxu0 %v2245
        %2264 = vmatprep.subr.mxu0 0.0
        %2265 = vmatpush1.msra.mxu0 %v2246
        %2266 = vmatprep.subr.mxu0 0.0
        %2267 = vmatpush1.msra.mxu0 %v2247
        %2268 = vmatprep.subr.mxu0 0.0
        %2269 = vmatpush1.msra.mxu0 0.0
        %2270 = vmatprep.subr.mxu0 0.0
        %2271 = vmatpush1.msra.mxu0 0.0
        %2272 = vmatprep.subr.mxu0 0.0
        %2273 = vmatpush1.msra.mxu0 0.0
        %2274 = vmatprep.subr.mxu0 0.0
        %2275 = vmatpush1.msra.mxu0 0.0
        %2276 = vmatprep.subr.mxu0 0.0
        %2277 = vmatpush1.msra.mxu0 0.0
        %2278 = vmatprep.subr.mxu0 0.0
        %2279 = vmatpush1.msra.mxu0 0.0
        %2280 = vmatprep.subr.mxu0 0.0
        %2281 = vmatpush1.msra.mxu0 0.0
        %2282 = vmatprep.subr.mxu0 0.0
        %2283 = vmatpush1.msra.mxu0 0.0
        %2284 = vmatprep.subr.mxu0 0.0
        %2285 = vmatpush1.msra.mxu0 0.0
        %2286 = vmatprep.subr.mxu0 0.0
        %2287 = vmatpush1.msra.mxu0 0.0
        %2288 = vmatprep.subr.mxu0 0.0
        %2289 = vmatpush1.msra.mxu0 0.0
        %2290 = vmatprep.subr.mxu0 0.0
        %2291 = vmatpush1.msra.mxu0 0.0
        %2292 = vmatprep.subr.mxu0 0.0
        %2293 = vmatpush1.msra.mxu0 0.0
        %2294 = vmatprep.subr.mxu0 0.0
        %2295 = vmatpush1.msra.mxu0 0.0
        %2296 = vmatprep.subr.mxu0 0.0
        %2297 = vmatpush1.msra.mxu0 0.0
        %2298 = vmatprep.subr.mxu0 0.0
        %2299 = vmatpush1.msra.mxu0 0.0
        %2300 = vmatprep.subr.mxu0 0.0
        %2301 = vmatpush1.msra.mxu0 0.0
        %2302 = vmatprep.subr.mxu0 0.0
        %2303 = vmatpush1.msra.mxu0 0.0
        %2304 = vmatprep.subr.mxu0 0.0
        %2305 = vmatpush1.msra.mxu0 0.0
        %2306 = vmatprep.subr.mxu0 0.0
        %2307 = vmatpush1.msra.mxu0 0.0
        %2308 = vmatprep.subr.mxu0 0.0
        %2309 = vmatpush1.msra.mxu0 0.0
        %2310 = vmatprep.subr.mxu0 0.0
        %2311 = vmatpush1.msra.mxu0 0.0
        %2312 = vmatprep.subr.mxu0 0.0
        %2313 = vmatpush1.msra.mxu0 0.0
        %2314 = vmatprep.subr.mxu0 0.0
        %2315 = vmatpush1.msra.mxu0 0.0
        %2316 = vmatprep.mubr.f32.mxu0 0.0
        %2317 = vmatmul.mubr.f32.gmra.mrb[0].mxu0 %v2250
        %v2318 = vpop.f32.mrb[0].mxu0
        %v2319 = vadd.f32 0.0, %v2318
        %v2320 = vpop.f32.mrb[0].mxu0
        %2321 = vdwg.mxu0
        %v2322 = vlaneseq
        %v2323 = vshrl.u32 %v2322, 7
        %v2324 = vsub.s32 0, %v2323
        %v2325 = vrot.slane %v2319, %v2324
        %2327 = vrot.lane.b32.xlu0 %v2325, 124
        %v2328 = vpop.permute.xlu0 %2327
        %v2330 = vadd.f32 %v2319, %v2328
        %vm2331 = vcmp.ge.f32.partialorder %v2330, 0.0
        %v2332 = vmul.f32 %v2330, 0.2
        %v2333 = vsel %vm2331, %v2330, %v2332
        %vm2334 = vcmask 27648
        %v2335 = vsel %vm2334, %v2333, -inf
        %v2336 = vrot.slane %v2335, 4
        %v2337 = vmax.f32 %v2335, %v2336
        %v2338 = vrot.slane %v2337, 2
        %v2339 = vmax.f32 %v2337, %v2338
        %v2340 = vrot.slane %v2339, 1
        %v2341 = vmax.f32 %v2339, %v2340
        %v2342 = vsub.f32 %v2333, %v2341
        %v2343 = vmul.f32 %v2342, 1.442695
        %v2344 = vpow.pop %v2343
        %v2345 = vsel %vm2334, %v2344, 0.0
        %v2346 = vrot.slane %v2345, 4
        %v2347 = vadd.f32 %v2345, %v2346
        %v2348 = vrot.slane %v2347, 2
        %v2349 = vadd.f32 %v2347, %v2348
        %v2350 = vrot.slane %v2349, 1
        %v2351 = vadd.f32 %v2349, %v2350
        %v2352 = vrcp.pop %v2351
        %v2353 = vmul.f32 %v2344, %v2352
        %v2354 = vld [vmem:[%s2 + $0x8] sm:$0xf]
        %vm2355 = vcmask 31744
        %v2357 = vsel %vm2355, %v2353, 0
        %vm2359 = vcmask 1043456
        %v2361 = vsel %vm2359, %v2354, 0
        %2363 = vmatprep.subr.mxu0 0.0
        %2364 = vmatpush1.msra.mxu0 %v2361
        %2365 = vmatprep.subr.mxu0 0.0
        %2366 = vmatpush1.msra.mxu0 0.0
        %2367 = vmatprep.subr.mxu0 0.0
        %2368 = vmatpush1.msra.mxu0 0.0
        %2369 = vmatprep.subr.mxu0 0.0
        %2370 = vmatpush1.msra.mxu0 0.0
        %2371 = vmatprep.subr.mxu0 0.0
        %2372 = vmatpush1.msra.mxu0 0.0
        %2373 = vmatprep.subr.mxu0 0.0
        %2374 = vmatpush1.msra.mxu0 0.0
        %2375 = vmatprep.subr.mxu0 0.0
        %2376 = vmatpush1.msra.mxu0 0.0
        %2377 = vmatprep.subr.mxu0 0.0
        %2378 = vmatpush1.msra.mxu0 0.0
        %2379 = vmatprep.subr.mxu0 0.0
        %2380 = vmatpush1.msra.mxu0 0.0
        %2381 = vmatprep.subr.mxu0 0.0
        %2382 = vmatpush1.msra.mxu0 0.0
        %2383 = vmatprep.subr.mxu0 0.0
        %2384 = vmatpush1.msra.mxu0 0.0
        %2385 = vmatprep.subr.mxu0 0.0
        %2386 = vmatpush1.msra.mxu0 0.0
        %2387 = vmatprep.subr.mxu0 0.0
        %2388 = vmatpush1.msra.mxu0 0.0
        %2389 = vmatprep.subr.mxu0 0.0
        %2390 = vmatpush1.msra.mxu0 0.0
        %2391 = vmatprep.subr.mxu0 0.0
        %2392 = vmatpush1.msra.mxu0 0.0
        %2393 = vmatprep.subr.mxu0 0.0
        %2394 = vmatpush1.msra.mxu0 0.0
        %2395 = vmatprep.subr.mxu0 0.0
        %2396 = vmatpush1.msra.mxu0 0.0
        %2397 = vmatprep.subr.mxu0 0.0
        %2398 = vmatpush1.msra.mxu0 0.0
        %2399 = vmatprep.subr.mxu0 0.0
        %2400 = vmatpush1.msra.mxu0 0.0
        %2401 = vmatprep.subr.mxu0 0.0
        %2402 = vmatpush1.msra.mxu0 0.0
        %2403 = vmatprep.subr.mxu0 0.0
        %2404 = vmatpush1.msra.mxu0 0.0
        %2405 = vmatprep.subr.mxu0 0.0
        %2406 = vmatpush1.msra.mxu0 0.0
        %2407 = vmatprep.subr.mxu0 0.0
        %2408 = vmatpush1.msra.mxu0 0.0
        %2409 = vmatprep.subr.mxu0 0.0
        %2410 = vmatpush1.msra.mxu0 0.0
        %2411 = vmatprep.subr.mxu0 0.0
        %2412 = vmatpush1.msra.mxu0 0.0
        %2413 = vmatprep.subr.mxu0 0.0
        %2414 = vmatpush1.msra.mxu0 0.0
        %2415 = vmatprep.subr.mxu0 0.0
        %2416 = vmatpush1.msra.mxu0 0.0
        %2417 = vmatprep.subr.mxu0 0.0
        %2418 = vmatpush1.msra.mxu0 0.0
        %2419 = vmatprep.subr.mxu0 0.0
        %2420 = vmatpush1.msra.mxu0 0.0
        %2421 = vmatprep.subr.mxu0 0.0
        %2422 = vmatpush1.msra.mxu0 0.0
        %2423 = vmatprep.subr.mxu0 0.0
        %2424 = vmatpush1.msra.mxu0 0.0
        %2425 = vmatprep.subr.mxu0 0.0
        %2426 = vmatpush1.msra.mxu0 0.0
        %2427 = vmatprep.mubr.f32.mxu0 0.0
        %2428 = vmatmul.mubr.f32.gmra.mrb[0].mxu0 %v2357
        %v2429 = vpop.f32.mrb[0].mxu0
        %v2430 = vadd.f32 0.0, %v2429
        %v2431 = vpop.f32.mrb[0].mxu0
        %2432 = vdwg.mxu0
        %v2433 = vmul.f32 %v2430, %v2237
        %vm2434 = vcmask 519168
        %v2435 = vsel %vm2434, %v2433, 0.0
        %v2436 = vrot.slane %v2435, 4
        %v2437 = vadd.f32 %v2435, %v2436
        %v2438 = vrot.slane %v2437, 2
        %v2439 = vadd.f32 %v2437, %v2438
        %v2440 = vrot.slane %v2439, 1
        %v2441 = vadd.f32 %v2439, %v2440
        %v2442 = vld [vmem:[%s2 + $0x60] sm:$0xff]
        %v2443 = vld [vmem:[%s2 + $0x68] sm:$0xff]
        %v2444 = vld [vmem:[%s2 + $0x70] sm:$0xff]
        %v2445 = vld [vmem:[%s2 + $0x78] sm:$0xff]
        %v2446 = vld [vmem:[%s2 + $0x80] sm:$0xff]
        %v2447 = vld [vmem:[%s2 + $0x88] sm:$0xff]
        %v2448 = vld [vmem:[%s2 + $0x90] sm:$0xff]
        %v2449 = vld [vmem:[%s2 + $0x98] sm:$0xff]
        %v2450 = vld [vmem:[%s2] sm:$0x1]
        %v2452 = vsel %vm2248, %v2441, 0
        %2454 = vmatprep.subr.mxu0 0.0
        %2455 = vmatpush1.msra.mxu0 %v2442
        %2456 = vmatprep.subr.mxu0 0.0
        %2457 = vmatpush1.msra.mxu0 %v2443
        %2458 = vmatprep.subr.mxu0 0.0
        %2459 = vmatpush1.msra.mxu0 %v2444
        %2460 = vmatprep.subr.mxu0 0.0
        %2461 = vmatpush1.msra.mxu0 %v2445
        %2462 = vmatprep.subr.mxu0 0.0
        %2463 = vmatpush1.msra.mxu0 %v2446
        %2464 = vmatprep.subr.mxu0 0.0
        %2465 = vmatpush1.msra.mxu0 %v2447
        %2466 = vmatprep.subr.mxu0 0.0
        %2467 = vmatpush1.msra.mxu0 %v2448
        %2468 = vmatprep.subr.mxu0 0.0
        %2469 = vmatpush1.msra.mxu0 %v2449
        %2470 = vmatprep.subr.mxu0 0.0
        %2471 = vmatpush1.msra.mxu0 0.0
        %2472 = vmatprep.subr.mxu0 0.0
        %2473 = vmatpush1.msra.mxu0 0.0
        %2474 = vmatprep.subr.mxu0 0.0
        %2475 = vmatpush1.msra.mxu0 0.0
        %2476 = vmatprep.subr.mxu0 0.0
        %2477 = vmatpush1.msra.mxu0 0.0
        %2478 = vmatprep.subr.mxu0 0.0
        %2479 = vmatpush1.msra.mxu0 0.0
        %2480 = vmatprep.subr.mxu0 0.0
        %2481 = vmatpush1.msra.mxu0 0.0
        %2482 = vmatprep.subr.mxu0 0.0
        %2483 = vmatpush1.msra.mxu0 0.0
        %2484 = vmatprep.subr.mxu0 0.0
        %2485 = vmatpush1.msra.mxu0 0.0
        %2486 = vmatprep.subr.mxu0 0.0
        %2487 = vmatpush1.msra.mxu0 0.0
        %2488 = vmatprep.subr.mxu0 0.0
        %2489 = vmatpush1.msra.mxu0 0.0
        %2490 = vmatprep.subr.mxu0 0.0
        %2491 = vmatpush1.msra.mxu0 0.0
        %2492 = vmatprep.subr.mxu0 0.0
        %2493 = vmatpush1.msra.mxu0 0.0
        %2494 = vmatprep.subr.mxu0 0.0
        %2495 = vmatpush1.msra.mxu0 0.0
        %2496 = vmatprep.subr.mxu0 0.0
        %2497 = vmatpush1.msra.mxu0 0.0
        %2498 = vmatprep.subr.mxu0 0.0
        %2499 = vmatpush1.msra.mxu0 0.0
        %2500 = vmatprep.subr.mxu0 0.0
        %2501 = vmatpush1.msra.mxu0 0.0
        %2502 = vmatprep.subr.mxu0 0.0
        %2503 = vmatpush1.msra.mxu0 0.0
        %2504 = vmatprep.subr.mxu0 0.0
        %2505 = vmatpush1.msra.mxu0 0.0
        %2506 = vmatprep.subr.mxu0 0.0
        %2507 = vmatpush1.msra.mxu0 0.0
        %2508 = vmatprep.subr.mxu0 0.0
        %2509 = vmatpush1.msra.mxu0 0.0
        %2510 = vmatprep.subr.mxu0 0.0
        %2511 = vmatpush1.msra.mxu0 0.0
        %2512 = vmatprep.subr.mxu0 0.0
        %2513 = vmatpush1.msra.mxu0 0.0
        %2514 = vmatprep.subr.mxu0 0.0
        %2515 = vmatpush1.msra.mxu0 0.0
        %2516 = vmatprep.subr.mxu0 0.0
        %2517 = vmatpush1.msra.mxu0 0.0
        %2518 = vmatprep.mubr.f32.mxu0 0.0
        %2519 = vmatmul.mubr.f32.gmra.mrb[0].mxu0 %v2452
        %v2520 = vpop.f32.mrb[0].mxu0
        %v2521 = vadd.f32 %v2450, %v2520
        %v2522 = vpop.f32.mrb[0].mxu0
        %2523 = vdwg.mxu0
        %vm2524 = vcmask 122880
        %2525 = vst.msk [vmem:[%s162] sm:$0x1] %vm2524, %v2521
        %s2526 = sand.u32 %s93, 1
        %s2527 = scalar_lea.sflag [#allocation4], %s2526
        %s2528 = sand.u32 %s93, 1
        %s2529 = scalar_lea.vmem [#allocation3], %s2528
        // Predicated region
        $region33: #{context_encoder_forward.1} parent=31 // pred_check
          %p2530 = pneg %p103
        $region34: #{context_encoder_forward.1} parent=31 // pred_check_branch
          %2532 = sbr.rel (%p2530) target = $region36
        $region35: #{context_encoder_forward.1} parent=31 // pred_region
          %s2534 = ssub.s32 16, 16
          %2535 = vsyncadd %s2527, %s2534
          %s2536 = smul.addr %s17, 16
          %s2537 = scalar_lea.hbm %s3, %s2536
          %s2539 = sshll.u32 %s2529, 4
          %s2540 = int_to_ptr.vmem [resolvable:$true] %s2539
          %2542 = dma.vmem_to_hbm [thread:$0]  %s2540, 16, %s2537, %s2527
        $region36: #{context_encoder_forward.1} parent=31 // pred_fallthru
          _
      $region32: #{context_encoder_forward.1} parent=5 // pred_fallthru
        _
      %p2543 = scmp.le.s32.totalorder 2, %s12
      // Predicated region
      $region37: #{context_encoder_forward.1} parent=5 // pred_check
        %p2544 = pneg %p2543
      $region38: #{context_encoder_forward.1} parent=5 // pred_check_branch
        %2546 = sbr.rel (%p2544) target = $region40
      $region39: #{context_encoder_forward.1} parent=5 // pred_region
        %s2547 = ssub.s32 %s12, 2
        // Predicated region
        $region41: #{context_encoder_forward.1} parent=39 // pred_check
          %p2548 = pneg %p109
        $region42: #{context_encoder_forward.1} parent=39 // pred_check_branch
          %2550 = sbr.rel (%p2548) target = $region44
        $region43: #{context_encoder_forward.1} parent=39 // pred_region
          %s2551 = sand.u32 %s94, 1
          %s2552 = scalar_lea.sflag [#allocation4], %s2551
          %s2553 = sand.u32 %s94, 1
          %s2554 = scalar_lea.vmem [#allocation3], %s2553
          %2555 = dma.done %s2552, 16
        $region44: #{context_encoder_forward.1} parent=39 // pred_fallthru
          _
      $region40: #{context_encoder_forward.1} parent=5 // pred_fallthru
        _
    $region6: #{context_encoder_forward.1} parent=1 // loop_footer
      %s16 = sadd.s32 1, %s12
    $region7: #{context_encoder_forward.1} parent=1 // loop_footer_branch
      %11 = sbr.rel target = $region3
    $region8: #{context_encoder_forward.1} parent=1 // loop_exit
      _
    %2556 = vsyncpa [#allocation4], 1
    %s2557 = scalar_lea.sflag [#allocation4], 1
    %2558 = vsyncpa %s2557, 1

</llo_original>
